<compile_context>
chip_gen: v6e
topology: v6e:2x2x1
jax: 0.10.0
libtpu: 0.0.40
codegen_flags: <defaults>
</compile_context>

<pallas_src>
import functools

import jax
import jax.numpy as jnp
from jax.experimental import pallas as pl
from jax.experimental.pallas import tpu as pltpu


# ----------------------------------------------------------------------------
# Block-size helpers
# ----------------------------------------------------------------------------
def _pick_seq_block(b, cap=16):
    """Largest divisor of b that is <= cap (sequences per attention program)."""
    blk = min(b, cap)
    while b % blk:
        blk -= 1
    return blk


def _pick_bm(m, cap=2048):
    """Largest multiple-of-8 divisor of m <= cap; prefer >=2 grid steps (v7x)."""
    cand = (min(m, cap) // 8) * 8
    bm = m
    while cand >= 8:
        if m % cand == 0:
            bm = cand
            break
        cand -= 8
    if bm == m and m >= 256 and (m // 2) % 8 == 0:
        bm = m // 2
    return bm


# ----------------------------------------------------------------------------
# Pallas kernels
# ----------------------------------------------------------------------------
def _axial_self_attn_kernel(x_ref, wqkv_ref, wo_ref, bo_ref, o_ref, *, heads, dim_heads):
    """Multi-head self-attention for a block of sequences.

    x_ref : (Bblk, L, C) f32     wqkv_ref : (C, 3*hid) bf16 (wq pre-scaled)
    wo_ref: (hid, C)  bf16       bo_ref   : (1, C) f32
    """
    bblk, l, c = x_ref.shape
    hid = heads * dim_heads

    # Fused QKV projection as one big MXU matmul: (Bblk*L, C) @ (C, 3*hid).
    x2 = x_ref[...].reshape(bblk * l, c).astype(jnp.bfloat16)
    qkv = jnp.dot(x2, wqkv_ref[...], preferred_element_type=jnp.float32)
    qkv = qkv.reshape(bblk, l, 3 * hid)

    head_outs = []
    for h in range(heads):                                  # static unroll (heads=2)
        off = h * dim_heads
        qh = qkv[:, :, off:off + dim_heads].astype(jnp.bfloat16)
        kh = qkv[:, :, hid + off:hid + off + dim_heads].astype(jnp.bfloat16)
        vh = qkv[:, :, 2 * hid + off:2 * hid + off + dim_heads].astype(jnp.bfloat16)

        # scale already folded into wq at param-prep time
        dots = jnp.einsum('bqd,bkd->bqk', qh, kh, preferred_element_type=jnp.float32)
        dots = dots - jnp.max(dots, axis=-1, keepdims=True)
        p = jnp.exp(dots)
        p = p * pl.reciprocal(jnp.sum(p, axis=-1, keepdims=True), approx=True)
        head_outs.append(
            jnp.einsum('bqk,bkd->bqd', p.astype(jnp.bfloat16), vh,
                       preferred_element_type=jnp.float32))

    merged = jnp.concatenate(head_outs, axis=-1)            # (Bblk, L, hid) f32
    out = jnp.dot(merged.reshape(bblk * l, hid).astype(jnp.bfloat16), wo_ref[...],
                  preferred_element_type=jnp.float32)       # (Bblk*L, C)
    out = out + bo_ref[...]
    o_ref[...] = out.reshape(bblk, l, c).astype(o_ref.dtype)


def _fused_cat_conv_kernel(a_ref, x_ref, r_ref, wa_ref, wx_ref, wr_ref, b_ref, o_ref):
    """relu(attn_sum)@Wa + x@Wx + res@Wr + b, followed by ReLU.

    Equivalent to conv1x1(cat([relu(attn), x, res], channel)) with row-split weights,
    so the concatenated tensor never hits HBM.
    """
    a = jnp.maximum(a_ref[...], 0.0).astype(jnp.bfloat16)   # fused pre-conv ReLU
    acc = jnp.dot(a, wa_ref[...], preferred_element_type=jnp.float32)
    acc += jnp.dot(x_ref[...].astype(jnp.bfloat16), wx_ref[...],
                   preferred_element_type=jnp.float32)
    acc += jnp.dot(r_ref[...].astype(jnp.bfloat16), wr_ref[...],
                   preferred_element_type=jnp.float32)
    acc = acc + b_ref[...]
    o_ref[...] = jnp.maximum(acc, 0.0).astype(o_ref.dtype)


# ----------------------------------------------------------------------------
# Pallas wrappers
# ----------------------------------------------------------------------------
def self_attention_pallas(x_blc, p, *, heads):
    """lucidrains SelfAttention on (B, L, C) sequences; B batched per grid step."""
    b, l, c = x_blc.shape
    wqkv, wo, bo = p["wqkv"], p["wo"], p["bo"]
    hid = wo.shape[0]
    dim_heads = hid // heads
    bblk = _pick_seq_block(b)
    kernel = functools.partial(_axial_self_attn_kernel, heads=heads, dim_heads=dim_heads)
    return pl.pallas_call(
        kernel,
        out_shape=jax.ShapeDtypeStruct((b, l, c), x_blc.dtype),
        grid=(b // bblk,),
        in_specs=[
            pl.BlockSpec((bblk, l, c), lambda i: (i, 0, 0)),
            pl.BlockSpec((c, 3 * hid), lambda i: (0, 0)),
            pl.BlockSpec((hid, c), lambda i: (0, 0)),
            pl.BlockSpec((1, c), lambda i: (0, 0)),
        ],
        out_specs=pl.BlockSpec((bblk, l, c), lambda i: (i, 0, 0)),
        compiler_params=pltpu.CompilerParams(dimension_semantics=("parallel",)),
    )(x_blc, wqkv, wo, bo)


def fused_cat_conv1x1(attn_sum, x, res, conv_p, e_out):
    """y = relu( relu(attn_sum)@Wa + x@Wx + res@Wr + b ), inputs as (M, Cin_i)."""
    m, c = x.shape
    e_in = res.shape[1]
    wa, wx, wr, b = conv_p["wa"], conv_p["wx"], conv_p["wr"], conv_p["b"]
    ep = wa.shape[1]                                         # lane-padded Cout
    bm = _pick_bm(m)
    assert m % bm == 0
    out = pl.pallas_call(
        _fused_cat_conv_kernel,
        out_shape=jax.ShapeDtypeStruct((m, ep), jnp.float32),
        grid=(m // bm,),
        in_specs=[
            pl.BlockSpec((bm, c), lambda i: (i, 0)),
            pl.BlockSpec((bm, c), lambda i: (i, 0)),
            pl.BlockSpec((bm, e_in), lambda i: (i, 0)),
            pl.BlockSpec((c, ep), lambda i: (0, 0)),
            pl.BlockSpec((c, ep), lambda i: (0, 0)),
            pl.BlockSpec((e_in, ep), lambda i: (0, 0)),
            pl.BlockSpec((1, ep), lambda i: (0, 0)),
        ],
        out_specs=pl.BlockSpec((bm, ep), lambda i: (i, 0)),
        compiler_params=pltpu.CompilerParams(dimension_semantics=("parallel",)),
    )(attn_sum, x, res, wa, wx, wr, b)
    return out[:, :e_out] if e_out != ep else out


# ----------------------------------------------------------------------------
# Plain-JAX glue (upsample, batchnorm stats, layout permutes)
# ----------------------------------------------------------------------------
def upsample2x_bilinear_align_corners_nhwc(x):
    n, h, w, c = x.shape
    ho, wo = 2 * h, 2 * w

    def coords(n_in, n_out):
        if n_in == 1:
            return jnp.zeros((n_out,), jnp.float32)
        return jnp.arange(n_out, dtype=jnp.float32) * ((n_in - 1) / (n_out - 1))

    ys, xs = coords(h, ho), coords(w, wo)
    y0 = jnp.floor(ys).astype(jnp.int32)
    y1 = jnp.minimum(y0 + 1, h - 1)
    wy = (ys - y0.astype(jnp.float32))[None, :, None, None]
    x0 = jnp.floor(xs).astype(jnp.int32)
    x1 = jnp.minimum(x0 + 1, w - 1)
    wx = (xs - x0.astype(jnp.float32))[None, None, :, None]

    rows = x[:, y0, :, :] * (1.0 - wy) + x[:, y1, :, :] * wy         # (N,Ho,W,C)
    return rows[:, :, x0, :] * (1.0 - wx) + rows[:, :, x1, :] * wx   # (N,Ho,Wo,C)


def batchnorm_lastdim_train(y, gamma, beta, eps=1e-5):
    # PyTorch train-mode forward: biased batch variance over (N, H, W).
    mean = y.mean(axis=0, keepdims=True)
    var = jnp.var(y, axis=0, keepdims=True)
    return (y - mean) * jax.lax.rsqrt(var + eps) * gamma[None, :] + beta[None, :]


def axial_attention_nhwc(x_nhwc, p, *, heads):
    """AxialAttention(dim=C, dim_index=1, num_dimensions=2, sum_axial_out=True)."""
    n, h, w, c = x_nhwc.shape
    # attend along W (rows folded into batch) — no transpose needed in NHWC
    xw = x_nhwc.reshape(n * h, w, c)
    ow = self_attention_pallas(xw, p["w"], heads=heads).reshape(n, h, w, c)
    # attend along H (columns folded into batch)
    xh = jnp.transpose(x_nhwc, (0, 2, 1, 3)).reshape(n * w, h, c)
    oh = self_attention_pallas(xh, p["h"], heads=heads)
    oh = jnp.transpose(oh.reshape(n, w, h, c), (0, 2, 1, 3))
    return ow + oh


# ----------------------------------------------------------------------------
# AxialUp forward
# ----------------------------------------------------------------------------
def axial_up_forward(params, x_nchw, res_nchw, *, heads=2):
    n, c, h, w = x_nchw.shape
    x_nhwc = jnp.transpose(x_nchw, (0, 2, 3, 1))
    xu = upsample2x_bilinear_align_corners_nhwc(x_nhwc)             # (N, 2H, 2W, C)
    ho, wo = 2 * h, 2 * w

    attn_sum = axial_attention_nhwc(xu, params["attn"], heads=heads)  # pre-ReLU sum

    m = n * ho * wo
    res_flat = jnp.transpose(res_nchw, (0, 2, 3, 1)).reshape(m, -1)
    e_out = params["bn_g"].shape[0]
    y = fused_cat_conv1x1(attn_sum.reshape(m, c), xu.reshape(m, c),
                          res_flat, params["conv"], e_out)           # (M, E), relu'd
    y = batchnorm_lastdim_train(y, params["bn_g"], params["bn_b"])
    return jnp.transpose(y.reshape(n, ho, wo, e_out), (0, 3, 1, 2))  # NCHW out


# ----------------------------------------------------------------------------
# Parameters: raw init (mirrors the PyTorch module) + one-time kernel-ready prep
# ----------------------------------------------------------------------------
def init_axial_up_params(key, n_channels, embedding_dims, heads=2):
    keys = iter(jax.random.split(key, 32))

    def nrm(shape, scale=0.05):
        return scale * jax.random.normal(next(keys), shape, dtype=jnp.float32)

    dim = n_channels
    hid = (dim // heads) * heads
    e = embedding_dims

    def self_attn():   # to_q / to_kv (no bias), to_out (bias)
        return dict(wq=nrm((dim, hid)), wk=nrm((dim, hid)), wv=nrm((dim, hid)),
                    wo=nrm((hid, dim)), bo=nrm((dim,)))

    return dict(
        attn=dict(h=self_attn(), w=self_attn()),
        # conv1x1(cat_dims -> e) weight split row-wise by cat segment (attn, x, res)
        conv=dict(wa=nrm((dim, e)), wx=nrm((dim, e)), wr=nrm((e, e)), b=nrm((e,))),
        bn_g=1.0 + nrm((e,)), bn_b=nrm((e,)),
    )


def prepare_params(raw, *, heads):
    """One-time transform: fold softmax scale into wq, fuse QKV, cast weights to
    bf16, and pad conv output channels to a lane-dense multiple of 128."""
    def prep_attn(p):
        dim, hid = p["wq"].shape
        scale = (hid // heads) ** -0.5
        wqkv = jnp.concatenate([p["wq"] * scale, p["wk"], p["wv"]], axis=1)
        return dict(wqkv=wqkv.astype(jnp.bfloat16),
                    wo=p["wo"].astype(jnp.bfloat16),
                    bo=p["bo"].reshape(1, dim).astype(jnp.float32))

    conv = raw["conv"]
    e_out = conv["b"].shape[0]
    ep = ((e_out + 127) // 128) * 128

    def pad_cols(wm):
        return jnp.pad(wm, ((0, 0), (0, ep - wm.shape[1]))).astype(jnp.bfloat16)

    return dict(
        attn=dict(h=prep_attn(raw["attn"]["h"]), w=prep_attn(raw["attn"]["w"])),
        conv=dict(wa=pad_cols(conv["wa"]), wx=pad_cols(conv["wx"]),
                  wr=pad_cols(conv["wr"]),
                  b=jnp.pad(conv["b"], (0, ep - e_out)).reshape(1, ep).astype(jnp.float32)),
        bn_g=raw["bn_g"], bn_b=raw["bn_b"],
    )


# ----------------------------------------------------------------------------
if __name__ == "__main__":
    n_channels, embedding_dims, heads = 32, 16, 2
    batch, h_in, w_in = 2, 8, 8                       # upsampled to 16 x 16

    key = jax.random.PRNGKey(0)
    k_p, k_x, k_r = jax.random.split(key, 3)
    raw_params = init_axial_up_params(k_p, n_channels, embedding_dims, heads)
    params = prepare_params(raw_params, heads=heads)

    x = jax.random.normal(k_x, (batch, n_channels, h_in, w_in), dtype=jnp.float32)
    res = jax.random.normal(k_r, (batch, embedding_dims, 2 * h_in, 2 * w_in),
                            dtype=jnp.float32)

    fwd = jax.jit(functools.partial(axial_up_forward, heads=heads))
    out = jax.block_until_ready(fwd(params, x, res))

    assert out.shape == (batch, embedding_dims, 2 * h_in, 2 * w_in), out.shape
    assert bool(jnp.all(jnp.isfinite(out)))
    print("KERNEL_OK")
</pallas_src>

<mosaic_0001>
module attributes {stable_mosaic.version = 11 : i64} {
  func.func @_axial_self_attn_kernel(%arg0: i32, %arg1: memref<16x16x32xf32, #tpu.memory_space<vmem>>, %arg2: memref<32x96xbf16, #tpu.memory_space<vmem>>, %arg3: memref<32x32xbf16, #tpu.memory_space<vmem>>, %arg4: memref<1x32xf32, #tpu.memory_space<vmem>>, %arg5: memref<16x16x32xf32, #tpu.memory_space<vmem>>) attributes {dimension_semantics = [#tpu.dimension_semantics<parallel>], iteration_bounds = array<i64: 2>, scalar_prefetch = 0 : i64, scratch_operands = 0 : i64, tpu.core_type = #tpu.core_type<tc>, window_params = [{transform_indices = @transform_0, window_bounds = array<i64: 16, 16, 32>}, {pipeline_mode = #tpu.pipeline_mode<synchronous>, transform_indices = @transform_1, window_bounds = array<i64: 32, 96>}, {pipeline_mode = #tpu.pipeline_mode<synchronous>, transform_indices = @transform_2, window_bounds = array<i64: 32, 32>}, {pipeline_mode = #tpu.pipeline_mode<synchronous>, transform_indices = @transform_3, window_bounds = array<i64: 1, 32>}, {transform_indices = @transform_4, window_bounds = array<i64: 16, 16, 32>}]} {
    %c0 = arith.constant 0 : index
    %c0_0 = arith.constant 0 : index
    %c0_1 = arith.constant 0 : index
    %0 = vector.load %arg1[%c0, %c0_0, %c0_1] : memref<16x16x32xf32, #tpu.memory_space<vmem>>, vector<16x16x32xf32>
    %1 = vector.shape_cast %0 : vector<16x16x32xf32> to vector<256x32xf32>
    %2 = arith.truncf %1 : vector<256x32xf32> to vector<256x32xbf16>
    %c0_2 = arith.constant 0 : index
    %c0_3 = arith.constant 0 : index
    %3 = vector.load %arg2[%c0_2, %c0_3] : memref<32x96xbf16, #tpu.memory_space<vmem>>, vector<32x96xbf16>
    %cst = arith.constant dense<0.000000e+00> : vector<256x96xf32>
    %4 = tpu.matmul %2, %3, %cst {dimension_numbers = #tpu.dot_dimension_numbers<[1], [0], [0], [1], [0, 0, 1, 1], [], []>} : vector<256x32xbf16>, vector<32x96xbf16>, vector<256x96xf32> -> vector<256x96xf32>
    %5 = vector.shape_cast %4 : vector<256x96xf32> to vector<16x16x96xf32>
    %6 = vector.extract_strided_slice %5 {offsets = [0, 0, 0], sizes = [16, 16, 16], strides = [1, 1, 1]} : vector<16x16x96xf32> to vector<16x16x16xf32>
    %7 = arith.truncf %6 : vector<16x16x16xf32> to vector<16x16x16xbf16>
    %8 = vector.extract_strided_slice %5 {offsets = [0, 0, 32], sizes = [16, 16, 16], strides = [1, 1, 1]} : vector<16x16x96xf32> to vector<16x16x16xf32>
    %9 = arith.truncf %8 : vector<16x16x16xf32> to vector<16x16x16xbf16>
    %10 = vector.extract_strided_slice %5 {offsets = [0, 0, 64], sizes = [16, 16, 16], strides = [1, 1, 1]} : vector<16x16x96xf32> to vector<16x16x16xf32>
    %11 = arith.truncf %10 : vector<16x16x16xf32> to vector<16x16x16xbf16>
    "tpu.trace_start"() <{level = 10 : i32, message = "bqd,bkd->bqk"}> : () -> ()
    %cst_4 = arith.constant dense<0.000000e+00> : vector<16x16x16xf32>
    %12 = tpu.matmul %7, %9, %cst_4 {dimension_numbers = #tpu.dot_dimension_numbers<[2], [2], [1], [1], [0, 0, 0, 1, 1, 1], [0], [0]>} : vector<16x16x16xbf16>, vector<16x16x16xbf16>, vector<16x16x16xf32> -> vector<16x16x16xf32>
    "tpu.trace_stop"() : () -> ()
    %cst_5 = arith.constant dense<0xFF800000> : vector<16x16xf32>
    %13 = vector.multi_reduction <maximumf>, %12, %cst_5 [2] : vector<16x16x16xf32> to vector<16x16xf32>
    %14 = vector.shape_cast %13 : vector<16x16xf32> to vector<16x16x1xf32>
    %15 = vector.broadcast %14 : vector<16x16x1xf32> to vector<16x16x16xf32>
    %16 = arith.subf %12, %15 : vector<16x16x16xf32>
    %17 = math.exp %16 : vector<16x16x16xf32>
    %cst_6 = arith.constant dense<0.000000e+00> : vector<16x16xf32>
    %18 = vector.multi_reduction <add>, %17, %cst_6 [2] : vector<16x16x16xf32> to vector<16x16xf32>
    %19 = vector.shape_cast %18 : vector<16x16xf32> to vector<16x16x1xf32>
    %20 = tpu.reciprocal %19 {approx = true} : vector<16x16x1xf32> -> vector<16x16x1xf32>
    %21 = vector.broadcast %20 : vector<16x16x1xf32> to vector<16x16x16xf32>
    %22 = arith.mulf %17, %21 : vector<16x16x16xf32>
    %23 = arith.truncf %22 : vector<16x16x16xf32> to vector<16x16x16xbf16>
    "tpu.trace_start"() <{level = 10 : i32, message = "bqk,bkd->bqd"}> : () -> ()
    %cst_7 = arith.constant dense<0.000000e+00> : vector<16x16x16xf32>
    %24 = tpu.matmul %23, %11, %cst_7 {dimension_numbers = #tpu.dot_dimension_numbers<[2], [1], [1], [2], [0, 0, 0, 1, 1, 2], [0], [0]>} : vector<16x16x16xbf16>, vector<16x16x16xbf16>, vector<16x16x16xf32> -> vector<16x16x16xf32>
    "tpu.trace_stop"() : () -> ()
    %25 = vector.extract_strided_slice %5 {offsets = [0, 0, 16], sizes = [16, 16, 16], strides = [1, 1, 1]} : vector<16x16x96xf32> to vector<16x16x16xf32>
    %26 = arith.truncf %25 : vector<16x16x16xf32> to vector<16x16x16xbf16>
    %27 = vector.extract_strided_slice %5 {offsets = [0, 0, 48], sizes = [16, 16, 16], strides = [1, 1, 1]} : vector<16x16x96xf32> to vector<16x16x16xf32>
    %28 = arith.truncf %27 : vector<16x16x16xf32> to vector<16x16x16xbf16>
    %29 = vector.extract_strided_slice %5 {offsets = [0, 0, 80], sizes = [16, 16, 16], strides = [1, 1, 1]} : vector<16x16x96xf32> to vector<16x16x16xf32>
    %30 = arith.truncf %29 : vector<16x16x16xf32> to vector<16x16x16xbf16>
    "tpu.trace_start"() <{level = 10 : i32, message = "bqd,bkd->bqk"}> : () -> ()
    %cst_8 = arith.constant dense<0.000000e+00> : vector<16x16x16xf32>
    %31 = tpu.matmul %26, %28, %cst_8 {dimension_numbers = #tpu.dot_dimension_numbers<[2], [2], [1], [1], [0, 0, 0, 1, 1, 1], [0], [0]>} : vector<16x16x16xbf16>, vector<16x16x16xbf16>, vector<16x16x16xf32> -> vector<16x16x16xf32>
    "tpu.trace_stop"() : () -> ()
    %cst_9 = arith.constant dense<0xFF800000> : vector<16x16xf32>
    %32 = vector.multi_reduction <maximumf>, %31, %cst_9 [2] : vector<16x16x16xf32> to vector<16x16xf32>
    %33 = vector.shape_cast %32 : vector<16x16xf32> to vector<16x16x1xf32>
    %34 = vector.broadcast %33 : vector<16x16x1xf32> to vector<16x16x16xf32>
    %35 = arith.subf %31, %34 : vector<16x16x16xf32>
    %36 = math.exp %35 : vector<16x16x16xf32>
    %cst_10 = arith.constant dense<0.000000e+00> : vector<16x16xf32>
    %37 = vector.multi_reduction <add>, %36, %cst_10 [2] : vector<16x16x16xf32> to vector<16x16xf32>
    %38 = vector.shape_cast %37 : vector<16x16xf32> to vector<16x16x1xf32>
    %39 = tpu.reciprocal %38 {approx = true} : vector<16x16x1xf32> -> vector<16x16x1xf32>
    %40 = vector.broadcast %39 : vector<16x16x1xf32> to vector<16x16x16xf32>
    %41 = arith.mulf %36, %40 : vector<16x16x16xf32>
    %42 = arith.truncf %41 : vector<16x16x16xf32> to vector<16x16x16xbf16>
    "tpu.trace_start"() <{level = 10 : i32, message = "bqk,bkd->bqd"}> : () -> ()
    %cst_11 = arith.constant dense<0.000000e+00> : vector<16x16x16xf32>
    %43 = tpu.matmul %42, %30, %cst_11 {dimension_numbers = #tpu.dot_dimension_numbers<[2], [1], [1], [2], [0, 0, 0, 1, 1, 2], [0], [0]>} : vector<16x16x16xbf16>, vector<16x16x16xbf16>, vector<16x16x16xf32> -> vector<16x16x16xf32>
    "tpu.trace_stop"() : () -> ()
    %44 = tpu.concatenate %24, %43 in 2 : vector<16x16x16xf32>, vector<16x16x16xf32> -> vector<16x16x32xf32>
    %45 = vector.shape_cast %44 : vector<16x16x32xf32> to vector<256x32xf32>
    %46 = arith.truncf %45 : vector<256x32xf32> to vector<256x32xbf16>
    %c0_12 = arith.constant 0 : index
    %c0_13 = arith.constant 0 : index
    %47 = vector.load %arg3[%c0_12, %c0_13] : memref<32x32xbf16, #tpu.memory_space<vmem>>, vector<32x32xbf16>
    %cst_14 = arith.constant dense<0.000000e+00> : vector<256x32xf32>
    %48 = tpu.matmul %46, %47, %cst_14 {dimension_numbers = #tpu.dot_dimension_numbers<[1], [0], [0], [1], [0, 0, 1, 1], [], []>} : vector<256x32xbf16>, vector<32x32xbf16>, vector<256x32xf32> -> vector<256x32xf32>
    %c0_15 = arith.constant 0 : index
    %c0_16 = arith.constant 0 : index
    %49 = vector.load %arg4[%c0_15, %c0_16] : memref<1x32xf32, #tpu.memory_space<vmem>>, vector<1x32xf32>
    %50 = vector.broadcast %49 : vector<1x32xf32> to vector<256x32xf32>
    %51 = arith.addf %48, %50 : vector<256x32xf32>
    %52 = vector.shape_cast %51 : vector<256x32xf32> to vector<16x16x32xf32>
    %c0_17 = arith.constant 0 : index
    %c0_18 = arith.constant 0 : index
    %c0_19 = arith.constant 0 : index
    %53 = vector.load %arg5[%c0_17, %c0_18, %c0_19] : memref<16x16x32xf32, #tpu.memory_space<vmem>>, vector<16x16x32xf32>
    tpu.vector_store %arg5[%c0_17, %c0_18, %c0_19], %52 {strides = array<i32>} : memref<16x16x32xf32, #tpu.memory_space<vmem>>, vector<16x16x32xf32>,
    return
  }
  func.func @transform_0(%arg0: i32) -> (i32, i32, i32) {
    %c0_i32 = arith.constant 0 : i32
    %c0_i32_0 = arith.constant 0 : i32
    %c0_i32_1 = arith.constant 0 : i32
    return %arg0, %c0_i32, %c0_i32_0 : i32, i32, i32
  }
  func.func @transform_1(%arg0: i32) -> (i32, i32) {
    %c0_i32 = arith.constant 0 : i32
    %c0_i32_0 = arith.constant 0 : i32
    %c0_i32_1 = arith.constant 0 : i32
    return %c0_i32, %c0_i32_0 : i32, i32
  }
  func.func @transform_2(%arg0: i32) -> (i32, i32) {
    %c0_i32 = arith.constant 0 : i32
    %c0_i32_0 = arith.constant 0 : i32
    %c0_i32_1 = arith.constant 0 : i32
    return %c0_i32, %c0_i32_0 : i32, i32
  }
  func.func @transform_3(%arg0: i32) -> (i32, i32) {
    %c0_i32 = arith.constant 0 : i32
    %c0_i32_0 = arith.constant 0 : i32
    %c0_i32_1 = arith.constant 0 : i32
    return %c0_i32, %c0_i32_0 : i32, i32
  }
  func.func @transform_4(%arg0: i32) -> (i32, i32, i32) {
    %c0_i32 = arith.constant 0 : i32
    %c0_i32_0 = arith.constant 0 : i32
    %c0_i32_1 = arith.constant 0 : i32
    return %arg0, %c0_i32, %c0_i32_0 : i32, i32, i32
  }
}

module attributes {stable_mosaic.version = 11 : i64} {
  func.func @_fused_cat_conv_kernel(%arg0: i32, %arg1: memref<256x32xf32, #tpu.memory_space<vmem>>, %arg2: memref<256x32xf32, #tpu.memory_space<vmem>>, %arg3: memref<256x16xf32, #tpu.memory_space<vmem>>, %arg4: memref<32x128xbf16, #tpu.memory_space<vmem>>, %arg5: memref<32x128xbf16, #tpu.memory_space<vmem>>, %arg6: memref<16x128xbf16, #tpu.memory_space<vmem>>, %arg7: memref<1x128xf32, #tpu.memory_space<vmem>>, %arg8: memref<256x128xf32, #tpu.memory_space<vmem>>) attributes {dimension_semantics = [#tpu.dimension_semantics<parallel>], iteration_bounds = array<i64: 2>, scalar_prefetch = 0 : i64, scratch_operands = 0 : i64, tpu.core_type = #tpu.core_type<tc>, window_params = [{transform_indices = @transform_0, window_bounds = array<i64: 256, 32>}, {transform_indices = @transform_1, window_bounds = array<i64: 256, 32>}, {transform_indices = @transform_2, window_bounds = array<i64: 256, 16>}, {pipeline_mode = #tpu.pipeline_mode<synchronous>, transform_indices = @transform_3, window_bounds = array<i64: 32, 128>}, {pipeline_mode = #tpu.pipeline_mode<synchronous>, transform_indices = @transform_4, window_bounds = array<i64: 32, 128>}, {pipeline_mode = #tpu.pipeline_mode<synchronous>, transform_indices = @transform_5, window_bounds = array<i64: 16, 128>}, {pipeline_mode = #tpu.pipeline_mode<synchronous>, transform_indices = @transform_6, window_bounds = array<i64: 1, 128>}, {transform_indices = @transform_7, window_bounds = array<i64: 256, 128>}]} {
    %c0 = arith.constant 0 : index
    %c0_0 = arith.constant 0 : index
    %0 = vector.load %arg1[%c0, %c0_0] : memref<256x32xf32, #tpu.memory_space<vmem>>, vector<256x32xf32>
    %cst = arith.constant 0.000000e+00 : f32
    %1 = vector.broadcast %cst : f32 to vector<256x32xf32>
    %2 = arith.maximumf %0, %1 : vector<256x32xf32>
    %3 = arith.truncf %2 : vector<256x32xf32> to vector<256x32xbf16>
    %c0_1 = arith.constant 0 : index
    %c0_2 = arith.constant 0 : index
    %4 = vector.load %arg4[%c0_1, %c0_2] : memref<32x128xbf16, #tpu.memory_space<vmem>>, vector<32x128xbf16>
    %cst_3 = arith.constant dense<0.000000e+00> : vector<256x128xf32>
    %5 = tpu.matmul %3, %4, %cst_3 {dimension_numbers = #tpu.dot_dimension_numbers<[1], [0], [0], [1], [0, 0, 1, 1], [], []>} : vector<256x32xbf16>, vector<32x128xbf16>, vector<256x128xf32> -> vector<256x128xf32>
    %c0_4 = arith.constant 0 : index
    %c0_5 = arith.constant 0 : index
    %6 = vector.load %arg2[%c0_4, %c0_5] : memref<256x32xf32, #tpu.memory_space<vmem>>, vector<256x32xf32>
    %7 = arith.truncf %6 : vector<256x32xf32> to vector<256x32xbf16>
    %c0_6 = arith.constant 0 : index
    %c0_7 = arith.constant 0 : index
    %8 = vector.load %arg5[%c0_6, %c0_7] : memref<32x128xbf16, #tpu.memory_space<vmem>>, vector<32x128xbf16>
    %cst_8 = arith.constant dense<0.000000e+00> : vector<256x128xf32>
    %9 = tpu.matmul %7, %8, %cst_8 {dimension_numbers = #tpu.dot_dimension_numbers<[1], [0], [0], [1], [0, 0, 1, 1], [], []>} : vector<256x32xbf16>, vector<32x128xbf16>, vector<256x128xf32> -> vector<256x128xf32>
    %10 = arith.addf %5, %9 : vector<256x128xf32>
    %c0_9 = arith.constant 0 : index
    %c0_10 = arith.constant 0 : index
    %11 = vector.load %arg3[%c0_9, %c0_10] : memref<256x16xf32, #tpu.memory_space<vmem>>, vector<256x16xf32>
    %12 = arith.truncf %11 : vector<256x16xf32> to vector<256x16xbf16>
    %c0_11 = arith.constant 0 : index
    %c0_12 = arith.constant 0 : index
    %13 = vector.load %arg6[%c0_11, %c0_12] : memref<16x128xbf16, #tpu.memory_space<vmem>>, vector<16x128xbf16>
    %cst_13 = arith.constant dense<0.000000e+00> : vector<256x128xf32>
    %14 = tpu.matmul %12, %13, %cst_13 {dimension_numbers = #tpu.dot_dimension_numbers<[1], [0], [0], [1], [0, 0, 1, 1], [], []>} : vector<256x16xbf16>, vector<16x128xbf16>, vector<256x128xf32> -> vector<256x128xf32>
    %15 = arith.addf %10, %14 : vector<256x128xf32>
    %c0_14 = arith.constant 0 : index
    %c0_15 = arith.constant 0 : index
    %16 = vector.load %arg7[%c0_14, %c0_15] : memref<1x128xf32, #tpu.memory_space<vmem>>, vector<1x128xf32>
    %17 = vector.broadcast %16 : vector<1x128xf32> to vector<256x128xf32>
    %18 = arith.addf %15, %17 : vector<256x128xf32>
    %cst_16 = arith.constant 0.000000e+00 : f32
    %19 = vector.broadcast %cst_16 : f32 to vector<256x128xf32>
    %20 = arith.maximumf %18, %19 : vector<256x128xf32>
    %c0_17 = arith.constant 0 : index
    %c0_18 = arith.constant 0 : index
    %21 = vector.load %arg8[%c0_17, %c0_18] : memref<256x128xf32, #tpu.memory_space<vmem>>, vector<256x128xf32>
    tpu.vector_store %arg8[%c0_17, %c0_18], %20 {strides = array<i32>} : memref<256x128xf32, #tpu.memory_space<vmem>>, vector<256x128xf32>,
    return
  }
  func.func @transform_0(%arg0: i32) -> (i32, i32) {
    %c0_i32 = arith.constant 0 : i32
    %c0_i32_0 = arith.constant 0 : i32
    return %arg0, %c0_i32 : i32, i32
  }
  func.func @transform_1(%arg0: i32) -> (i32, i32) {
    %c0_i32 = arith.constant 0 : i32
    %c0_i32_0 = arith.constant 0 : i32
    return %arg0, %c0_i32 : i32, i32
  }
  func.func @transform_2(%arg0: i32) -> (i32, i32) {
    %c0_i32 = arith.constant 0 : i32
    %c0_i32_0 = arith.constant 0 : i32
    return %arg0, %c0_i32 : i32, i32
  }
  func.func @transform_3(%arg0: i32) -> (i32, i32) {
    %c0_i32 = arith.constant 0 : i32
    %c0_i32_0 = arith.constant 0 : i32
    %c0_i32_1 = arith.constant 0 : i32
    return %c0_i32, %c0_i32_0 : i32, i32
  }
  func.func @transform_4(%arg0: i32) -> (i32, i32) {
    %c0_i32 = arith.constant 0 : i32
    %c0_i32_0 = arith.constant 0 : i32
    %c0_i32_1 = arith.constant 0 : i32
    return %c0_i32, %c0_i32_0 : i32, i32
  }
  func.func @transform_5(%arg0: i32) -> (i32, i32) {
    %c0_i32 = arith.constant 0 : i32
    %c0_i32_0 = arith.constant 0 : i32
    %c0_i32_1 = arith.constant 0 : i32
    return %c0_i32, %c0_i32_0 : i32, i32
  }
  func.func @transform_6(%arg0: i32) -> (i32, i32) {
    %c0_i32 = arith.constant 0 : i32
    %c0_i32_0 = arith.constant 0 : i32
    %c0_i32_1 = arith.constant 0 : i32
    return %c0_i32, %c0_i32_0 : i32, i32
  }
  func.func @transform_7(%arg0: i32) -> (i32, i32) {
    %c0_i32 = arith.constant 0 : i32
    %c0_i32_0 = arith.constant 0 : i32
    return %arg0, %c0_i32 : i32, i32
  }
}

</mosaic_0001>

<llo_original>
// kernel: axial_up_forward.5
$region0: #{axial_up_forward.5}
  #allocation0 [shape = 'u32[]', space=smem, size = 0x4, offset = 0x4, fixed_abs, tag = 'smem constant byte address 0x4 - core index']
  #allocation1 [shape = 'u32[144,128]{1,0:T(1,128)}', space=vmem, size = 0x12000, scoped, tag = 'internal scratch']
  %s0 = inlined_call_operand.vmem [shape: f32[512,32], index: 0, kind: input, shape index: {}]
  %s1 = inlined_call_operand.vmem [shape: f32[512,32], index: 1, kind: input, shape index: {}]
  %s2 = inlined_call_operand.vmem [shape: f32[512,16], index: 2, kind: input, shape index: {}]
  %s3 = inlined_call_operand.vmem [shape: bf16[32,128], index: 3, kind: input, shape index: {}]
  %s4 = inlined_call_operand.vmem [shape: bf16[32,128], index: 4, kind: input, shape index: {}]
  %s5 = inlined_call_operand.vmem [shape: bf16[16,128], index: 5, kind: input, shape index: {}]
  %s6 = inlined_call_operand.vmem [shape: f32[1,128], index: 6, kind: input, shape index: {}]
  %s7 = inlined_call_operand.vmem [shape: f32[512,128], index: 7, kind: output, shape index: {}]
  %s8 = sld [smem:[#allocation0]]
  $region61: #{axial_up_forward.5} parent=0
    _
  %s10 = ssub.s32 1, %s8
  %s11 = scalar_select 0, %s10, %s8
  loop: start=0, step=1, limit=4
  $region2: #{axial_up_forward.5} parent=0 // loop_pre_header
    _
  $region3: #{axial_up_forward.5} parent=0 // loop_header
    %s13 = sphi 0, %s17
    %p14 = scmp.ge.s32.totalorder %s13, 4
    %s23 = sphi 0, %s25
    %s26 = sphi 0, %s23
    %s27 = sphi 0, %s26
    %s43 = sphi 0, %s27
    %s49 = sphi 0, %s51
    %s52 = sphi 0, %s49
    %s53 = sphi 0, %s52
    %s69 = sphi 0, %s53
    %s75 = sphi 0, %s77
    %s78 = sphi 0, %s75
    %s79 = sphi 0, %s78
    %s95 = sphi 0, %s79
    %s99 = sphi 0, %s99
    %s101 = sphi 0, %s99
    %s102 = sphi 0, %s101
    %s116 = sphi 0, %s102
    %s120 = sphi 0, %s120
    %s122 = sphi 0, %s120
    %s123 = sphi 0, %s122
    %s137 = sphi 0, %s123
    %s141 = sphi 0, %s141
    %s143 = sphi 0, %s141
    %s144 = sphi 0, %s143
    %s158 = sphi 0, %s144
    %s162 = sphi 0, %s162
    %s164 = sphi 0, %s162
    %s165 = sphi 0, %s164
    %s179 = sphi 0, %s165
    %s185 = sphi 0, %s187
    %s188 = sphi 0, %s185
    %s189 = sphi 0, %s188
    %s205 = sphi 0, %s189
  $region4: #{axial_up_forward.5} parent=0 // loop_header_branch
    %16 = sbr.rel (%p14) target = $region8
  $region5: #{axial_up_forward.5} parent=0 // loop_body
    %s18 = ssub.s32 %s13, 1
    %s19 = ssub.s32 %s13, 2
    %s20 = sadd.s32 %s13, 1
    %s21 = ssub.s32 %s13, %s20
    %p22 = scmp.eq.s32.totalorder %s21, 0
    %s24 = sadd.s32 %s23, 1
    %s25 = scalar_select %p22, %s23, %s24
    %p28 = pneg %p22
    %p29 = scmp.eq.s32.totalorder %s13, 1
    %p30 = por %p28, %p29
    %p31 = scmp.ne.s32.totalorder %s23, %s26
    %p32 = scmp.eq.s32.totalorder %s13, 0
    %p33 = por %p31, %p32
    %p34 = scmp.ne.s32.totalorder %s23, %s26
    %p35 = scmp.eq.s32.totalorder %s18, 1
    %p36 = por %p34, %p35
    %p37 = scmp.ne.s32.totalorder %s26, %s27
    %p38 = scmp.eq.s32.totalorder %s18, 0
    %p39 = por %p37, %p38
    %p40 = scmp.ne.s32.totalorder %s26, %s27
    %p41 = scmp.eq.s32.totalorder %s19, 1
    %p42 = por %p40, %p41
    %p44 = scmp.ne.s32.totalorder %s27, %s43
    %p45 = scmp.eq.s32.totalorder %s19, 0
    %p46 = por %p44, %p45
    %s47 = ssub.s32 %s13, %s20
    %p48 = scmp.eq.s32.totalorder %s47, 0
    %s50 = sadd.s32 %s49, 1
    %s51 = scalar_select %p48, %s49, %s50
    %p54 = pneg %p48
    %p55 = scmp.eq.s32.totalorder %s13, 1
    %p56 = por %p54, %p55
    %p57 = scmp.ne.s32.totalorder %s49, %s52
    %p58 = scmp.eq.s32.totalorder %s13, 0
    %p59 = por %p57, %p58
    %p60 = scmp.ne.s32.totalorder %s49, %s52
    %p61 = scmp.eq.s32.totalorder %s18, 1
    %p62 = por %p60, %p61
    %p63 = scmp.ne.s32.totalorder %s52, %s53
    %p64 = scmp.eq.s32.totalorder %s18, 0
    %p65 = por %p63, %p64
    %p66 = scmp.ne.s32.totalorder %s52, %s53
    %p67 = scmp.eq.s32.totalorder %s19, 1
    %p68 = por %p66, %p67
    %p70 = scmp.ne.s32.totalorder %s53, %s69
    %p71 = scmp.eq.s32.totalorder %s19, 0
    %p72 = por %p70, %p71
    %s73 = ssub.s32 %s13, %s20
    %p74 = scmp.eq.s32.totalorder %s73, 0
    %s76 = sadd.s32 %s75, 1
    %s77 = scalar_select %p74, %s75, %s76
    %p80 = pneg %p74
    %p81 = scmp.eq.s32.totalorder %s13, 1
    %p82 = por %p80, %p81
    %p83 = scmp.ne.s32.totalorder %s75, %s78
    %p84 = scmp.eq.s32.totalorder %s13, 0
    %p85 = por %p83, %p84
    %p86 = scmp.ne.s32.totalorder %s75, %s78
    %p87 = scmp.eq.s32.totalorder %s18, 1
    %p88 = por %p86, %p87
    %p89 = scmp.ne.s32.totalorder %s78, %s79
    %p90 = scmp.eq.s32.totalorder %s18, 0
    %p91 = por %p89, %p90
    %p92 = scmp.ne.s32.totalorder %s78, %s79
    %p93 = scmp.eq.s32.totalorder %s19, 1
    %p94 = por %p92, %p93
    %p96 = scmp.ne.s32.totalorder %s79, %s95
    %p97 = scmp.eq.s32.totalorder %s19, 0
    %p98 = por %p96, %p97
    %s100 = sadd.s32 %s99, 1
    %p103 = scmp.eq.s32.totalorder %s13, 1
    %p104 = scmp.ne.s32.totalorder %s99, %s101
    %p105 = scmp.eq.s32.totalorder %s13, 0
    %p106 = por %p104, %p105
    %p107 = scmp.ne.s32.totalorder %s99, %s101
    %p108 = scmp.eq.s32.totalorder %s18, 1
    %p109 = por %p107, %p108
    %p110 = scmp.ne.s32.totalorder %s101, %s102
    %p111 = scmp.eq.s32.totalorder %s18, 0
    %p112 = por %p110, %p111
    %p113 = scmp.ne.s32.totalorder %s101, %s102
    %p114 = scmp.eq.s32.totalorder %s19, 1
    %p115 = por %p113, %p114
    %p117 = scmp.ne.s32.totalorder %s102, %s116
    %p118 = scmp.eq.s32.totalorder %s19, 0
    %p119 = por %p117, %p118
    %s121 = sadd.s32 %s120, 1
    %p124 = scmp.eq.s32.totalorder %s13, 1
    %p125 = scmp.ne.s32.totalorder %s120, %s122
    %p126 = scmp.eq.s32.totalorder %s13, 0
    %p127 = por %p125, %p126
    %p128 = scmp.ne.s32.totalorder %s120, %s122
    %p129 = scmp.eq.s32.totalorder %s18, 1
    %p130 = por %p128, %p129
    %p131 = scmp.ne.s32.totalorder %s122, %s123
    %p132 = scmp.eq.s32.totalorder %s18, 0
    %p133 = por %p131, %p132
    %p134 = scmp.ne.s32.totalorder %s122, %s123
    %p135 = scmp.eq.s32.totalorder %s19, 1
    %p136 = por %p134, %p135
    %p138 = scmp.ne.s32.totalorder %s123, %s137
    %p139 = scmp.eq.s32.totalorder %s19, 0
    %p140 = por %p138, %p139
    %s142 = sadd.s32 %s141, 1
    %p145 = scmp.eq.s32.totalorder %s13, 1
    %p146 = scmp.ne.s32.totalorder %s141, %s143
    %p147 = scmp.eq.s32.totalorder %s13, 0
    %p148 = por %p146, %p147
    %p149 = scmp.ne.s32.totalorder %s141, %s143
    %p150 = scmp.eq.s32.totalorder %s18, 1
    %p151 = por %p149, %p150
    %p152 = scmp.ne.s32.totalorder %s143, %s144
    %p153 = scmp.eq.s32.totalorder %s18, 0
    %p154 = por %p152, %p153
    %p155 = scmp.ne.s32.totalorder %s143, %s144
    %p156 = scmp.eq.s32.totalorder %s19, 1
    %p157 = por %p155, %p156
    %p159 = scmp.ne.s32.totalorder %s144, %s158
    %p160 = scmp.eq.s32.totalorder %s19, 0
    %p161 = por %p159, %p160
    %s163 = sadd.s32 %s162, 1
    %p166 = scmp.eq.s32.totalorder %s13, 1
    %p167 = scmp.ne.s32.totalorder %s162, %s164
    %p168 = scmp.eq.s32.totalorder %s13, 0
    %p169 = por %p167, %p168
    %p170 = scmp.ne.s32.totalorder %s162, %s164
    %p171 = scmp.eq.s32.totalorder %s18, 1
    %p172 = por %p170, %p171
    %p173 = scmp.ne.s32.totalorder %s164, %s165
    %p174 = scmp.eq.s32.totalorder %s18, 0
    %p175 = por %p173, %p174
    %p176 = scmp.ne.s32.totalorder %s164, %s165
    %p177 = scmp.eq.s32.totalorder %s19, 1
    %p178 = por %p176, %p177
    %p180 = scmp.ne.s32.totalorder %s165, %s179
    %p181 = scmp.eq.s32.totalorder %s19, 0
    %p182 = por %p180, %p181
    %s183 = ssub.s32 %s13, %s20
    %p184 = scmp.eq.s32.totalorder %s183, 0
    %s186 = sadd.s32 %s185, 1
    %s187 = scalar_select %p184, %s185, %s186
    %p190 = pneg %p184
    %p191 = scmp.eq.s32.totalorder %s13, 1
    %p192 = por %p190, %p191
    %p193 = scmp.ne.s32.totalorder %s185, %s188
    %p194 = scmp.eq.s32.totalorder %s13, 0
    %p195 = por %p193, %p194
    %p196 = scmp.ne.s32.totalorder %s185, %s188
    %p197 = scmp.eq.s32.totalorder %s18, 1
    %p198 = por %p196, %p197
    %p199 = scmp.ne.s32.totalorder %s188, %s189
    %p200 = scmp.eq.s32.totalorder %s18, 0
    %p201 = por %p199, %p200
    %p202 = scmp.ne.s32.totalorder %s188, %s189
    %p203 = scmp.eq.s32.totalorder %s19, 1
    %p204 = por %p202, %p203
    %p206 = scmp.ne.s32.totalorder %s189, %s205
    %p207 = scmp.eq.s32.totalorder %s19, 0
    %p208 = por %p206, %p207
    %p209 = scmp.le.s32.totalorder 1, %s13
    %p210 = scmp.lt.s32.totalorder %s13, 3
    %p211 = pnand %p209, %p210
    %p212 = pneg %p211
    // Predicated region
    $region9: #{axial_up_forward.5} parent=5 // pred_check
      _
    $region10: #{axial_up_forward.5} parent=5 // pred_check_branch
      %214 = sbr.rel (%p211) target = $region12
    $region11: #{axial_up_forward.5} parent=5 // pred_region
      %s215 = ssub.s32 %s13, 1
      // Predicated region
      $region13: #{axial_up_forward.5} parent=11 // pred_check
        %p216 = pneg %p112
      $region14: #{axial_up_forward.5} parent=11 // pred_check_branch
        %218 = sbr.rel (%p216) target = $region16
      $region15: #{axial_up_forward.5} parent=11 // pred_region
        _
      $region16: #{axial_up_forward.5} parent=11 // pred_fallthru
        _
      // Predicated region
      $region17: #{axial_up_forward.5} parent=11 // pred_check
        %p219 = pneg %p133
      $region18: #{axial_up_forward.5} parent=11 // pred_check_branch
        %221 = sbr.rel (%p219) target = $region20
      $region19: #{axial_up_forward.5} parent=11 // pred_region
        _
      $region20: #{axial_up_forward.5} parent=11 // pred_fallthru
        _
      // Predicated region
      $region21: #{axial_up_forward.5} parent=11 // pred_check
        %p222 = pneg %p154
      $region22: #{axial_up_forward.5} parent=11 // pred_check_branch
        %224 = sbr.rel (%p222) target = $region24
      $region23: #{axial_up_forward.5} parent=11 // pred_region
        _
      $region24: #{axial_up_forward.5} parent=11 // pred_fallthru
        _
      // Predicated region
      $region25: #{axial_up_forward.5} parent=11 // pred_check
        %p225 = pneg %p175
      $region26: #{axial_up_forward.5} parent=11 // pred_check_branch
        %227 = sbr.rel (%p225) target = $region28
      $region27: #{axial_up_forward.5} parent=11 // pred_region
        _
      $region28: #{axial_up_forward.5} parent=11 // pred_fallthru
        _
    $region12: #{axial_up_forward.5} parent=5 // pred_fallthru
      _
    %p228 = scmp.lt.s32.totalorder %s13, 2
    // Predicated region
    $region29: #{axial_up_forward.5} parent=5 // pred_check
      %p229 = pneg %p228
    $region30: #{axial_up_forward.5} parent=5 // pred_check_branch
      %231 = sbr.rel (%p229) target = $region32
    $region31: #{axial_up_forward.5} parent=5 // pred_region
      // Predicated region
      $region33: #{axial_up_forward.5} parent=31 // pred_check
        %p232 = pneg %p33
      $region34: #{axial_up_forward.5} parent=31 // pred_check_branch
        %234 = sbr.rel (%p232) target = $region36
      $region35: #{axial_up_forward.5} parent=31 // pred_region
        %s235 = smul.u32 32, %s13
        %p236 = scmp.lt.s32.totalorder %s235, 63
        %s237 = scalar_select %p236, %s235, 63
        %s238 = smul.addr %s237, 8
        %s239 = scalar_lea.vmem %s0, %s238
        %s240 = smul.u32 32, %s13
      $region36: #{axial_up_forward.5} parent=31 // pred_fallthru
        _
      // Predicated region
      $region37: #{axial_up_forward.5} parent=31 // pred_check
        %p241 = pneg %p59
      $region38: #{axial_up_forward.5} parent=31 // pred_check_branch
        %243 = sbr.rel (%p241) target = $region40
      $region39: #{axial_up_forward.5} parent=31 // pred_region
        %s244 = smul.u32 32, %s13
        %p245 = scmp.lt.s32.totalorder %s244, 63
        %s246 = scalar_select %p245, %s244, 63
        %s247 = smul.addr %s246, 8
        %s248 = scalar_lea.vmem %s1, %s247
        %s249 = smul.u32 32, %s13
      $region40: #{axial_up_forward.5} parent=31 // pred_fallthru
        _
      // Predicated region
      $region41: #{axial_up_forward.5} parent=31 // pred_check
        %p250 = pneg %p85
      $region42: #{axial_up_forward.5} parent=31 // pred_check_branch
        %252 = sbr.rel (%p250) target = $region44
      $region43: #{axial_up_forward.5} parent=31 // pred_region
        %s253 = smul.u32 32, %s13
        %p254 = scmp.lt.s32.totalorder %s253, 63
        %s255 = scalar_select %p254, %s253, 63
        %s256 = smul.addr %s255, 8
        %s257 = scalar_lea.vmem %s2, %s256
        %s258 = smul.u32 32, %s13
      $region44: #{axial_up_forward.5} parent=31 // pred_fallthru
        _
    $region32: #{axial_up_forward.5} parent=5 // pred_fallthru
      _
    %p259 = scmp.le.s32.totalorder 1, %s13
    %p260 = scmp.lt.s32.totalorder %s13, 3
    %p261 = pnand %p259, %p260
    %p262 = pneg %p261
    // Predicated region
    $region45: #{axial_up_forward.5} parent=5 // pred_check
      _
    $region46: #{axial_up_forward.5} parent=5 // pred_check_branch
      %264 = sbr.rel (%p261) target = $region48
    $region47: #{axial_up_forward.5} parent=5 // pred_region
      %s265 = ssub.s32 %s13, 1
      %s266 = smul.u32 32, %s18
      %p267 = scmp.lt.s32.totalorder %s266, 63
      %s268 = scalar_select %p267, %s266, 63
      %s269 = smul.addr %s268, 8
      %s270 = scalar_lea.vmem %s0, %s269
      %p271 = pneg %p39
      %p272 = pneg %p36
      %s273 = smul.u32 32, %s18
      %p274 = scmp.lt.s32.totalorder %s273, 63
      %s275 = scalar_select %p274, %s273, 63
      %s276 = smul.addr %s275, 8
      %s277 = scalar_lea.vmem %s1, %s276
      %p278 = pneg %p65
      %p279 = pneg %p62
      %s280 = smul.u32 32, %s18
      %p281 = scmp.lt.s32.totalorder %s280, 63
      %s282 = scalar_select %p281, %s280, 63
      %s283 = smul.addr %s282, 8
      %s284 = scalar_lea.vmem %s2, %s283
      %p285 = pneg %p91
      %p286 = pneg %p88
      %p287 = pneg %p112
      %p288 = pneg %p109
      %p289 = pneg %p133
      %p290 = pneg %p130
      %p291 = pneg %p154
      %p292 = pneg %p151
      %p293 = pneg %p175
      %p294 = pneg %p172
      %p295 = pneg %p201
      %p296 = pneg %p198
      %s297 = smul.u32 32, %s18
      %p298 = scmp.lt.s32.totalorder %s297, 63
      %s299 = scalar_select %p298, %s297, 63
      %s300 = smul.addr %s299, 8
      %s301 = scalar_lea.vmem %s7, %s300
      %s302 = smul.u32 32, %s18
      %p303 = scmp.lt.s32.totalorder %s302, 63
      %s304 = scalar_select %p303, %s302, 63
      %s305 = smul.addr %s304, 8
      %s306 = scalar_lea.vmem %s0, %s305
      %s307 = smul.u32 32, %s18
      %s308 = smul.u32 32, %s18
      %p309 = scmp.lt.s32.totalorder %s308, 63
      %s310 = scalar_select %p309, %s308, 63
      %s311 = smul.addr %s310, 8
      %s312 = scalar_lea.vmem %s1, %s311
      %s313 = smul.u32 32, %s18
      %s314 = smul.u32 32, %s18
      %p315 = scmp.lt.s32.totalorder %s314, 63
      %s316 = scalar_select %p315, %s314, 63
      %s317 = smul.addr %s316, 8
      %s318 = scalar_lea.vmem %s2, %s317
      %s319 = smul.u32 32, %s18
      %s320 = smul.u32 32, %s18
      %p321 = scmp.lt.s32.totalorder %s320, 63
      %s322 = scalar_select %p321, %s320, 63
      %s323 = smul.addr %s322, 8
      %s324 = scalar_lea.vmem %s7, %s323
      %s325 = smul.u32 32, %s18
      %v327 = vld [vmem:[%s306] sm:$0xff]
      %v328 = vld [vmem:[%s306 + $0x8] sm:$0xff]
      %v329 = vld [vmem:[%s306 + $0x10] sm:$0xff]
      %v330 = vld [vmem:[%s306 + $0x18] sm:$0xff]
      %v331 = vld [vmem:[%s306 + $0x20] sm:$0xff]
      %v332 = vld [vmem:[%s306 + $0x28] sm:$0xff]
      %v333 = vld [vmem:[%s306 + $0x30] sm:$0xff]
      %v334 = vld [vmem:[%s306 + $0x38] sm:$0xff]
      %v335 = vld [vmem:[%s306 + $0x40] sm:$0xff]
      %v336 = vld [vmem:[%s306 + $0x48] sm:$0xff]
      %v337 = vld [vmem:[%s306 + $0x50] sm:$0xff]
      %v338 = vld [vmem:[%s306 + $0x58] sm:$0xff]
      %v339 = vld [vmem:[%s306 + $0x60] sm:$0xff]
      %v340 = vld [vmem:[%s306 + $0x68] sm:$0xff]
      %v341 = vld [vmem:[%s306 + $0x70] sm:$0xff]
      %v342 = vld [vmem:[%s306 + $0x78] sm:$0xff]
      %v343 = vld [vmem:[%s306 + $0x80] sm:$0xff]
      %v344 = vld [vmem:[%s306 + $0x88] sm:$0xff]
      %v345 = vld [vmem:[%s306 + $0x90] sm:$0xff]
      %v346 = vld [vmem:[%s306 + $0x98] sm:$0xff]
      %v347 = vld [vmem:[%s306 + $0xa0] sm:$0xff]
      %v348 = vld [vmem:[%s306 + $0xa8] sm:$0xff]
      %v349 = vld [vmem:[%s306 + $0xb0] sm:$0xff]
      %v350 = vld [vmem:[%s306 + $0xb8] sm:$0xff]
      %v351 = vld [vmem:[%s306 + $0xc0] sm:$0xff]
      %v352 = vld [vmem:[%s306 + $0xc8] sm:$0xff]
      %v353 = vld [vmem:[%s306 + $0xd0] sm:$0xff]
      %v354 = vld [vmem:[%s306 + $0xd8] sm:$0xff]
      %v355 = vld [vmem:[%s306 + $0xe0] sm:$0xff]
      %v356 = vld [vmem:[%s306 + $0xe8] sm:$0xff]
      %v357 = vld [vmem:[%s306 + $0xf0] sm:$0xff]
      %v358 = vld [vmem:[%s306 + $0xf8] sm:$0xff]
      %v359 = vmax.f32 %v327, 0.0
      %v360 = vmax.f32 %v328, 0.0
      %v361 = vmax.f32 %v329, 0.0
      %v362 = vmax.f32 %v330, 0.0
      %v363 = vmax.f32 %v331, 0.0
      %v364 = vmax.f32 %v332, 0.0
      %v365 = vmax.f32 %v333, 0.0
      %v366 = vmax.f32 %v334, 0.0
      %v367 = vmax.f32 %v335, 0.0
      %v368 = vmax.f32 %v336, 0.0
      %v369 = vmax.f32 %v337, 0.0
      %v370 = vmax.f32 %v338, 0.0
      %v371 = vmax.f32 %v339, 0.0
      %v372 = vmax.f32 %v340, 0.0
      %v373 = vmax.f32 %v341, 0.0
      %v374 = vmax.f32 %v342, 0.0
      %v375 = vmax.f32 %v343, 0.0
      %v376 = vmax.f32 %v344, 0.0
      %v377 = vmax.f32 %v345, 0.0
      %v378 = vmax.f32 %v346, 0.0
      %v379 = vmax.f32 %v347, 0.0
      %v380 = vmax.f32 %v348, 0.0
      %v381 = vmax.f32 %v349, 0.0
      %v382 = vmax.f32 %v350, 0.0
      %v383 = vmax.f32 %v351, 0.0
      %v384 = vmax.f32 %v352, 0.0
      %v385 = vmax.f32 %v353, 0.0
      %v386 = vmax.f32 %v354, 0.0
      %v387 = vmax.f32 %v355, 0.0
      %v388 = vmax.f32 %v356, 0.0
      %v389 = vmax.f32 %v357, 0.0
      %v390 = vmax.f32 %v358, 0.0
      %v391 = vpack.c.bf16 %v360, %v359
      %v392 = vpack.c.bf16 %v362, %v361
      %v393 = vpack.c.bf16 %v364, %v363
      %v394 = vpack.c.bf16 %v366, %v365
      %v395 = vpack.c.bf16 %v368, %v367
      %v396 = vpack.c.bf16 %v370, %v369
      %v397 = vpack.c.bf16 %v372, %v371
      %v398 = vpack.c.bf16 %v374, %v373
      %v399 = vpack.c.bf16 %v376, %v375
      %v400 = vpack.c.bf16 %v378, %v377
      %v401 = vpack.c.bf16 %v380, %v379
      %v402 = vpack.c.bf16 %v382, %v381
      %v403 = vpack.c.bf16 %v384, %v383
      %v404 = vpack.c.bf16 %v386, %v385
      %v405 = vpack.c.bf16 %v388, %v387
      %v406 = vpack.c.bf16 %v390, %v389
      %v407 = vld [vmem:[%s3] sm:$0xf]
      %v408 = vld [vmem:[%s3 + $0x4] sm:$0xf]
      %v409 = vld [vmem:[%s3 + $0x8] sm:$0xf]
      %v410 = vld [vmem:[%s3 + $0xc] sm:$0xf]
      %v411 = vld [vmem:[%s312] sm:$0xff]
      %v412 = vld [vmem:[%s312 + $0x8] sm:$0xff]
      %v413 = vld [vmem:[%s312 + $0x10] sm:$0xff]
      %v414 = vld [vmem:[%s312 + $0x18] sm:$0xff]
      %v415 = vld [vmem:[%s312 + $0x20] sm:$0xff]
      %v416 = vld [vmem:[%s312 + $0x28] sm:$0xff]
      %v417 = vld [vmem:[%s312 + $0x30] sm:$0xff]
      %v418 = vld [vmem:[%s312 + $0x38] sm:$0xff]
      %v419 = vld [vmem:[%s312 + $0x40] sm:$0xff]
      %v420 = vld [vmem:[%s312 + $0x48] sm:$0xff]
      %v421 = vld [vmem:[%s312 + $0x50] sm:$0xff]
      %v422 = vld [vmem:[%s312 + $0x58] sm:$0xff]
      %v423 = vld [vmem:[%s312 + $0x60] sm:$0xff]
      %v424 = vld [vmem:[%s312 + $0x68] sm:$0xff]
      %v425 = vld [vmem:[%s312 + $0x70] sm:$0xff]
      %v426 = vld [vmem:[%s312 + $0x78] sm:$0xff]
      %v427 = vld [vmem:[%s312 + $0x80] sm:$0xff]
      %v428 = vld [vmem:[%s312 + $0x88] sm:$0xff]
      %v429 = vld [vmem:[%s312 + $0x90] sm:$0xff]
      %v430 = vld [vmem:[%s312 + $0x98] sm:$0xff]
      %v431 = vld [vmem:[%s312 + $0xa0] sm:$0xff]
      %v432 = vld [vmem:[%s312 + $0xa8] sm:$0xff]
      %v433 = vld [vmem:[%s312 + $0xb0] sm:$0xff]
      %v434 = vld [vmem:[%s312 + $0xb8] sm:$0xff]
      %v435 = vld [vmem:[%s312 + $0xc0] sm:$0xff]
      %v436 = vld [vmem:[%s312 + $0xc8] sm:$0xff]
      %v437 = vld [vmem:[%s312 + $0xd0] sm:$0xff]
      %v438 = vld [vmem:[%s312 + $0xd8] sm:$0xff]
      %v439 = vld [vmem:[%s312 + $0xe0] sm:$0xff]
      %v440 = vld [vmem:[%s312 + $0xe8] sm:$0xff]
      %v441 = vld [vmem:[%s312 + $0xf0] sm:$0xff]
      %v442 = vld [vmem:[%s312 + $0xf8] sm:$0xff]
      %v443 = vpack.c.bf16 %v412, %v411
      %v444 = vpack.c.bf16 %v414, %v413
      %v445 = vpack.c.bf16 %v416, %v415
      %v446 = vpack.c.bf16 %v418, %v417
      %v447 = vpack.c.bf16 %v420, %v419
      %v448 = vpack.c.bf16 %v422, %v421
      %v449 = vpack.c.bf16 %v424, %v423
      %v450 = vpack.c.bf16 %v426, %v425
      %v451 = vpack.c.bf16 %v428, %v427
      %v452 = vpack.c.bf16 %v430, %v429
      %v453 = vpack.c.bf16 %v432, %v431
      %v454 = vpack.c.bf16 %v434, %v433
      %v455 = vpack.c.bf16 %v436, %v435
      %v456 = vpack.c.bf16 %v438, %v437
      %v457 = vpack.c.bf16 %v440, %v439
      %v458 = vpack.c.bf16 %v442, %v441
      %v459 = vld [vmem:[%s4] sm:$0xf]
      %v460 = vld [vmem:[%s4 + $0x4] sm:$0xf]
      %v461 = vld [vmem:[%s4 + $0x8] sm:$0xf]
      %v462 = vld [vmem:[%s4 + $0xc] sm:$0xf]
      %v467 = vunpack.c.l.b16 %v459
      %v468 = vunpack.c.l.b16 %v460
      %v469 = vunpack.c.l.b16 %v461
      %v470 = vunpack.c.l.b16 %v462
      %v471 = vpack.c.b16 %v468, %v467
      %v472 = vpack.c.b16 %v470, %v469
      %vm475 = vcmask 261120
      %v477 = vsel %vm475, %v443, 0
      %v480 = vsel %vm475, %v444, 0
      %v483 = vsel %vm475, %v445, 0
      %v486 = vsel %vm475, %v446, 0
      %v489 = vsel %vm475, %v447, 0
      %v492 = vsel %vm475, %v448, 0
      %v495 = vsel %vm475, %v449, 0
      %v498 = vsel %vm475, %v450, 0
      %v501 = vsel %vm475, %v451, 0
      %v504 = vsel %vm475, %v452, 0
      %v507 = vsel %vm475, %v453, 0
      %v510 = vsel %vm475, %v454, 0
      %v513 = vsel %vm475, %v455, 0
      %v516 = vsel %vm475, %v456, 0
      %v519 = vsel %vm475, %v457, 0
      %v522 = vsel %vm475, %v458, 0
      %524 = vmatprep.subr.bf16.mxu0 0
      %525 = vmatpush1.bf16.msra.mxu0 0
      %526 = vmatprep.subr.bf16.mxu0 0
      %527 = vmatpush1.bf16.msra.mxu0 0
      %528 = vmatprep.subr.bf16.mxu0 0
      %529 = vmatpush1.bf16.msra.mxu0 0
      %530 = vmatprep.subr.bf16.mxu0 0
      %531 = vmatpush1.bf16.msra.mxu0 0
      %532 = vmatprep.subr.bf16.mxu0 0
      %533 = vmatpush1.bf16.msra.mxu0 0
      %534 = vmatprep.subr.bf16.mxu0 0
      %535 = vmatpush1.bf16.msra.mxu0 0
      %536 = vmatprep.subr.bf16.mxu0 0
      %537 = vmatpush1.bf16.msra.mxu0 %v472
      %538 = vmatprep.subr.bf16.mxu0 0
      %539 = vmatpush1.bf16.msra.mxu0 %v471
      %540 = vmatprep.subr.bf16.mxu0 0
      %541 = vmatpush2.bf16.msra.mxu0 0
      %542 = vmatprep.subr.bf16.mxu0 0
      %543 = vmatpush2.bf16.msra.mxu0 0
      %544 = vmatprep.subr.bf16.mxu0 0
      %545 = vmatpush2.bf16.msra.mxu0 0
      %546 = vmatprep.subr.bf16.mxu0 0
      %547 = vmatpush2.bf16.msra.mxu0 0
      %548 = vmatprep.subr.bf16.mxu0 0
      %549 = vmatpush2.bf16.msra.mxu0 0
      %550 = vmatprep.subr.bf16.mxu0 0
      %551 = vmatpush2.bf16.msra.mxu0 0
      %552 = vmatprep.subr.bf16.mxu0 0
      %553 = vmatpush2.bf16.msra.mxu0 0
      %554 = vmatprep.subr.bf16.mxu0 0
      %555 = vmatpush2.bf16.msra.mxu0 0
      %556 = vmatprep.mubr.bf16.mxu0 0
      %557 = vmatmul.mubr.bf16.gmra.mxu0 %v477
      %v558 = vpop.f32.mrf.mxu0
      %v559 = vadd.f32 0.0, %v558
      %v560 = vpop.f32.mrf.mxu0
      %v561 = vpop.f32.mrf.mxu0
      %v562 = vadd.f32 0.0, %v561
      %v563 = vpop.f32.mrf.mxu0
      %564 = vmatprep.mubr.bf16.mxu0 0
      %565 = vmatmul.mubr.bf16.gmra.mxu0 %v480
      %v566 = vpop.f32.mrf.mxu0
      %v567 = vadd.f32 0.0, %v566
      %v568 = vpop.f32.mrf.mxu0
      %v569 = vpop.f32.mrf.mxu0
      %v570 = vadd.f32 0.0, %v569
      %v571 = vpop.f32.mrf.mxu0
      %572 = vmatprep.mubr.bf16.mxu0 0
      %573 = vmatmul.mubr.bf16.gmra.mxu0 %v483
      %v574 = vpop.f32.mrf.mxu0
      %v575 = vadd.f32 0.0, %v574
      %v576 = vpop.f32.mrf.mxu0
      %v577 = vpop.f32.mrf.mxu0
      %v578 = vadd.f32 0.0, %v577
      %v579 = vpop.f32.mrf.mxu0
      %580 = vmatprep.mubr.bf16.mxu0 0
      %581 = vmatmul.mubr.bf16.gmra.mxu0 %v486
      %v582 = vpop.f32.mrf.mxu0
      %v583 = vadd.f32 0.0, %v582
      %v584 = vpop.f32.mrf.mxu0
      %v585 = vpop.f32.mrf.mxu0
      %v586 = vadd.f32 0.0, %v585
      %v587 = vpop.f32.mrf.mxu0
      %588 = vmatprep.mubr.bf16.mxu0 0
      %589 = vmatmul.mubr.bf16.gmra.mxu0 %v489
      %v590 = vpop.f32.mrf.mxu0
      %v591 = vadd.f32 0.0, %v590
      %v592 = vpop.f32.mrf.mxu0
      %v593 = vpop.f32.mrf.mxu0
      %v594 = vadd.f32 0.0, %v593
      %v595 = vpop.f32.mrf.mxu0
      %596 = vmatprep.mubr.bf16.mxu0 0
      %597 = vmatmul.mubr.bf16.gmra.mxu0 %v492
      %v598 = vpop.f32.mrf.mxu0
      %v599 = vadd.f32 0.0, %v598
      %v600 = vpop.f32.mrf.mxu0
      %v601 = vpop.f32.mrf.mxu0
      %v602 = vadd.f32 0.0, %v601
      %v603 = vpop.f32.mrf.mxu0
      %604 = vmatprep.mubr.bf16.mxu0 0
      %605 = vmatmul.mubr.bf16.gmra.mxu0 %v495
      %v606 = vpop.f32.mrf.mxu0
      %v607 = vadd.f32 0.0, %v606
      %v608 = vpop.f32.mrf.mxu0
      %v609 = vpop.f32.mrf.mxu0
      %v610 = vadd.f32 0.0, %v609
      %v611 = vpop.f32.mrf.mxu0
      %612 = vmatprep.mubr.bf16.mxu0 0
      %613 = vmatmul.mubr.bf16.gmra.mxu0 %v498
      %v614 = vpop.f32.mrf.mxu0
      %v615 = vadd.f32 0.0, %v614
      %v616 = vpop.f32.mrf.mxu0
      %v617 = vpop.f32.mrf.mxu0
      %v618 = vadd.f32 0.0, %v617
      %v619 = vpop.f32.mrf.mxu0
      %620 = vmatprep.mubr.bf16.mxu0 0
      %621 = vmatmul.mubr.bf16.gmra.mxu0 %v501
      %v622 = vpop.f32.mrf.mxu0
      %v623 = vadd.f32 0.0, %v622
      %v624 = vpop.f32.mrf.mxu0
      %v625 = vpop.f32.mrf.mxu0
      %v626 = vadd.f32 0.0, %v625
      %v627 = vpop.f32.mrf.mxu0
      %628 = vmatprep.mubr.bf16.mxu0 0
      %629 = vmatmul.mubr.bf16.gmra.mxu0 %v504
      %v630 = vpop.f32.mrf.mxu0
      %v631 = vadd.f32 0.0, %v630
      %v632 = vpop.f32.mrf.mxu0
      %v633 = vpop.f32.mrf.mxu0
      %v634 = vadd.f32 0.0, %v633
      %v635 = vpop.f32.mrf.mxu0
      %636 = vmatprep.mubr.bf16.mxu0 0
      %637 = vmatmul.mubr.bf16.gmra.mxu0 %v507
      %v638 = vpop.f32.mrf.mxu0
      %v639 = vadd.f32 0.0, %v638
      %v640 = vpop.f32.mrf.mxu0
      %v641 = vpop.f32.mrf.mxu0
      %v642 = vadd.f32 0.0, %v641
      %v643 = vpop.f32.mrf.mxu0
      %644 = vmatprep.mubr.bf16.mxu0 0
      %645 = vmatmul.mubr.bf16.gmra.mxu0 %v510
      %v646 = vpop.f32.mrf.mxu0
      %v647 = vadd.f32 0.0, %v646
      %v648 = vpop.f32.mrf.mxu0
      %v649 = vpop.f32.mrf.mxu0
      %v650 = vadd.f32 0.0, %v649
      %v651 = vpop.f32.mrf.mxu0
      %652 = vmatprep.mubr.bf16.mxu0 0
      %653 = vmatmul.mubr.bf16.gmra.mxu0 %v513
      %v654 = vpop.f32.mrf.mxu0
      %v655 = vadd.f32 0.0, %v654
      %v656 = vpop.f32.mrf.mxu0
      %v657 = vpop.f32.mrf.mxu0
      %v658 = vadd.f32 0.0, %v657
      %v659 = vpop.f32.mrf.mxu0
      %660 = vmatprep.mubr.bf16.mxu0 0
      %661 = vmatmul.mubr.bf16.gmra.mxu0 %v516
      %v662 = vpop.f32.mrf.mxu0
      %v663 = vadd.f32 0.0, %v662
      %v664 = vpop.f32.mrf.mxu0
      %v665 = vpop.f32.mrf.mxu0
      %v666 = vadd.f32 0.0, %v665
      %v667 = vpop.f32.mrf.mxu0
      %668 = vmatprep.mubr.bf16.mxu0 0
      %669 = vmatmul.mubr.bf16.gmra.mxu0 %v519
      %v670 = vpop.f32.mrf.mxu0
      %v671 = vadd.f32 0.0, %v670
      %v672 = vpop.f32.mrf.mxu0
      %v673 = vpop.f32.mrf.mxu0
      %v674 = vadd.f32 0.0, %v673
      %v675 = vpop.f32.mrf.mxu0
      %676 = vmatprep.mubr.bf16.mxu0 0
      %677 = vmatmul.mubr.bf16.gmra.mxu0 %v522
      %v678 = vpop.f32.mrf.mxu0
      %v679 = vadd.f32 0.0, %v678
      %v680 = vpop.f32.mrf.mxu0
      %v681 = vpop.f32.mrf.mxu0
      %v682 = vadd.f32 0.0, %v681
      %v683 = vpop.f32.mrf.mxu0
      %684 = vdwg.mxu0
      %v689 = vunpack.c.l.b16 %v407
      %v690 = vunpack.c.l.b16 %v408
      %v691 = vunpack.c.l.b16 %v409
      %v692 = vunpack.c.l.b16 %v410
      %v693 = vpack.c.b16 %v690, %v689
      %v694 = vpack.c.b16 %v692, %v691
      %v698 = vsel %vm475, %v391, 0
      %v701 = vsel %vm475, %v392, 0
      %v704 = vsel %vm475, %v393, 0
      %v707 = vsel %vm475, %v394, 0
      %v710 = vsel %vm475, %v395, 0
      %v713 = vsel %vm475, %v396, 0
      %v716 = vsel %vm475, %v397, 0
      %v719 = vsel %vm475, %v398, 0
      %v722 = vsel %vm475, %v399, 0
      %v725 = vsel %vm475, %v400, 0
      %v728 = vsel %vm475, %v401, 0
      %v731 = vsel %vm475, %v402, 0
      %v734 = vsel %vm475, %v403, 0
      %v737 = vsel %vm475, %v404, 0
      %v740 = vsel %vm475, %v405, 0
      %v743 = vsel %vm475, %v406, 0
      %745 = vmatprep.subr.bf16.mxu0 0
      %746 = vmatpush1.bf16.msra.mxu0 0
      %747 = vmatprep.subr.bf16.mxu0 0
      %748 = vmatpush1.bf16.msra.mxu0 0
      %749 = vmatprep.subr.bf16.mxu0 0
      %750 = vmatpush1.bf16.msra.mxu0 0
      %751 = vmatprep.subr.bf16.mxu0 0
      %752 = vmatpush1.bf16.msra.mxu0 0
      %753 = vmatprep.subr.bf16.mxu0 0
      %754 = vmatpush1.bf16.msra.mxu0 0
      %755 = vmatprep.subr.bf16.mxu0 0
      %756 = vmatpush1.bf16.msra.mxu0 0
      %757 = vmatprep.subr.bf16.mxu0 0
      %758 = vmatpush1.bf16.msra.mxu0 %v694
      %759 = vmatprep.subr.bf16.mxu0 0
      %760 = vmatpush1.bf16.msra.mxu0 %v693
      %761 = vmatprep.subr.bf16.mxu0 0
      %762 = vmatpush2.bf16.msra.mxu0 0
      %763 = vmatprep.subr.bf16.mxu0 0
      %764 = vmatpush2.bf16.msra.mxu0 0
      %765 = vmatprep.subr.bf16.mxu0 0
      %766 = vmatpush2.bf16.msra.mxu0 0
      %767 = vmatprep.subr.bf16.mxu0 0
      %768 = vmatpush2.bf16.msra.mxu0 0
      %769 = vmatprep.subr.bf16.mxu0 0
      %770 = vmatpush2.bf16.msra.mxu0 0
      %771 = vmatprep.subr.bf16.mxu0 0
      %772 = vmatpush2.bf16.msra.mxu0 0
      %773 = vmatprep.subr.bf16.mxu0 0
      %774 = vmatpush2.bf16.msra.mxu0 0
      %775 = vmatprep.subr.bf16.mxu0 0
      %776 = vmatpush2.bf16.msra.mxu0 0
      %777 = vmatprep.mubr.bf16.mxu0 0
      %778 = vmatmul.mubr.bf16.gmra.mxu0 %v698
      %v779 = vpop.f32.mrf.mxu0
      %v780 = vadd.f32 %v559, %v779
      %v781 = vpop.f32.mrf.mxu0
      %v782 = vpop.f32.mrf.mxu0
      %v783 = vadd.f32 %v562, %v782
      %v784 = vpop.f32.mrf.mxu0
      %785 = vmatprep.mubr.bf16.mxu0 0
      %786 = vmatmul.mubr.bf16.gmra.mxu0 %v701
      %v787 = vpop.f32.mrf.mxu0
      %v788 = vadd.f32 %v567, %v787
      %v789 = vpop.f32.mrf.mxu0
      %v790 = vpop.f32.mrf.mxu0
      %v791 = vadd.f32 %v570, %v790
      %v792 = vpop.f32.mrf.mxu0
      %793 = vmatprep.mubr.bf16.mxu0 0
      %794 = vmatmul.mubr.bf16.gmra.mxu0 %v704
      %v795 = vpop.f32.mrf.mxu0
      %v796 = vadd.f32 %v575, %v795
      %v797 = vpop.f32.mrf.mxu0
      %v798 = vpop.f32.mrf.mxu0
      %v799 = vadd.f32 %v578, %v798
      %v800 = vpop.f32.mrf.mxu0
      %801 = vmatprep.mubr.bf16.mxu0 0
      %802 = vmatmul.mubr.bf16.gmra.mxu0 %v707
      %v803 = vpop.f32.mrf.mxu0
      %v804 = vadd.f32 %v583, %v803
      %v805 = vpop.f32.mrf.mxu0
      %v806 = vpop.f32.mrf.mxu0
      %v807 = vadd.f32 %v586, %v806
      %v808 = vpop.f32.mrf.mxu0
      %809 = vmatprep.mubr.bf16.mxu0 0
      %810 = vmatmul.mubr.bf16.gmra.mxu0 %v710
      %v811 = vpop.f32.mrf.mxu0
      %v812 = vadd.f32 %v591, %v811
      %v813 = vpop.f32.mrf.mxu0
      %v814 = vpop.f32.mrf.mxu0
      %v815 = vadd.f32 %v594, %v814
      %v816 = vpop.f32.mrf.mxu0
      %817 = vmatprep.mubr.bf16.mxu0 0
      %818 = vmatmul.mubr.bf16.gmra.mxu0 %v713
      %v819 = vpop.f32.mrf.mxu0
      %v820 = vadd.f32 %v599, %v819
      %v821 = vpop.f32.mrf.mxu0
      %v822 = vpop.f32.mrf.mxu0
      %v823 = vadd.f32 %v602, %v822
      %v824 = vpop.f32.mrf.mxu0
      %825 = vmatprep.mubr.bf16.mxu0 0
      %826 = vmatmul.mubr.bf16.gmra.mxu0 %v716
      %v827 = vpop.f32.mrf.mxu0
      %v828 = vadd.f32 %v607, %v827
      %v829 = vpop.f32.mrf.mxu0
      %v830 = vpop.f32.mrf.mxu0
      %v831 = vadd.f32 %v610, %v830
      %v832 = vpop.f32.mrf.mxu0
      %833 = vmatprep.mubr.bf16.mxu0 0
      %834 = vmatmul.mubr.bf16.gmra.mxu0 %v719
      %v835 = vpop.f32.mrf.mxu0
      %v836 = vadd.f32 %v615, %v835
      %v837 = vpop.f32.mrf.mxu0
      %v838 = vpop.f32.mrf.mxu0
      %v839 = vadd.f32 %v618, %v838
      %v840 = vpop.f32.mrf.mxu0
      %841 = vmatprep.mubr.bf16.mxu0 0
      %842 = vmatmul.mubr.bf16.gmra.mxu0 %v722
      %v843 = vpop.f32.mrf.mxu0
      %v844 = vadd.f32 %v623, %v843
      %v845 = vpop.f32.mrf.mxu0
      %v846 = vpop.f32.mrf.mxu0
      %v847 = vadd.f32 %v626, %v846
      %v848 = vpop.f32.mrf.mxu0
      %849 = vmatprep.mubr.bf16.mxu0 0
      %850 = vmatmul.mubr.bf16.gmra.mxu0 %v725
      %v851 = vpop.f32.mrf.mxu0
      %v852 = vadd.f32 %v631, %v851
      %v853 = vpop.f32.mrf.mxu0
      %v854 = vpop.f32.mrf.mxu0
      %v855 = vadd.f32 %v634, %v854
      %v856 = vpop.f32.mrf.mxu0
      %857 = vmatprep.mubr.bf16.mxu0 0
      %858 = vmatmul.mubr.bf16.gmra.mxu0 %v728
      %v859 = vpop.f32.mrf.mxu0
      %v860 = vadd.f32 %v639, %v859
      %v861 = vpop.f32.mrf.mxu0
      %v862 = vpop.f32.mrf.mxu0
      %v863 = vadd.f32 %v642, %v862
      %v864 = vpop.f32.mrf.mxu0
      %865 = vmatprep.mubr.bf16.mxu0 0
      %866 = vmatmul.mubr.bf16.gmra.mxu0 %v731
      %v867 = vpop.f32.mrf.mxu0
      %v868 = vadd.f32 %v647, %v867
      %v869 = vpop.f32.mrf.mxu0
      %v870 = vpop.f32.mrf.mxu0
      %v871 = vadd.f32 %v650, %v870
      %v872 = vpop.f32.mrf.mxu0
      %873 = vmatprep.mubr.bf16.mxu0 0
      %874 = vmatmul.mubr.bf16.gmra.mxu0 %v734
      %v875 = vpop.f32.mrf.mxu0
      %v876 = vadd.f32 %v655, %v875
      %v877 = vpop.f32.mrf.mxu0
      %v878 = vpop.f32.mrf.mxu0
      %v879 = vadd.f32 %v658, %v878
      %v880 = vpop.f32.mrf.mxu0
      %881 = vmatprep.mubr.bf16.mxu0 0
      %882 = vmatmul.mubr.bf16.gmra.mxu0 %v737
      %v883 = vpop.f32.mrf.mxu0
      %v884 = vadd.f32 %v663, %v883
      %v885 = vpop.f32.mrf.mxu0
      %v886 = vpop.f32.mrf.mxu0
      %v887 = vadd.f32 %v666, %v886
      %v888 = vpop.f32.mrf.mxu0
      %889 = vmatprep.mubr.bf16.mxu0 0
      %890 = vmatmul.mubr.bf16.gmra.mxu0 %v740
      %v891 = vpop.f32.mrf.mxu0
      %v892 = vadd.f32 %v671, %v891
      %v893 = vpop.f32.mrf.mxu0
      %v894 = vpop.f32.mrf.mxu0
      %v895 = vadd.f32 %v674, %v894
      %v896 = vpop.f32.mrf.mxu0
      %897 = vmatprep.mubr.bf16.mxu0 0
      %898 = vmatmul.mubr.bf16.gmra.mxu0 %v743
      %v899 = vpop.f32.mrf.mxu0
      %v900 = vadd.f32 %v679, %v899
      %v901 = vpop.f32.mrf.mxu0
      %v902 = vpop.f32.mrf.mxu0
      %v903 = vadd.f32 %v682, %v902
      %v904 = vpop.f32.mrf.mxu0
      %905 = vdwg.mxu0
      %v906 = vld [vmem:[%s318] sm:$0xff]
      %v907 = vld [vmem:[%s318 + $0x8] sm:$0xff]
      %v908 = vld [vmem:[%s318 + $0x10] sm:$0xff]
      %v909 = vld [vmem:[%s318 + $0x18] sm:$0xff]
      %v910 = vld [vmem:[%s318 + $0x20] sm:$0xff]
      %v911 = vld [vmem:[%s318 + $0x28] sm:$0xff]
      %v912 = vld [vmem:[%s318 + $0x30] sm:$0xff]
      %v913 = vld [vmem:[%s318 + $0x38] sm:$0xff]
      %v914 = vld [vmem:[%s318 + $0x40] sm:$0xff]
      %v915 = vld [vmem:[%s318 + $0x48] sm:$0xff]
      %v916 = vld [vmem:[%s318 + $0x50] sm:$0xff]
      %v917 = vld [vmem:[%s318 + $0x58] sm:$0xff]
      %v918 = vld [vmem:[%s318 + $0x60] sm:$0xff]
      %v919 = vld [vmem:[%s318 + $0x68] sm:$0xff]
      %v920 = vld [vmem:[%s318 + $0x70] sm:$0xff]
      %v921 = vld [vmem:[%s318 + $0x78] sm:$0xff]
      %v922 = vld [vmem:[%s318 + $0x80] sm:$0xff]
      %v923 = vld [vmem:[%s318 + $0x88] sm:$0xff]
      %v924 = vld [vmem:[%s318 + $0x90] sm:$0xff]
      %v925 = vld [vmem:[%s318 + $0x98] sm:$0xff]
      %v926 = vld [vmem:[%s318 + $0xa0] sm:$0xff]
      %v927 = vld [vmem:[%s318 + $0xa8] sm:$0xff]
      %v928 = vld [vmem:[%s318 + $0xb0] sm:$0xff]
      %v929 = vld [vmem:[%s318 + $0xb8] sm:$0xff]
      %v930 = vld [vmem:[%s318 + $0xc0] sm:$0xff]
      %v931 = vld [vmem:[%s318 + $0xc8] sm:$0xff]
      %v932 = vld [vmem:[%s318 + $0xd0] sm:$0xff]
      %v933 = vld [vmem:[%s318 + $0xd8] sm:$0xff]
      %v934 = vld [vmem:[%s318 + $0xe0] sm:$0xff]
      %v935 = vld [vmem:[%s318 + $0xe8] sm:$0xff]
      %v936 = vld [vmem:[%s318 + $0xf0] sm:$0xff]
      %v937 = vld [vmem:[%s318 + $0xf8] sm:$0xff]
      %v938 = vpack.c.bf16 %v907, %v906
      %v939 = vpack.c.bf16 %v909, %v908
      %v940 = vpack.c.bf16 %v911, %v910
      %v941 = vpack.c.bf16 %v913, %v912
      %v942 = vpack.c.bf16 %v915, %v914
      %v943 = vpack.c.bf16 %v917, %v916
      %v944 = vpack.c.bf16 %v919, %v918
      %v945 = vpack.c.bf16 %v921, %v920
      %v946 = vpack.c.bf16 %v923, %v922
      %v947 = vpack.c.bf16 %v925, %v924
      %v948 = vpack.c.bf16 %v927, %v926
      %v949 = vpack.c.bf16 %v929, %v928
      %v950 = vpack.c.bf16 %v931, %v930
      %v951 = vpack.c.bf16 %v933, %v932
      %v952 = vpack.c.bf16 %v935, %v934
      %v953 = vpack.c.bf16 %v937, %v936
      %v954 = vld [vmem:[%s5] sm:$0xf]
      %v955 = vld [vmem:[%s5 + $0x4] sm:$0xf]
      %v958 = vunpack.c.l.b16 %v954
      %v959 = vunpack.c.l.b16 %v955
      %v960 = vpack.c.b16 %v959, %v958
      %vm962 = vcmask 130048
      %v964 = vsel %vm962, %v938, 0
      %v967 = vsel %vm962, %v939, 0
      %v970 = vsel %vm962, %v940, 0
      %v973 = vsel %vm962, %v941, 0
      %v976 = vsel %vm962, %v942, 0
      %v979 = vsel %vm962, %v943, 0
      %v982 = vsel %vm962, %v944, 0
      %v985 = vsel %vm962, %v945, 0
      %v988 = vsel %vm962, %v946, 0
      %v991 = vsel %vm962, %v947, 0
      %v994 = vsel %vm962, %v948, 0
      %v997 = vsel %vm962, %v949, 0
      %v1000 = vsel %vm962, %v950, 0
      %v1003 = vsel %vm962, %v951, 0
      %v1006 = vsel %vm962, %v952, 0
      %v1009 = vsel %vm962, %v953, 0
      %1011 = vmatprep.subr.bf16.mxu0 0
      %1012 = vmatpush1.bf16.msra.mxu0 0
      %1013 = vmatprep.subr.bf16.mxu0 0
      %1014 = vmatpush1.bf16.msra.mxu0 0
      %1015 = vmatprep.subr.bf16.mxu0 0
      %1016 = vmatpush1.bf16.msra.mxu0 0
      %1017 = vmatprep.subr.bf16.mxu0 0
      %1018 = vmatpush1.bf16.msra.mxu0 0
      %1019 = vmatprep.subr.bf16.mxu0 0
      %1020 = vmatpush1.bf16.msra.mxu0 0
      %1021 = vmatprep.subr.bf16.mxu0 0
      %1022 = vmatpush1.bf16.msra.mxu0 0
      %1023 = vmatprep.subr.bf16.mxu0 0
      %1024 = vmatpush1.bf16.msra.mxu0 0
      %1025 = vmatprep.subr.bf16.mxu0 0
      %1026 = vmatpush1.bf16.msra.mxu0 %v960
      %1027 = vmatprep.subr.bf16.mxu0 0
      %1028 = vmatpush2.bf16.msra.mxu0 0
      %1029 = vmatprep.subr.bf16.mxu0 0
      %1030 = vmatpush2.bf16.msra.mxu0 0
      %1031 = vmatprep.subr.bf16.mxu0 0
      %1032 = vmatpush2.bf16.msra.mxu0 0
      %1033 = vmatprep.subr.bf16.mxu0 0
      %1034 = vmatpush2.bf16.msra.mxu0 0
      %1035 = vmatprep.subr.bf16.mxu0 0
      %1036 = vmatpush2.bf16.msra.mxu0 0
      %1037 = vmatprep.subr.bf16.mxu0 0
      %1038 = vmatpush2.bf16.msra.mxu0 0
      %1039 = vmatprep.subr.bf16.mxu0 0
      %1040 = vmatpush2.bf16.msra.mxu0 0
      %1041 = vmatprep.subr.bf16.mxu0 0
      %1042 = vmatpush2.bf16.msra.mxu0 0
      %1043 = vmatprep.mubr.bf16.mxu0 0
      %1044 = vmatmul.mubr.bf16.gmra.mxu0 %v964
      %v1045 = vpop.f32.mrf.mxu0
      %v1046 = vadd.f32 0.0, %v1045
      %v1047 = vpop.f32.mrf.mxu0
      %v1048 = vpop.f32.mrf.mxu0
      %v1049 = vadd.f32 0.0, %v1048
      %v1050 = vpop.f32.mrf.mxu0
      %1051 = vmatprep.mubr.bf16.mxu0 0
      %1052 = vmatmul.mubr.bf16.gmra.mxu0 %v967
      %v1053 = vpop.f32.mrf.mxu0
      %v1054 = vadd.f32 0.0, %v1053
      %v1055 = vpop.f32.mrf.mxu0
      %v1056 = vpop.f32.mrf.mxu0
      %v1057 = vadd.f32 0.0, %v1056
      %v1058 = vpop.f32.mrf.mxu0
      %1059 = vmatprep.mubr.bf16.mxu0 0
      %1060 = vmatmul.mubr.bf16.gmra.mxu0 %v970
      %v1061 = vpop.f32.mrf.mxu0
      %v1062 = vadd.f32 0.0, %v1061
      %v1063 = vpop.f32.mrf.mxu0
      %v1064 = vpop.f32.mrf.mxu0
      %v1065 = vadd.f32 0.0, %v1064
      %v1066 = vpop.f32.mrf.mxu0
      %1067 = vmatprep.mubr.bf16.mxu0 0
      %1068 = vmatmul.mubr.bf16.gmra.mxu0 %v973
      %v1069 = vpop.f32.mrf.mxu0
      %v1070 = vadd.f32 0.0, %v1069
      %v1071 = vpop.f32.mrf.mxu0
      %v1072 = vpop.f32.mrf.mxu0
      %v1073 = vadd.f32 0.0, %v1072
      %v1074 = vpop.f32.mrf.mxu0
      %1075 = vmatprep.mubr.bf16.mxu0 0
      %1076 = vmatmul.mubr.bf16.gmra.mxu0 %v976
      %v1077 = vpop.f32.mrf.mxu0
      %v1078 = vadd.f32 0.0, %v1077
      %v1079 = vpop.f32.mrf.mxu0
      %v1080 = vpop.f32.mrf.mxu0
      %v1081 = vadd.f32 0.0, %v1080
      %v1082 = vpop.f32.mrf.mxu0
      %1083 = vmatprep.mubr.bf16.mxu0 0
      %1084 = vmatmul.mubr.bf16.gmra.mxu0 %v979
      %v1085 = vpop.f32.mrf.mxu0
      %v1086 = vadd.f32 0.0, %v1085
      %v1087 = vpop.f32.mrf.mxu0
      %v1088 = vpop.f32.mrf.mxu0
      %v1089 = vadd.f32 0.0, %v1088
      %v1090 = vpop.f32.mrf.mxu0
      %1091 = vmatprep.mubr.bf16.mxu0 0
      %1092 = vmatmul.mubr.bf16.gmra.mxu0 %v982
      %v1093 = vpop.f32.mrf.mxu0
      %v1094 = vadd.f32 0.0, %v1093
      %v1095 = vpop.f32.mrf.mxu0
      %v1096 = vpop.f32.mrf.mxu0
      %v1097 = vadd.f32 0.0, %v1096
      %v1098 = vpop.f32.mrf.mxu0
      %1099 = vmatprep.mubr.bf16.mxu0 0
      %1100 = vmatmul.mubr.bf16.gmra.mxu0 %v985
      %v1101 = vpop.f32.mrf.mxu0
      %v1102 = vadd.f32 0.0, %v1101
      %v1103 = vpop.f32.mrf.mxu0
      %v1104 = vpop.f32.mrf.mxu0
      %v1105 = vadd.f32 0.0, %v1104
      %v1106 = vpop.f32.mrf.mxu0
      %1107 = vmatprep.mubr.bf16.mxu0 0
      %1108 = vmatmul.mubr.bf16.gmra.mxu0 %v988
      %v1109 = vpop.f32.mrf.mxu0
      %v1110 = vadd.f32 0.0, %v1109
      %v1111 = vpop.f32.mrf.mxu0
      %v1112 = vpop.f32.mrf.mxu0
      %v1113 = vadd.f32 0.0, %v1112
      %v1114 = vpop.f32.mrf.mxu0
      %1115 = vmatprep.mubr.bf16.mxu0 0
      %1116 = vmatmul.mubr.bf16.gmra.mxu0 %v991
      %v1117 = vpop.f32.mrf.mxu0
      %v1118 = vadd.f32 0.0, %v1117
      %v1119 = vpop.f32.mrf.mxu0
      %v1120 = vpop.f32.mrf.mxu0
      %v1121 = vadd.f32 0.0, %v1120
      %v1122 = vpop.f32.mrf.mxu0
      %1123 = vmatprep.mubr.bf16.mxu0 0
      %1124 = vmatmul.mubr.bf16.gmra.mxu0 %v994
      %v1125 = vpop.f32.mrf.mxu0
      %v1126 = vadd.f32 0.0, %v1125
      %v1127 = vpop.f32.mrf.mxu0
      %v1128 = vpop.f32.mrf.mxu0
      %v1129 = vadd.f32 0.0, %v1128
      %v1130 = vpop.f32.mrf.mxu0
      %1131 = vmatprep.mubr.bf16.mxu0 0
      %1132 = vmatmul.mubr.bf16.gmra.mxu0 %v997
      %v1133 = vpop.f32.mrf.mxu0
      %v1134 = vadd.f32 0.0, %v1133
      %v1135 = vpop.f32.mrf.mxu0
      %v1136 = vpop.f32.mrf.mxu0
      %v1137 = vadd.f32 0.0, %v1136
      %v1138 = vpop.f32.mrf.mxu0
      %1139 = vmatprep.mubr.bf16.mxu0 0
      %1140 = vmatmul.mubr.bf16.gmra.mxu0 %v1000
      %v1141 = vpop.f32.mrf.mxu0
      %v1142 = vadd.f32 0.0, %v1141
      %v1143 = vpop.f32.mrf.mxu0
      %v1144 = vpop.f32.mrf.mxu0
      %v1145 = vadd.f32 0.0, %v1144
      %v1146 = vpop.f32.mrf.mxu0
      %1147 = vmatprep.mubr.bf16.mxu0 0
      %1148 = vmatmul.mubr.bf16.gmra.mxu0 %v1003
      %v1149 = vpop.f32.mrf.mxu0
      %v1150 = vadd.f32 0.0, %v1149
      %v1151 = vpop.f32.mrf.mxu0
      %v1152 = vpop.f32.mrf.mxu0
      %v1153 = vadd.f32 0.0, %v1152
      %v1154 = vpop.f32.mrf.mxu0
      %1155 = vmatprep.mubr.bf16.mxu0 0
      %1156 = vmatmul.mubr.bf16.gmra.mxu0 %v1006
      %v1157 = vpop.f32.mrf.mxu0
      %v1158 = vadd.f32 0.0, %v1157
      %v1159 = vpop.f32.mrf.mxu0
      %v1160 = vpop.f32.mrf.mxu0
      %v1161 = vadd.f32 0.0, %v1160
      %v1162 = vpop.f32.mrf.mxu0
      %1163 = vmatprep.mubr.bf16.mxu0 0
      %1164 = vmatmul.mubr.bf16.gmra.mxu0 %v1009
      %v1165 = vpop.f32.mrf.mxu0
      %v1166 = vadd.f32 0.0, %v1165
      %v1167 = vpop.f32.mrf.mxu0
      %v1168 = vpop.f32.mrf.mxu0
      %v1169 = vadd.f32 0.0, %v1168
      %v1170 = vpop.f32.mrf.mxu0
      %1171 = vdwg.mxu0
      %v1172 = vadd.f32 %v780, %v1046
      %v1173 = vadd.f32 %v783, %v1049
      %v1174 = vadd.f32 %v788, %v1054
      %v1175 = vadd.f32 %v791, %v1057
      %v1176 = vadd.f32 %v796, %v1062
      %v1177 = vadd.f32 %v799, %v1065
      %v1178 = vadd.f32 %v804, %v1070
      %v1179 = vadd.f32 %v807, %v1073
      %v1180 = vadd.f32 %v812, %v1078
      %v1181 = vadd.f32 %v815, %v1081
      %v1182 = vadd.f32 %v820, %v1086
      %v1183 = vadd.f32 %v823, %v1089
      %v1184 = vadd.f32 %v828, %v1094
      %v1185 = vadd.f32 %v831, %v1097
      %v1186 = vadd.f32 %v836, %v1102
      %v1187 = vadd.f32 %v839, %v1105
      %v1188 = vadd.f32 %v844, %v1110
      %v1189 = vadd.f32 %v847, %v1113
      %v1190 = vadd.f32 %v852, %v1118
      %v1191 = vadd.f32 %v855, %v1121
      %v1192 = vadd.f32 %v860, %v1126
      %v1193 = vadd.f32 %v863, %v1129
      %v1194 = vadd.f32 %v868, %v1134
      %v1195 = vadd.f32 %v871, %v1137
      %v1196 = vadd.f32 %v876, %v1142
      %v1197 = vadd.f32 %v879, %v1145
      %v1198 = vadd.f32 %v884, %v1150
      %v1199 = vadd.f32 %v887, %v1153
      %v1200 = vadd.f32 %v892, %v1158
      %v1201 = vadd.f32 %v895, %v1161
      %v1202 = vadd.f32 %v900, %v1166
      %v1203 = vadd.f32 %v903, %v1169
      %v1204 = vld [vmem:[%s6] sm:$0x1]
      %v1206 = vlaneseq
      %v1207 = vshrl.u32 %v1206, 7
      %v1208 = vsub.s32 0, %v1207
      %v1209 = vrot.slane %v1204, %v1208
      %v1211 = vadd.f32 %v1172, %v1209
      %v1212 = vadd.f32 %v1173, %v1209
      %v1213 = vadd.f32 %v1174, %v1209
      %v1214 = vadd.f32 %v1175, %v1209
      %v1215 = vadd.f32 %v1176, %v1209
      %v1216 = vadd.f32 %v1177, %v1209
      %v1217 = vadd.f32 %v1178, %v1209
      %v1218 = vadd.f32 %v1179, %v1209
      %v1219 = vadd.f32 %v1180, %v1209
      %v1220 = vadd.f32 %v1181, %v1209
      %v1221 = vadd.f32 %v1182, %v1209
      %v1222 = vadd.f32 %v1183, %v1209
      %v1223 = vadd.f32 %v1184, %v1209
      %v1224 = vadd.f32 %v1185, %v1209
      %v1225 = vadd.f32 %v1186, %v1209
      %v1226 = vadd.f32 %v1187, %v1209
      %v1227 = vadd.f32 %v1188, %v1209
      %v1228 = vadd.f32 %v1189, %v1209
      %v1229 = vadd.f32 %v1190, %v1209
      %v1230 = vadd.f32 %v1191, %v1209
      %v1231 = vadd.f32 %v1192, %v1209
      %v1232 = vadd.f32 %v1193, %v1209
      %v1233 = vadd.f32 %v1194, %v1209
      %v1234 = vadd.f32 %v1195, %v1209
      %v1235 = vadd.f32 %v1196, %v1209
      %v1236 = vadd.f32 %v1197, %v1209
      %v1237 = vadd.f32 %v1198, %v1209
      %v1238 = vadd.f32 %v1199, %v1209
      %v1239 = vadd.f32 %v1200, %v1209
      %v1240 = vadd.f32 %v1201, %v1209
      %v1241 = vadd.f32 %v1202, %v1209
      %v1242 = vadd.f32 %v1203, %v1209
      %v1243 = vmax.f32 %v1211, 0.0
      %v1244 = vmax.f32 %v1212, 0.0
      %v1245 = vmax.f32 %v1213, 0.0
      %v1246 = vmax.f32 %v1214, 0.0
      %v1247 = vmax.f32 %v1215, 0.0
      %v1248 = vmax.f32 %v1216, 0.0
      %v1249 = vmax.f32 %v1217, 0.0
      %v1250 = vmax.f32 %v1218, 0.0
      %v1251 = vmax.f32 %v1219, 0.0
      %v1252 = vmax.f32 %v1220, 0.0
      %v1253 = vmax.f32 %v1221, 0.0
      %v1254 = vmax.f32 %v1222, 0.0
      %v1255 = vmax.f32 %v1223, 0.0
      %v1256 = vmax.f32 %v1224, 0.0
      %v1257 = vmax.f32 %v1225, 0.0
      %v1258 = vmax.f32 %v1226, 0.0
      %v1259 = vmax.f32 %v1227, 0.0
      %v1260 = vmax.f32 %v1228, 0.0
      %v1261 = vmax.f32 %v1229, 0.0
      %v1262 = vmax.f32 %v1230, 0.0
      %v1263 = vmax.f32 %v1231, 0.0
      %v1264 = vmax.f32 %v1232, 0.0
      %v1265 = vmax.f32 %v1233, 0.0
      %v1266 = vmax.f32 %v1234, 0.0
      %v1267 = vmax.f32 %v1235, 0.0
      %v1268 = vmax.f32 %v1236, 0.0
      %v1269 = vmax.f32 %v1237, 0.0
      %v1270 = vmax.f32 %v1238, 0.0
      %v1271 = vmax.f32 %v1239, 0.0
      %v1272 = vmax.f32 %v1240, 0.0
      %v1273 = vmax.f32 %v1241, 0.0
      %v1274 = vmax.f32 %v1242, 0.0
      %1275 = vst [vmem:[%s324] sm:$0xff] %v1243
      %1276 = vst [vmem:[%s324 + $0x8] sm:$0xff] %v1244
      %1277 = vst [vmem:[%s324 + $0x10] sm:$0xff] %v1245
      %1278 = vst [vmem:[%s324 + $0x18] sm:$0xff] %v1246
      %1279 = vst [vmem:[%s324 + $0x20] sm:$0xff] %v1247
      %1280 = vst [vmem:[%s324 + $0x28] sm:$0xff] %v1248
      %1281 = vst [vmem:[%s324 + $0x30] sm:$0xff] %v1249
      %1282 = vst [vmem:[%s324 + $0x38] sm:$0xff] %v1250
      %1283 = vst [vmem:[%s324 + $0x40] sm:$0xff] %v1251
      %1284 = vst [vmem:[%s324 + $0x48] sm:$0xff] %v1252
      %1285 = vst [vmem:[%s324 + $0x50] sm:$0xff] %v1253
      %1286 = vst [vmem:[%s324 + $0x58] sm:$0xff] %v1254
      %1287 = vst [vmem:[%s324 + $0x60] sm:$0xff] %v1255
      %1288 = vst [vmem:[%s324 + $0x68] sm:$0xff] %v1256
      %1289 = vst [vmem:[%s324 + $0x70] sm:$0xff] %v1257
      %1290 = vst [vmem:[%s324 + $0x78] sm:$0xff] %v1258
      %1291 = vst [vmem:[%s324 + $0x80] sm:$0xff] %v1259
      %1292 = vst [vmem:[%s324 + $0x88] sm:$0xff] %v1260
      %1293 = vst [vmem:[%s324 + $0x90] sm:$0xff] %v1261
      %1294 = vst [vmem:[%s324 + $0x98] sm:$0xff] %v1262
      %1295 = vst [vmem:[%s324 + $0xa0] sm:$0xff] %v1263
      %1296 = vst [vmem:[%s324 + $0xa8] sm:$0xff] %v1264
      %1297 = vst [vmem:[%s324 + $0xb0] sm:$0xff] %v1265
      %1298 = vst [vmem:[%s324 + $0xb8] sm:$0xff] %v1266
      %1299 = vst [vmem:[%s324 + $0xc0] sm:$0xff] %v1267
      %1300 = vst [vmem:[%s324 + $0xc8] sm:$0xff] %v1268
      %1301 = vst [vmem:[%s324 + $0xd0] sm:$0xff] %v1269
      %1302 = vst [vmem:[%s324 + $0xd8] sm:$0xff] %v1270
      %1303 = vst [vmem:[%s324 + $0xe0] sm:$0xff] %v1271
      %1304 = vst [vmem:[%s324 + $0xe8] sm:$0xff] %v1272
      %1305 = vst [vmem:[%s324 + $0xf0] sm:$0xff] %v1273
      %1306 = vst [vmem:[%s324 + $0xf8] sm:$0xff] %v1274
      %s1307 = smul.u32 32, %s18
      %p1308 = scmp.lt.s32.totalorder %s1307, 63
      %s1309 = scalar_select %p1308, %s1307, 63
      %s1310 = smul.addr %s1309, 8
      %s1311 = scalar_lea.vmem %s7, %s1310
      // Predicated region
      $region49: #{axial_up_forward.5} parent=47 // pred_check
        %p1312 = pneg %p198
      $region50: #{axial_up_forward.5} parent=47 // pred_check_branch
        %1314 = sbr.rel (%p1312) target = $region52
      $region51: #{axial_up_forward.5} parent=47 // pred_region
        %s1315 = smul.u32 32, %s18
      $region52: #{axial_up_forward.5} parent=47 // pred_fallthru
        _
    $region48: #{axial_up_forward.5} parent=5 // pred_fallthru
      _
    %p1316 = scmp.le.s32.totalorder 2, %s13
    // Predicated region
    $region53: #{axial_up_forward.5} parent=5 // pred_check
      %p1317 = pneg %p1316
    $region54: #{axial_up_forward.5} parent=5 // pred_check_branch
      %1319 = sbr.rel (%p1317) target = $region56
    $region55: #{axial_up_forward.5} parent=5 // pred_region
      %s1320 = ssub.s32 %s13, 2
      // Predicated region
      $region57: #{axial_up_forward.5} parent=55 // pred_check
        %p1321 = pneg %p204
      $region58: #{axial_up_forward.5} parent=55 // pred_check_branch
        %1323 = sbr.rel (%p1321) target = $region60
      $region59: #{axial_up_forward.5} parent=55 // pred_region
        %s1324 = smul.u32 32, %s19
        %p1325 = scmp.lt.s32.totalorder %s1324, 63
        %s1326 = scalar_select %p1325, %s1324, 63
        %s1327 = smul.addr %s1326, 8
        %s1328 = scalar_lea.vmem %s7, %s1327
      $region60: #{axial_up_forward.5} parent=55 // pred_fallthru
        _
    $region56: #{axial_up_forward.5} parent=5 // pred_fallthru
      _
  $region6: #{axial_up_forward.5} parent=0 // loop_footer
    %s17 = sadd.s32 1, %s13
  $region7: #{axial_up_forward.5} parent=0 // loop_footer_branch
    %12 = sbr.rel target = $region3
  $region8: #{axial_up_forward.5} parent=0 // loop_exit
    _

// kernel: axial_up_forward.4
$region0: #{axial_up_forward.4}
  #allocation0 [shape = 'u32[]', space=smem, size = 0x4, offset = 0x4, fixed_abs, tag = 'smem constant byte address 0x4 - core index']
  #allocation1 [shape = 'u32[144,128]{1,0:T(1,128)}', space=vmem, size = 0x12000, scoped, tag = 'internal scratch']
  %s0 = inlined_call_operand.vmem [shape: f32[32,16,32], index: 0, kind: input, shape index: {}]
  %s1 = inlined_call_operand.vmem [shape: bf16[32,96], index: 1, kind: input, shape index: {}]
  %s2 = inlined_call_operand.vmem [shape: bf16[32,32], index: 2, kind: input, shape index: {}]
  %s3 = inlined_call_operand.vmem [shape: f32[1,32], index: 3, kind: input, shape index: {}]
  %s4 = inlined_call_operand.vmem [shape: f32[32,16,32], index: 4, kind: output, shape index: {}]
  %s5 = sld [smem:[#allocation0]]
  $region49: #{axial_up_forward.4} parent=0
    _
  %s7 = ssub.s32 1, %s5
  %s8 = scalar_select 0, %s7, %s5
  loop: start=0, step=1, limit=4
  $region2: #{axial_up_forward.4} parent=0 // loop_pre_header
    _
  $region3: #{axial_up_forward.4} parent=0 // loop_header
    %s10 = sphi 0, %s14
    %p11 = scmp.ge.s32.totalorder %s10, 4
    %s20 = sphi 0, %s22
    %s23 = sphi 0, %s20
    %s24 = sphi 0, %s23
    %s40 = sphi 0, %s24
    %s44 = sphi 0, %s44
    %s46 = sphi 0, %s44
    %s47 = sphi 0, %s46
    %s61 = sphi 0, %s47
    %s65 = sphi 0, %s65
    %s67 = sphi 0, %s65
    %s68 = sphi 0, %s67
    %s82 = sphi 0, %s68
    %s86 = sphi 0, %s86
    %s88 = sphi 0, %s86
    %s89 = sphi 0, %s88
    %s103 = sphi 0, %s89
    %s109 = sphi 0, %s111
    %s112 = sphi 0, %s109
    %s113 = sphi 0, %s112
    %s129 = sphi 0, %s113
  $region4: #{axial_up_forward.4} parent=0 // loop_header_branch
    %13 = sbr.rel (%p11) target = $region8
  $region5: #{axial_up_forward.4} parent=0 // loop_body
    %s15 = ssub.s32 %s10, 1
    %s16 = ssub.s32 %s10, 2
    %s17 = sadd.s32 %s10, 1
    %s18 = ssub.s32 %s10, %s17
    %p19 = scmp.eq.s32.totalorder %s18, 0
    %s21 = sadd.s32 %s20, 1
    %s22 = scalar_select %p19, %s20, %s21
    %p25 = pneg %p19
    %p26 = scmp.eq.s32.totalorder %s10, 1
    %p27 = por %p25, %p26
    %p28 = scmp.ne.s32.totalorder %s20, %s23
    %p29 = scmp.eq.s32.totalorder %s10, 0
    %p30 = por %p28, %p29
    %p31 = scmp.ne.s32.totalorder %s20, %s23
    %p32 = scmp.eq.s32.totalorder %s15, 1
    %p33 = por %p31, %p32
    %p34 = scmp.ne.s32.totalorder %s23, %s24
    %p35 = scmp.eq.s32.totalorder %s15, 0
    %p36 = por %p34, %p35
    %p37 = scmp.ne.s32.totalorder %s23, %s24
    %p38 = scmp.eq.s32.totalorder %s16, 1
    %p39 = por %p37, %p38
    %p41 = scmp.ne.s32.totalorder %s24, %s40
    %p42 = scmp.eq.s32.totalorder %s16, 0
    %p43 = por %p41, %p42
    %s45 = sadd.s32 %s44, 1
    %p48 = scmp.eq.s32.totalorder %s10, 1
    %p49 = scmp.ne.s32.totalorder %s44, %s46
    %p50 = scmp.eq.s32.totalorder %s10, 0
    %p51 = por %p49, %p50
    %p52 = scmp.ne.s32.totalorder %s44, %s46
    %p53 = scmp.eq.s32.totalorder %s15, 1
    %p54 = por %p52, %p53
    %p55 = scmp.ne.s32.totalorder %s46, %s47
    %p56 = scmp.eq.s32.totalorder %s15, 0
    %p57 = por %p55, %p56
    %p58 = scmp.ne.s32.totalorder %s46, %s47
    %p59 = scmp.eq.s32.totalorder %s16, 1
    %p60 = por %p58, %p59
    %p62 = scmp.ne.s32.totalorder %s47, %s61
    %p63 = scmp.eq.s32.totalorder %s16, 0
    %p64 = por %p62, %p63
    %s66 = sadd.s32 %s65, 1
    %p69 = scmp.eq.s32.totalorder %s10, 1
    %p70 = scmp.ne.s32.totalorder %s65, %s67
    %p71 = scmp.eq.s32.totalorder %s10, 0
    %p72 = por %p70, %p71
    %p73 = scmp.ne.s32.totalorder %s65, %s67
    %p74 = scmp.eq.s32.totalorder %s15, 1
    %p75 = por %p73, %p74
    %p76 = scmp.ne.s32.totalorder %s67, %s68
    %p77 = scmp.eq.s32.totalorder %s15, 0
    %p78 = por %p76, %p77
    %p79 = scmp.ne.s32.totalorder %s67, %s68
    %p80 = scmp.eq.s32.totalorder %s16, 1
    %p81 = por %p79, %p80
    %p83 = scmp.ne.s32.totalorder %s68, %s82
    %p84 = scmp.eq.s32.totalorder %s16, 0
    %p85 = por %p83, %p84
    %s87 = sadd.s32 %s86, 1
    %p90 = scmp.eq.s32.totalorder %s10, 1
    %p91 = scmp.ne.s32.totalorder %s86, %s88
    %p92 = scmp.eq.s32.totalorder %s10, 0
    %p93 = por %p91, %p92
    %p94 = scmp.ne.s32.totalorder %s86, %s88
    %p95 = scmp.eq.s32.totalorder %s15, 1
    %p96 = por %p94, %p95
    %p97 = scmp.ne.s32.totalorder %s88, %s89
    %p98 = scmp.eq.s32.totalorder %s15, 0
    %p99 = por %p97, %p98
    %p100 = scmp.ne.s32.totalorder %s88, %s89
    %p101 = scmp.eq.s32.totalorder %s16, 1
    %p102 = por %p100, %p101
    %p104 = scmp.ne.s32.totalorder %s89, %s103
    %p105 = scmp.eq.s32.totalorder %s16, 0
    %p106 = por %p104, %p105
    %s107 = ssub.s32 %s10, %s17
    %p108 = scmp.eq.s32.totalorder %s107, 0
    %s110 = sadd.s32 %s109, 1
    %s111 = scalar_select %p108, %s109, %s110
    %p114 = pneg %p108
    %p115 = scmp.eq.s32.totalorder %s10, 1
    %p116 = por %p114, %p115
    %p117 = scmp.ne.s32.totalorder %s109, %s112
    %p118 = scmp.eq.s32.totalorder %s10, 0
    %p119 = por %p117, %p118
    %p120 = scmp.ne.s32.totalorder %s109, %s112
    %p121 = scmp.eq.s32.totalorder %s15, 1
    %p122 = por %p120, %p121
    %p123 = scmp.ne.s32.totalorder %s112, %s113
    %p124 = scmp.eq.s32.totalorder %s15, 0
    %p125 = por %p123, %p124
    %p126 = scmp.ne.s32.totalorder %s112, %s113
    %p127 = scmp.eq.s32.totalorder %s16, 1
    %p128 = por %p126, %p127
    %p130 = scmp.ne.s32.totalorder %s113, %s129
    %p131 = scmp.eq.s32.totalorder %s16, 0
    %p132 = por %p130, %p131
    %p133 = scmp.le.s32.totalorder 1, %s10
    %p134 = scmp.lt.s32.totalorder %s10, 3
    %p135 = pnand %p133, %p134
    %p136 = pneg %p135
    // Predicated region
    $region9: #{axial_up_forward.4} parent=5 // pred_check
      _
    $region10: #{axial_up_forward.4} parent=5 // pred_check_branch
      %138 = sbr.rel (%p135) target = $region12
    $region11: #{axial_up_forward.4} parent=5 // pred_region
      %s139 = ssub.s32 %s10, 1
      // Predicated region
      $region13: #{axial_up_forward.4} parent=11 // pred_check
        %p140 = pneg %p57
      $region14: #{axial_up_forward.4} parent=11 // pred_check_branch
        %142 = sbr.rel (%p140) target = $region16
      $region15: #{axial_up_forward.4} parent=11 // pred_region
        _
      $region16: #{axial_up_forward.4} parent=11 // pred_fallthru
        _
      // Predicated region
      $region17: #{axial_up_forward.4} parent=11 // pred_check
        %p143 = pneg %p78
      $region18: #{axial_up_forward.4} parent=11 // pred_check_branch
        %145 = sbr.rel (%p143) target = $region20
      $region19: #{axial_up_forward.4} parent=11 // pred_region
        _
      $region20: #{axial_up_forward.4} parent=11 // pred_fallthru
        _
      // Predicated region
      $region21: #{axial_up_forward.4} parent=11 // pred_check
        %p146 = pneg %p99
      $region22: #{axial_up_forward.4} parent=11 // pred_check_branch
        %148 = sbr.rel (%p146) target = $region24
      $region23: #{axial_up_forward.4} parent=11 // pred_region
        _
      $region24: #{axial_up_forward.4} parent=11 // pred_fallthru
        _
    $region12: #{axial_up_forward.4} parent=5 // pred_fallthru
      _
    %p149 = scmp.lt.s32.totalorder %s10, 2
    // Predicated region
    $region25: #{axial_up_forward.4} parent=5 // pred_check
      %p150 = pneg %p149
    $region26: #{axial_up_forward.4} parent=5 // pred_check_branch
      %152 = sbr.rel (%p150) target = $region28
    $region27: #{axial_up_forward.4} parent=5 // pred_region
      // Predicated region
      $region29: #{axial_up_forward.4} parent=27 // pred_check
        %p153 = pneg %p30
      $region30: #{axial_up_forward.4} parent=27 // pred_check_branch
        %155 = sbr.rel (%p153) target = $region32
      $region31: #{axial_up_forward.4} parent=27 // pred_region
        %s156 = smul.u32 16, %s10
        %p157 = scmp.lt.s32.totalorder %s156, 31
        %s158 = scalar_select %p157, %s156, 31
        %s159 = smul.addr %s158, 2
        %s160 = smul.addr %s159, 8
        %s161 = scalar_lea.vmem %s0, %s160
        %s162 = smul.u32 16, %s10
      $region32: #{axial_up_forward.4} parent=27 // pred_fallthru
        _
    $region28: #{axial_up_forward.4} parent=5 // pred_fallthru
      _
    %p163 = scmp.le.s32.totalorder 1, %s10
    %p164 = scmp.lt.s32.totalorder %s10, 3
    %p165 = pnand %p163, %p164
    %p166 = pneg %p165
    // Predicated region
    $region33: #{axial_up_forward.4} parent=5 // pred_check
      _
    $region34: #{axial_up_forward.4} parent=5 // pred_check_branch
      %168 = sbr.rel (%p165) target = $region36
    $region35: #{axial_up_forward.4} parent=5 // pred_region
      %s169 = ssub.s32 %s10, 1
      %s170 = smul.u32 16, %s15
      %p171 = scmp.lt.s32.totalorder %s170, 31
      %s172 = scalar_select %p171, %s170, 31
      %s173 = smul.addr %s172, 2
      %s174 = smul.addr %s173, 8
      %s175 = scalar_lea.vmem %s0, %s174
      %p176 = pneg %p36
      %p177 = pneg %p33
      %p178 = pneg %p57
      %p179 = pneg %p54
      %p180 = pneg %p78
      %p181 = pneg %p75
      %p182 = pneg %p99
      %p183 = pneg %p96
      %p184 = pneg %p125
      %p185 = pneg %p122
      %s186 = smul.u32 16, %s15
      %p187 = scmp.lt.s32.totalorder %s186, 31
      %s188 = scalar_select %p187, %s186, 31
      %s189 = smul.addr %s188, 2
      %s190 = smul.addr %s189, 8
      %s191 = scalar_lea.vmem %s4, %s190
      %s192 = smul.u32 16, %s15
      %p193 = scmp.lt.s32.totalorder %s192, 31
      %s194 = scalar_select %p193, %s192, 31
      %s195 = smul.addr %s194, 2
      %s196 = smul.addr %s195, 8
      %s197 = scalar_lea.vmem %s0, %s196
      %s198 = smul.u32 16, %s15
      %s199 = smul.u32 16, %s15
      %p200 = scmp.lt.s32.totalorder %s199, 31
      %s201 = scalar_select %p200, %s199, 31
      %s202 = smul.addr %s201, 2
      %s203 = smul.addr %s202, 8
      %s204 = scalar_lea.vmem %s4, %s203
      %s205 = smul.u32 16, %s15
      %v207 = vld [vmem:[%s197] sm:$0xff]
      %v208 = vld [vmem:[%s197 + $0x8] sm:$0xff]
      %v209 = vld [vmem:[%s197 + $0x10] sm:$0xff]
      %v210 = vld [vmem:[%s197 + $0x18] sm:$0xff]
      %v211 = vld [vmem:[%s197 + $0x20] sm:$0xff]
      %v212 = vld [vmem:[%s197 + $0x28] sm:$0xff]
      %v213 = vld [vmem:[%s197 + $0x30] sm:$0xff]
      %v214 = vld [vmem:[%s197 + $0x38] sm:$0xff]
      %v215 = vld [vmem:[%s197 + $0x40] sm:$0xff]
      %v216 = vld [vmem:[%s197 + $0x48] sm:$0xff]
      %v217 = vld [vmem:[%s197 + $0x50] sm:$0xff]
      %v218 = vld [vmem:[%s197 + $0x58] sm:$0xff]
      %v219 = vld [vmem:[%s197 + $0x60] sm:$0xff]
      %v220 = vld [vmem:[%s197 + $0x68] sm:$0xff]
      %v221 = vld [vmem:[%s197 + $0x70] sm:$0xff]
      %v222 = vld [vmem:[%s197 + $0x78] sm:$0xff]
      %v223 = vld [vmem:[%s197 + $0x80] sm:$0xff]
      %v224 = vld [vmem:[%s197 + $0x88] sm:$0xff]
      %v225 = vld [vmem:[%s197 + $0x90] sm:$0xff]
      %v226 = vld [vmem:[%s197 + $0x98] sm:$0xff]
      %v227 = vld [vmem:[%s197 + $0xa0] sm:$0xff]
      %v228 = vld [vmem:[%s197 + $0xa8] sm:$0xff]
      %v229 = vld [vmem:[%s197 + $0xb0] sm:$0xff]
      %v230 = vld [vmem:[%s197 + $0xb8] sm:$0xff]
      %v231 = vld [vmem:[%s197 + $0xc0] sm:$0xff]
      %v232 = vld [vmem:[%s197 + $0xc8] sm:$0xff]
      %v233 = vld [vmem:[%s197 + $0xd0] sm:$0xff]
      %v234 = vld [vmem:[%s197 + $0xd8] sm:$0xff]
      %v235 = vld [vmem:[%s197 + $0xe0] sm:$0xff]
      %v236 = vld [vmem:[%s197 + $0xe8] sm:$0xff]
      %v237 = vld [vmem:[%s197 + $0xf0] sm:$0xff]
      %v238 = vld [vmem:[%s197 + $0xf8] sm:$0xff]
      %v239 = vpack.c.bf16 %v208, %v207
      %v240 = vpack.c.bf16 %v210, %v209
      %v241 = vpack.c.bf16 %v212, %v211
      %v242 = vpack.c.bf16 %v214, %v213
      %v243 = vpack.c.bf16 %v216, %v215
      %v244 = vpack.c.bf16 %v218, %v217
      %v245 = vpack.c.bf16 %v220, %v219
      %v246 = vpack.c.bf16 %v222, %v221
      %v247 = vpack.c.bf16 %v224, %v223
      %v248 = vpack.c.bf16 %v226, %v225
      %v249 = vpack.c.bf16 %v228, %v227
      %v250 = vpack.c.bf16 %v230, %v229
      %v251 = vpack.c.bf16 %v232, %v231
      %v252 = vpack.c.bf16 %v234, %v233
      %v253 = vpack.c.bf16 %v236, %v235
      %v254 = vpack.c.bf16 %v238, %v237
      %v255 = vld [vmem:[%s1] sm:$0xf]
      %v256 = vld [vmem:[%s1 + $0x4] sm:$0xf]
      %v257 = vld [vmem:[%s1 + $0x8] sm:$0xf]
      %v258 = vld [vmem:[%s1 + $0xc] sm:$0xf]
      %v263 = vunpack.c.l.b16 %v255
      %v264 = vunpack.c.l.b16 %v256
      %v265 = vunpack.c.l.b16 %v257
      %v266 = vunpack.c.l.b16 %v258
      %v267 = vpack.c.b16 %v264, %v263
      %v268 = vpack.c.b16 %v266, %v265
      %vm271 = vcmask 261120
      %v273 = vsel %vm271, %v239, 0
      %v276 = vsel %vm271, %v240, 0
      %v279 = vsel %vm271, %v241, 0
      %v282 = vsel %vm271, %v242, 0
      %v285 = vsel %vm271, %v243, 0
      %v288 = vsel %vm271, %v244, 0
      %v291 = vsel %vm271, %v245, 0
      %v294 = vsel %vm271, %v246, 0
      %v297 = vsel %vm271, %v247, 0
      %v300 = vsel %vm271, %v248, 0
      %v303 = vsel %vm271, %v249, 0
      %v306 = vsel %vm271, %v250, 0
      %v309 = vsel %vm271, %v251, 0
      %v312 = vsel %vm271, %v252, 0
      %v315 = vsel %vm271, %v253, 0
      %v318 = vsel %vm271, %v254, 0
      %320 = vmatprep.subr.bf16.mxu0 0
      %321 = vmatpush1.bf16.msra.mxu0 0
      %322 = vmatprep.subr.bf16.mxu0 0
      %323 = vmatpush1.bf16.msra.mxu0 0
      %324 = vmatprep.subr.bf16.mxu0 0
      %325 = vmatpush1.bf16.msra.mxu0 0
      %326 = vmatprep.subr.bf16.mxu0 0
      %327 = vmatpush1.bf16.msra.mxu0 0
      %328 = vmatprep.subr.bf16.mxu0 0
      %329 = vmatpush1.bf16.msra.mxu0 0
      %330 = vmatprep.subr.bf16.mxu0 0
      %331 = vmatpush1.bf16.msra.mxu0 0
      %332 = vmatprep.subr.bf16.mxu0 0
      %333 = vmatpush1.bf16.msra.mxu0 %v268
      %334 = vmatprep.subr.bf16.mxu0 0
      %335 = vmatpush1.bf16.msra.mxu0 %v267
      %336 = vmatprep.subr.bf16.mxu0 0
      %337 = vmatpush2.bf16.msra.mxu0 0
      %338 = vmatprep.subr.bf16.mxu0 0
      %339 = vmatpush2.bf16.msra.mxu0 0
      %340 = vmatprep.subr.bf16.mxu0 0
      %341 = vmatpush2.bf16.msra.mxu0 0
      %342 = vmatprep.subr.bf16.mxu0 0
      %343 = vmatpush2.bf16.msra.mxu0 0
      %344 = vmatprep.subr.bf16.mxu0 0
      %345 = vmatpush2.bf16.msra.mxu0 0
      %346 = vmatprep.subr.bf16.mxu0 0
      %347 = vmatpush2.bf16.msra.mxu0 0
      %348 = vmatprep.subr.bf16.mxu0 0
      %349 = vmatpush2.bf16.msra.mxu0 0
      %350 = vmatprep.subr.bf16.mxu0 0
      %351 = vmatpush2.bf16.msra.mxu0 0
      %352 = vmatprep.mubr.bf16.mxu0 0
      %353 = vmatmul.mubr.bf16.gmra.mxu0 %v273
      %v354 = vpop.f32.mrf.mxu0
      %v355 = vadd.f32 0.0, %v354
      %v356 = vpop.f32.mrf.mxu0
      %v357 = vpop.f32.mrf.mxu0
      %v358 = vadd.f32 0.0, %v357
      %v359 = vpop.f32.mrf.mxu0
      %360 = vmatprep.mubr.bf16.mxu0 0
      %361 = vmatmul.mubr.bf16.gmra.mxu0 %v276
      %v362 = vpop.f32.mrf.mxu0
      %v363 = vadd.f32 0.0, %v362
      %v364 = vpop.f32.mrf.mxu0
      %v365 = vpop.f32.mrf.mxu0
      %v366 = vadd.f32 0.0, %v365
      %v367 = vpop.f32.mrf.mxu0
      %368 = vmatprep.mubr.bf16.mxu0 0
      %369 = vmatmul.mubr.bf16.gmra.mxu0 %v279
      %v370 = vpop.f32.mrf.mxu0
      %v371 = vadd.f32 0.0, %v370
      %v372 = vpop.f32.mrf.mxu0
      %v373 = vpop.f32.mrf.mxu0
      %v374 = vadd.f32 0.0, %v373
      %v375 = vpop.f32.mrf.mxu0
      %376 = vmatprep.mubr.bf16.mxu0 0
      %377 = vmatmul.mubr.bf16.gmra.mxu0 %v282
      %v378 = vpop.f32.mrf.mxu0
      %v379 = vadd.f32 0.0, %v378
      %v380 = vpop.f32.mrf.mxu0
      %v381 = vpop.f32.mrf.mxu0
      %v382 = vadd.f32 0.0, %v381
      %v383 = vpop.f32.mrf.mxu0
      %384 = vmatprep.mubr.bf16.mxu0 0
      %385 = vmatmul.mubr.bf16.gmra.mxu0 %v285
      %v386 = vpop.f32.mrf.mxu0
      %v387 = vadd.f32 0.0, %v386
      %v388 = vpop.f32.mrf.mxu0
      %v389 = vpop.f32.mrf.mxu0
      %v390 = vadd.f32 0.0, %v389
      %v391 = vpop.f32.mrf.mxu0
      %392 = vmatprep.mubr.bf16.mxu0 0
      %393 = vmatmul.mubr.bf16.gmra.mxu0 %v288
      %v394 = vpop.f32.mrf.mxu0
      %v395 = vadd.f32 0.0, %v394
      %v396 = vpop.f32.mrf.mxu0
      %v397 = vpop.f32.mrf.mxu0
      %v398 = vadd.f32 0.0, %v397
      %v399 = vpop.f32.mrf.mxu0
      %400 = vmatprep.mubr.bf16.mxu0 0
      %401 = vmatmul.mubr.bf16.gmra.mxu0 %v291
      %v402 = vpop.f32.mrf.mxu0
      %v403 = vadd.f32 0.0, %v402
      %v404 = vpop.f32.mrf.mxu0
      %v405 = vpop.f32.mrf.mxu0
      %v406 = vadd.f32 0.0, %v405
      %v407 = vpop.f32.mrf.mxu0
      %408 = vmatprep.mubr.bf16.mxu0 0
      %409 = vmatmul.mubr.bf16.gmra.mxu0 %v294
      %v410 = vpop.f32.mrf.mxu0
      %v411 = vadd.f32 0.0, %v410
      %v412 = vpop.f32.mrf.mxu0
      %v413 = vpop.f32.mrf.mxu0
      %v414 = vadd.f32 0.0, %v413
      %v415 = vpop.f32.mrf.mxu0
      %416 = vmatprep.mubr.bf16.mxu0 0
      %417 = vmatmul.mubr.bf16.gmra.mxu0 %v297
      %v418 = vpop.f32.mrf.mxu0
      %v419 = vadd.f32 0.0, %v418
      %v420 = vpop.f32.mrf.mxu0
      %v421 = vpop.f32.mrf.mxu0
      %v422 = vadd.f32 0.0, %v421
      %v423 = vpop.f32.mrf.mxu0
      %424 = vmatprep.mubr.bf16.mxu0 0
      %425 = vmatmul.mubr.bf16.gmra.mxu0 %v300
      %v426 = vpop.f32.mrf.mxu0
      %v427 = vadd.f32 0.0, %v426
      %v428 = vpop.f32.mrf.mxu0
      %v429 = vpop.f32.mrf.mxu0
      %v430 = vadd.f32 0.0, %v429
      %v431 = vpop.f32.mrf.mxu0
      %432 = vmatprep.mubr.bf16.mxu0 0
      %433 = vmatmul.mubr.bf16.gmra.mxu0 %v303
      %v434 = vpop.f32.mrf.mxu0
      %v435 = vadd.f32 0.0, %v434
      %v436 = vpop.f32.mrf.mxu0
      %v437 = vpop.f32.mrf.mxu0
      %v438 = vadd.f32 0.0, %v437
      %v439 = vpop.f32.mrf.mxu0
      %440 = vmatprep.mubr.bf16.mxu0 0
      %441 = vmatmul.mubr.bf16.gmra.mxu0 %v306
      %v442 = vpop.f32.mrf.mxu0
      %v443 = vadd.f32 0.0, %v442
      %v444 = vpop.f32.mrf.mxu0
      %v445 = vpop.f32.mrf.mxu0
      %v446 = vadd.f32 0.0, %v445
      %v447 = vpop.f32.mrf.mxu0
      %448 = vmatprep.mubr.bf16.mxu0 0
      %449 = vmatmul.mubr.bf16.gmra.mxu0 %v309
      %v450 = vpop.f32.mrf.mxu0
      %v451 = vadd.f32 0.0, %v450
      %v452 = vpop.f32.mrf.mxu0
      %v453 = vpop.f32.mrf.mxu0
      %v454 = vadd.f32 0.0, %v453
      %v455 = vpop.f32.mrf.mxu0
      %456 = vmatprep.mubr.bf16.mxu0 0
      %457 = vmatmul.mubr.bf16.gmra.mxu0 %v312
      %v458 = vpop.f32.mrf.mxu0
      %v459 = vadd.f32 0.0, %v458
      %v460 = vpop.f32.mrf.mxu0
      %v461 = vpop.f32.mrf.mxu0
      %v462 = vadd.f32 0.0, %v461
      %v463 = vpop.f32.mrf.mxu0
      %464 = vmatprep.mubr.bf16.mxu0 0
      %465 = vmatmul.mubr.bf16.gmra.mxu0 %v315
      %v466 = vpop.f32.mrf.mxu0
      %v467 = vadd.f32 0.0, %v466
      %v468 = vpop.f32.mrf.mxu0
      %v469 = vpop.f32.mrf.mxu0
      %v470 = vadd.f32 0.0, %v469
      %v471 = vpop.f32.mrf.mxu0
      %472 = vmatprep.mubr.bf16.mxu0 0
      %473 = vmatmul.mubr.bf16.gmra.mxu0 %v318
      %v474 = vpop.f32.mrf.mxu0
      %v475 = vadd.f32 0.0, %v474
      %v476 = vpop.f32.mrf.mxu0
      %v477 = vpop.f32.mrf.mxu0
      %v478 = vadd.f32 0.0, %v477
      %v479 = vpop.f32.mrf.mxu0
      %480 = vdwg.mxu0
      %v481 = vpack.c.bf16 %v358, %v355
      %v482 = vpack.c.bf16 %v366, %v363
      %v483 = vpack.c.bf16 %v374, %v371
      %v484 = vpack.c.bf16 %v382, %v379
      %v485 = vpack.c.bf16 %v390, %v387
      %v486 = vpack.c.bf16 %v398, %v395
      %v487 = vpack.c.bf16 %v406, %v403
      %v488 = vpack.c.bf16 %v414, %v411
      %v489 = vpack.c.bf16 %v422, %v419
      %v490 = vpack.c.bf16 %v430, %v427
      %v491 = vpack.c.bf16 %v438, %v435
      %v492 = vpack.c.bf16 %v446, %v443
      %v493 = vpack.c.bf16 %v454, %v451
      %v494 = vpack.c.bf16 %v462, %v459
      %v495 = vpack.c.bf16 %v470, %v467
      %v496 = vpack.c.bf16 %v478, %v475
      %498 = vrot.lane.b32.xlu0 %v481, 96
      %v499 = vpop.permute.xlu0 %498
      %vm500 = vcmask 130048
      %v502 = vsel %vm500, %v481, 0
      %v505 = vsel %vm500, %v499, 0
      %507 = vmatprep.subr.bf16.mxu0 0
      %508 = vmatpush1.bf16.xpose.msra.mxu0 0
      %509 = vmatprep.subr.bf16.mxu0 0
      %510 = vmatpush1.bf16.xpose.msra.mxu0 0
      %511 = vmatprep.subr.bf16.mxu0 0
      %512 = vmatpush1.bf16.xpose.msra.mxu0 0
      %513 = vmatprep.subr.bf16.mxu0 0
      %514 = vmatpush1.bf16.xpose.msra.mxu0 0
      %515 = vmatprep.subr.bf16.mxu0 0
      %516 = vmatpush1.bf16.xpose.msra.mxu0 0
      %517 = vmatprep.subr.bf16.mxu0 0
      %518 = vmatpush1.bf16.xpose.msra.mxu0 0
      %519 = vmatprep.subr.bf16.mxu0 0
      %520 = vmatpush1.bf16.xpose.msra.mxu0 0
      %521 = vmatprep.subr.bf16.mxu0 0
      %522 = vmatpush1.bf16.xpose.msra.mxu0 %v505
      %523 = vmatprep.subr.bf16.mxu0 0
      %524 = vmatpush2.bf16.xpose.msra.mxu0 0
      %525 = vmatprep.subr.bf16.mxu0 0
      %526 = vmatpush2.bf16.xpose.msra.mxu0 0
      %527 = vmatprep.subr.bf16.mxu0 0
      %528 = vmatpush2.bf16.xpose.msra.mxu0 0
      %529 = vmatprep.subr.bf16.mxu0 0
      %530 = vmatpush2.bf16.xpose.msra.mxu0 0
      %531 = vmatprep.subr.bf16.mxu0 0
      %532 = vmatpush2.bf16.xpose.msra.mxu0 0
      %533 = vmatprep.subr.bf16.mxu0 0
      %534 = vmatpush2.bf16.xpose.msra.mxu0 0
      %535 = vmatprep.subr.bf16.mxu0 0
      %536 = vmatpush2.bf16.xpose.msra.mxu0 0
      %537 = vmatprep.subr.bf16.mxu0 0
      %538 = vmatpush2.bf16.xpose.msra.mxu0 0
      %539 = vmatprep.mubr.bf16.mxu0 0
      %540 = vmatmul.mubr.bf16.gmra.mxu0 %v502
      %v541 = vpop.f32.mrf.mxu0
      %v542 = vadd.f32 0.0, %v541
      %v543 = vpop.f32.mrf.mxu0
      %v544 = vpop.f32.mrf.mxu0
      %v545 = vadd.f32 0.0, %v544
      %v546 = vpop.f32.mrf.mxu0
      %547 = vdwg.mxu0
      %549 = vrot.lane.b32.xlu0 %v482, 96
      %v550 = vpop.permute.xlu0 %549
      %v552 = vsel %vm500, %v482, 0
      %v555 = vsel %vm500, %v550, 0
      %557 = vmatprep.subr.bf16.mxu0 0
      %558 = vmatpush1.bf16.xpose.msra.mxu0 0
      %559 = vmatprep.subr.bf16.mxu0 0
      %560 = vmatpush1.bf16.xpose.msra.mxu0 0
      %561 = vmatprep.subr.bf16.mxu0 0
      %562 = vmatpush1.bf16.xpose.msra.mxu0 0
      %563 = vmatprep.subr.bf16.mxu0 0
      %564 = vmatpush1.bf16.xpose.msra.mxu0 0
      %565 = vmatprep.subr.bf16.mxu0 0
      %566 = vmatpush1.bf16.xpose.msra.mxu0 0
      %567 = vmatprep.subr.bf16.mxu0 0
      %568 = vmatpush1.bf16.xpose.msra.mxu0 0
      %569 = vmatprep.subr.bf16.mxu0 0
      %570 = vmatpush1.bf16.xpose.msra.mxu0 0
      %571 = vmatprep.subr.bf16.mxu0 0
      %572 = vmatpush1.bf16.xpose.msra.mxu0 %v555
      %573 = vmatprep.subr.bf16.mxu0 0
      %574 = vmatpush2.bf16.xpose.msra.mxu0 0
      %575 = vmatprep.subr.bf16.mxu0 0
      %576 = vmatpush2.bf16.xpose.msra.mxu0 0
      %577 = vmatprep.subr.bf16.mxu0 0
      %578 = vmatpush2.bf16.xpose.msra.mxu0 0
      %579 = vmatprep.subr.bf16.mxu0 0
      %580 = vmatpush2.bf16.xpose.msra.mxu0 0
      %581 = vmatprep.subr.bf16.mxu0 0
      %582 = vmatpush2.bf16.xpose.msra.mxu0 0
      %583 = vmatprep.subr.bf16.mxu0 0
      %584 = vmatpush2.bf16.xpose.msra.mxu0 0
      %585 = vmatprep.subr.bf16.mxu0 0
      %586 = vmatpush2.bf16.xpose.msra.mxu0 0
      %587 = vmatprep.subr.bf16.mxu0 0
      %588 = vmatpush2.bf16.xpose.msra.mxu0 0
      %589 = vmatprep.mubr.bf16.mxu0 0
      %590 = vmatmul.mubr.bf16.gmra.mxu0 %v552
      %v591 = vpop.f32.mrf.mxu0
      %v592 = vadd.f32 0.0, %v591
      %v593 = vpop.f32.mrf.mxu0
      %v594 = vpop.f32.mrf.mxu0
      %v595 = vadd.f32 0.0, %v594
      %v596 = vpop.f32.mrf.mxu0
      %597 = vdwg.mxu0
      %599 = vrot.lane.b32.xlu0 %v483, 96
      %v600 = vpop.permute.xlu0 %599
      %v602 = vsel %vm500, %v483, 0
      %v605 = vsel %vm500, %v600, 0
      %607 = vmatprep.subr.bf16.mxu0 0
      %608 = vmatpush1.bf16.xpose.msra.mxu0 0
      %609 = vmatprep.subr.bf16.mxu0 0
      %610 = vmatpush1.bf16.xpose.msra.mxu0 0
      %611 = vmatprep.subr.bf16.mxu0 0
      %612 = vmatpush1.bf16.xpose.msra.mxu0 0
      %613 = vmatprep.subr.bf16.mxu0 0
      %614 = vmatpush1.bf16.xpose.msra.mxu0 0
      %615 = vmatprep.subr.bf16.mxu0 0
      %616 = vmatpush1.bf16.xpose.msra.mxu0 0
      %617 = vmatprep.subr.bf16.mxu0 0
      %618 = vmatpush1.bf16.xpose.msra.mxu0 0
      %619 = vmatprep.subr.bf16.mxu0 0
      %620 = vmatpush1.bf16.xpose.msra.mxu0 0
      %621 = vmatprep.subr.bf16.mxu0 0
      %622 = vmatpush1.bf16.xpose.msra.mxu0 %v605
      %623 = vmatprep.subr.bf16.mxu0 0
      %624 = vmatpush2.bf16.xpose.msra.mxu0 0
      %625 = vmatprep.subr.bf16.mxu0 0
      %626 = vmatpush2.bf16.xpose.msra.mxu0 0
      %627 = vmatprep.subr.bf16.mxu0 0
      %628 = vmatpush2.bf16.xpose.msra.mxu0 0
      %629 = vmatprep.subr.bf16.mxu0 0
      %630 = vmatpush2.bf16.xpose.msra.mxu0 0
      %631 = vmatprep.subr.bf16.mxu0 0
      %632 = vmatpush2.bf16.xpose.msra.mxu0 0
      %633 = vmatprep.subr.bf16.mxu0 0
      %634 = vmatpush2.bf16.xpose.msra.mxu0 0
      %635 = vmatprep.subr.bf16.mxu0 0
      %636 = vmatpush2.bf16.xpose.msra.mxu0 0
      %637 = vmatprep.subr.bf16.mxu0 0
      %638 = vmatpush2.bf16.xpose.msra.mxu0 0
      %639 = vmatprep.mubr.bf16.mxu0 0
      %640 = vmatmul.mubr.bf16.gmra.mxu0 %v602
      %v641 = vpop.f32.mrf.mxu0
      %v642 = vadd.f32 0.0, %v641
      %v643 = vpop.f32.mrf.mxu0
      %v644 = vpop.f32.mrf.mxu0
      %v645 = vadd.f32 0.0, %v644
      %v646 = vpop.f32.mrf.mxu0
      %647 = vdwg.mxu0
      %649 = vrot.lane.b32.xlu0 %v484, 96
      %v650 = vpop.permute.xlu0 %649
      %v652 = vsel %vm500, %v484, 0
      %v655 = vsel %vm500, %v650, 0
      %657 = vmatprep.subr.bf16.mxu0 0
      %658 = vmatpush1.bf16.xpose.msra.mxu0 0
      %659 = vmatprep.subr.bf16.mxu0 0
      %660 = vmatpush1.bf16.xpose.msra.mxu0 0
      %661 = vmatprep.subr.bf16.mxu0 0
      %662 = vmatpush1.bf16.xpose.msra.mxu0 0
      %663 = vmatprep.subr.bf16.mxu0 0
      %664 = vmatpush1.bf16.xpose.msra.mxu0 0
      %665 = vmatprep.subr.bf16.mxu0 0
      %666 = vmatpush1.bf16.xpose.msra.mxu0 0
      %667 = vmatprep.subr.bf16.mxu0 0
      %668 = vmatpush1.bf16.xpose.msra.mxu0 0
      %669 = vmatprep.subr.bf16.mxu0 0
      %670 = vmatpush1.bf16.xpose.msra.mxu0 0
      %671 = vmatprep.subr.bf16.mxu0 0
      %672 = vmatpush1.bf16.xpose.msra.mxu0 %v655
      %673 = vmatprep.subr.bf16.mxu0 0
      %674 = vmatpush2.bf16.xpose.msra.mxu0 0
      %675 = vmatprep.subr.bf16.mxu0 0
      %676 = vmatpush2.bf16.xpose.msra.mxu0 0
      %677 = vmatprep.subr.bf16.mxu0 0
      %678 = vmatpush2.bf16.xpose.msra.mxu0 0
      %679 = vmatprep.subr.bf16.mxu0 0
      %680 = vmatpush2.bf16.xpose.msra.mxu0 0
      %681 = vmatprep.subr.bf16.mxu0 0
      %682 = vmatpush2.bf16.xpose.msra.mxu0 0
      %683 = vmatprep.subr.bf16.mxu0 0
      %684 = vmatpush2.bf16.xpose.msra.mxu0 0
      %685 = vmatprep.subr.bf16.mxu0 0
      %686 = vmatpush2.bf16.xpose.msra.mxu0 0
      %687 = vmatprep.subr.bf16.mxu0 0
      %688 = vmatpush2.bf16.xpose.msra.mxu0 0
      %689 = vmatprep.mubr.bf16.mxu0 0
      %690 = vmatmul.mubr.bf16.gmra.mxu0 %v652
      %v691 = vpop.f32.mrf.mxu0
      %v692 = vadd.f32 0.0, %v691
      %v693 = vpop.f32.mrf.mxu0
      %v694 = vpop.f32.mrf.mxu0
      %v695 = vadd.f32 0.0, %v694
      %v696 = vpop.f32.mrf.mxu0
      %697 = vdwg.mxu0
      %699 = vrot.lane.b32.xlu0 %v485, 96
      %v700 = vpop.permute.xlu0 %699
      %v702 = vsel %vm500, %v485, 0
      %v705 = vsel %vm500, %v700, 0
      %707 = vmatprep.subr.bf16.mxu0 0
      %708 = vmatpush1.bf16.xpose.msra.mxu0 0
      %709 = vmatprep.subr.bf16.mxu0 0
      %710 = vmatpush1.bf16.xpose.msra.mxu0 0
      %711 = vmatprep.subr.bf16.mxu0 0
      %712 = vmatpush1.bf16.xpose.msra.mxu0 0
      %713 = vmatprep.subr.bf16.mxu0 0
      %714 = vmatpush1.bf16.xpose.msra.mxu0 0
      %715 = vmatprep.subr.bf16.mxu0 0
      %716 = vmatpush1.bf16.xpose.msra.mxu0 0
      %717 = vmatprep.subr.bf16.mxu0 0
      %718 = vmatpush1.bf16.xpose.msra.mxu0 0
      %719 = vmatprep.subr.bf16.mxu0 0
      %720 = vmatpush1.bf16.xpose.msra.mxu0 0
      %721 = vmatprep.subr.bf16.mxu0 0
      %722 = vmatpush1.bf16.xpose.msra.mxu0 %v705
      %723 = vmatprep.subr.bf16.mxu0 0
      %724 = vmatpush2.bf16.xpose.msra.mxu0 0
      %725 = vmatprep.subr.bf16.mxu0 0
      %726 = vmatpush2.bf16.xpose.msra.mxu0 0
      %727 = vmatprep.subr.bf16.mxu0 0
      %728 = vmatpush2.bf16.xpose.msra.mxu0 0
      %729 = vmatprep.subr.bf16.mxu0 0
      %730 = vmatpush2.bf16.xpose.msra.mxu0 0
      %731 = vmatprep.subr.bf16.mxu0 0
      %732 = vmatpush2.bf16.xpose.msra.mxu0 0
      %733 = vmatprep.subr.bf16.mxu0 0
      %734 = vmatpush2.bf16.xpose.msra.mxu0 0
      %735 = vmatprep.subr.bf16.mxu0 0
      %736 = vmatpush2.bf16.xpose.msra.mxu0 0
      %737 = vmatprep.subr.bf16.mxu0 0
      %738 = vmatpush2.bf16.xpose.msra.mxu0 0
      %739 = vmatprep.mubr.bf16.mxu0 0
      %740 = vmatmul.mubr.bf16.gmra.mxu0 %v702
      %v741 = vpop.f32.mrf.mxu0
      %v742 = vadd.f32 0.0, %v741
      %v743 = vpop.f32.mrf.mxu0
      %v744 = vpop.f32.mrf.mxu0
      %v745 = vadd.f32 0.0, %v744
      %v746 = vpop.f32.mrf.mxu0
      %747 = vdwg.mxu0
      %749 = vrot.lane.b32.xlu0 %v486, 96
      %v750 = vpop.permute.xlu0 %749
      %v752 = vsel %vm500, %v486, 0
      %v755 = vsel %vm500, %v750, 0
      %757 = vmatprep.subr.bf16.mxu0 0
      %758 = vmatpush1.bf16.xpose.msra.mxu0 0
      %759 = vmatprep.subr.bf16.mxu0 0
      %760 = vmatpush1.bf16.xpose.msra.mxu0 0
      %761 = vmatprep.subr.bf16.mxu0 0
      %762 = vmatpush1.bf16.xpose.msra.mxu0 0
      %763 = vmatprep.subr.bf16.mxu0 0
      %764 = vmatpush1.bf16.xpose.msra.mxu0 0
      %765 = vmatprep.subr.bf16.mxu0 0
      %766 = vmatpush1.bf16.xpose.msra.mxu0 0
      %767 = vmatprep.subr.bf16.mxu0 0
      %768 = vmatpush1.bf16.xpose.msra.mxu0 0
      %769 = vmatprep.subr.bf16.mxu0 0
      %770 = vmatpush1.bf16.xpose.msra.mxu0 0
      %771 = vmatprep.subr.bf16.mxu0 0
      %772 = vmatpush1.bf16.xpose.msra.mxu0 %v755
      %773 = vmatprep.subr.bf16.mxu0 0
      %774 = vmatpush2.bf16.xpose.msra.mxu0 0
      %775 = vmatprep.subr.bf16.mxu0 0
      %776 = vmatpush2.bf16.xpose.msra.mxu0 0
      %777 = vmatprep.subr.bf16.mxu0 0
      %778 = vmatpush2.bf16.xpose.msra.mxu0 0
      %779 = vmatprep.subr.bf16.mxu0 0
      %780 = vmatpush2.bf16.xpose.msra.mxu0 0
      %781 = vmatprep.subr.bf16.mxu0 0
      %782 = vmatpush2.bf16.xpose.msra.mxu0 0
      %783 = vmatprep.subr.bf16.mxu0 0
      %784 = vmatpush2.bf16.xpose.msra.mxu0 0
      %785 = vmatprep.subr.bf16.mxu0 0
      %786 = vmatpush2.bf16.xpose.msra.mxu0 0
      %787 = vmatprep.subr.bf16.mxu0 0
      %788 = vmatpush2.bf16.xpose.msra.mxu0 0
      %789 = vmatprep.mubr.bf16.mxu0 0
      %790 = vmatmul.mubr.bf16.gmra.mxu0 %v752
      %v791 = vpop.f32.mrf.mxu0
      %v792 = vadd.f32 0.0, %v791
      %v793 = vpop.f32.mrf.mxu0
      %v794 = vpop.f32.mrf.mxu0
      %v795 = vadd.f32 0.0, %v794
      %v796 = vpop.f32.mrf.mxu0
      %797 = vdwg.mxu0
      %799 = vrot.lane.b32.xlu0 %v487, 96
      %v800 = vpop.permute.xlu0 %799
      %v802 = vsel %vm500, %v487, 0
      %v805 = vsel %vm500, %v800, 0
      %807 = vmatprep.subr.bf16.mxu0 0
      %808 = vmatpush1.bf16.xpose.msra.mxu0 0
      %809 = vmatprep.subr.bf16.mxu0 0
      %810 = vmatpush1.bf16.xpose.msra.mxu0 0
      %811 = vmatprep.subr.bf16.mxu0 0
      %812 = vmatpush1.bf16.xpose.msra.mxu0 0
      %813 = vmatprep.subr.bf16.mxu0 0
      %814 = vmatpush1.bf16.xpose.msra.mxu0 0
      %815 = vmatprep.subr.bf16.mxu0 0
      %816 = vmatpush1.bf16.xpose.msra.mxu0 0
      %817 = vmatprep.subr.bf16.mxu0 0
      %818 = vmatpush1.bf16.xpose.msra.mxu0 0
      %819 = vmatprep.subr.bf16.mxu0 0
      %820 = vmatpush1.bf16.xpose.msra.mxu0 0
      %821 = vmatprep.subr.bf16.mxu0 0
      %822 = vmatpush1.bf16.xpose.msra.mxu0 %v805
      %823 = vmatprep.subr.bf16.mxu0 0
      %824 = vmatpush2.bf16.xpose.msra.mxu0 0
      %825 = vmatprep.subr.bf16.mxu0 0
      %826 = vmatpush2.bf16.xpose.msra.mxu0 0
      %827 = vmatprep.subr.bf16.mxu0 0
      %828 = vmatpush2.bf16.xpose.msra.mxu0 0
      %829 = vmatprep.subr.bf16.mxu0 0
      %830 = vmatpush2.bf16.xpose.msra.mxu0 0
      %831 = vmatprep.subr.bf16.mxu0 0
      %832 = vmatpush2.bf16.xpose.msra.mxu0 0
      %833 = vmatprep.subr.bf16.mxu0 0
      %834 = vmatpush2.bf16.xpose.msra.mxu0 0
      %835 = vmatprep.subr.bf16.mxu0 0
      %836 = vmatpush2.bf16.xpose.msra.mxu0 0
      %837 = vmatprep.subr.bf16.mxu0 0
      %838 = vmatpush2.bf16.xpose.msra.mxu0 0
      %839 = vmatprep.mubr.bf16.mxu0 0
      %840 = vmatmul.mubr.bf16.gmra.mxu0 %v802
      %v841 = vpop.f32.mrf.mxu0
      %v842 = vadd.f32 0.0, %v841
      %v843 = vpop.f32.mrf.mxu0
      %v844 = vpop.f32.mrf.mxu0
      %v845 = vadd.f32 0.0, %v844
      %v846 = vpop.f32.mrf.mxu0
      %847 = vdwg.mxu0
      %849 = vrot.lane.b32.xlu0 %v488, 96
      %v850 = vpop.permute.xlu0 %849
      %v852 = vsel %vm500, %v488, 0
      %v855 = vsel %vm500, %v850, 0
      %857 = vmatprep.subr.bf16.mxu0 0
      %858 = vmatpush1.bf16.xpose.msra.mxu0 0
      %859 = vmatprep.subr.bf16.mxu0 0
      %860 = vmatpush1.bf16.xpose.msra.mxu0 0
      %861 = vmatprep.subr.bf16.mxu0 0
      %862 = vmatpush1.bf16.xpose.msra.mxu0 0
      %863 = vmatprep.subr.bf16.mxu0 0
      %864 = vmatpush1.bf16.xpose.msra.mxu0 0
      %865 = vmatprep.subr.bf16.mxu0 0
      %866 = vmatpush1.bf16.xpose.msra.mxu0 0
      %867 = vmatprep.subr.bf16.mxu0 0
      %868 = vmatpush1.bf16.xpose.msra.mxu0 0
      %869 = vmatprep.subr.bf16.mxu0 0
      %870 = vmatpush1.bf16.xpose.msra.mxu0 0
      %871 = vmatprep.subr.bf16.mxu0 0
      %872 = vmatpush1.bf16.xpose.msra.mxu0 %v855
      %873 = vmatprep.subr.bf16.mxu0 0
      %874 = vmatpush2.bf16.xpose.msra.mxu0 0
      %875 = vmatprep.subr.bf16.mxu0 0
      %876 = vmatpush2.bf16.xpose.msra.mxu0 0
      %877 = vmatprep.subr.bf16.mxu0 0
      %878 = vmatpush2.bf16.xpose.msra.mxu0 0
      %879 = vmatprep.subr.bf16.mxu0 0
      %880 = vmatpush2.bf16.xpose.msra.mxu0 0
      %881 = vmatprep.subr.bf16.mxu0 0
      %882 = vmatpush2.bf16.xpose.msra.mxu0 0
      %883 = vmatprep.subr.bf16.mxu0 0
      %884 = vmatpush2.bf16.xpose.msra.mxu0 0
      %885 = vmatprep.subr.bf16.mxu0 0
      %886 = vmatpush2.bf16.xpose.msra.mxu0 0
      %887 = vmatprep.subr.bf16.mxu0 0
      %888 = vmatpush2.bf16.xpose.msra.mxu0 0
      %889 = vmatprep.mubr.bf16.mxu0 0
      %890 = vmatmul.mubr.bf16.gmra.mxu0 %v852
      %v891 = vpop.f32.mrf.mxu0
      %v892 = vadd.f32 0.0, %v891
      %v893 = vpop.f32.mrf.mxu0
      %v894 = vpop.f32.mrf.mxu0
      %v895 = vadd.f32 0.0, %v894
      %v896 = vpop.f32.mrf.mxu0
      %897 = vdwg.mxu0
      %899 = vrot.lane.b32.xlu0 %v489, 96
      %v900 = vpop.permute.xlu0 %899
      %v902 = vsel %vm500, %v489, 0
      %v905 = vsel %vm500, %v900, 0
      %907 = vmatprep.subr.bf16.mxu0 0
      %908 = vmatpush1.bf16.xpose.msra.mxu0 0
      %909 = vmatprep.subr.bf16.mxu0 0
      %910 = vmatpush1.bf16.xpose.msra.mxu0 0
      %911 = vmatprep.subr.bf16.mxu0 0
      %912 = vmatpush1.bf16.xpose.msra.mxu0 0
      %913 = vmatprep.subr.bf16.mxu0 0
      %914 = vmatpush1.bf16.xpose.msra.mxu0 0
      %915 = vmatprep.subr.bf16.mxu0 0
      %916 = vmatpush1.bf16.xpose.msra.mxu0 0
      %917 = vmatprep.subr.bf16.mxu0 0
      %918 = vmatpush1.bf16.xpose.msra.mxu0 0
      %919 = vmatprep.subr.bf16.mxu0 0
      %920 = vmatpush1.bf16.xpose.msra.mxu0 0
      %921 = vmatprep.subr.bf16.mxu0 0
      %922 = vmatpush1.bf16.xpose.msra.mxu0 %v905
      %923 = vmatprep.subr.bf16.mxu0 0
      %924 = vmatpush2.bf16.xpose.msra.mxu0 0
      %925 = vmatprep.subr.bf16.mxu0 0
      %926 = vmatpush2.bf16.xpose.msra.mxu0 0
      %927 = vmatprep.subr.bf16.mxu0 0
      %928 = vmatpush2.bf16.xpose.msra.mxu0 0
      %929 = vmatprep.subr.bf16.mxu0 0
      %930 = vmatpush2.bf16.xpose.msra.mxu0 0
      %931 = vmatprep.subr.bf16.mxu0 0
      %932 = vmatpush2.bf16.xpose.msra.mxu0 0
      %933 = vmatprep.subr.bf16.mxu0 0
      %934 = vmatpush2.bf16.xpose.msra.mxu0 0
      %935 = vmatprep.subr.bf16.mxu0 0
      %936 = vmatpush2.bf16.xpose.msra.mxu0 0
      %937 = vmatprep.subr.bf16.mxu0 0
      %938 = vmatpush2.bf16.xpose.msra.mxu0 0
      %939 = vmatprep.mubr.bf16.mxu0 0
      %940 = vmatmul.mubr.bf16.gmra.mxu0 %v902
      %v941 = vpop.f32.mrf.mxu0
      %v942 = vadd.f32 0.0, %v941
      %v943 = vpop.f32.mrf.mxu0
      %v944 = vpop.f32.mrf.mxu0
      %v945 = vadd.f32 0.0, %v944
      %v946 = vpop.f32.mrf.mxu0
      %947 = vdwg.mxu0
      %949 = vrot.lane.b32.xlu0 %v490, 96
      %v950 = vpop.permute.xlu0 %949
      %v952 = vsel %vm500, %v490, 0
      %v955 = vsel %vm500, %v950, 0
      %957 = vmatprep.subr.bf16.mxu0 0
      %958 = vmatpush1.bf16.xpose.msra.mxu0 0
      %959 = vmatprep.subr.bf16.mxu0 0
      %960 = vmatpush1.bf16.xpose.msra.mxu0 0
      %961 = vmatprep.subr.bf16.mxu0 0
      %962 = vmatpush1.bf16.xpose.msra.mxu0 0
      %963 = vmatprep.subr.bf16.mxu0 0
      %964 = vmatpush1.bf16.xpose.msra.mxu0 0
      %965 = vmatprep.subr.bf16.mxu0 0
      %966 = vmatpush1.bf16.xpose.msra.mxu0 0
      %967 = vmatprep.subr.bf16.mxu0 0
      %968 = vmatpush1.bf16.xpose.msra.mxu0 0
      %969 = vmatprep.subr.bf16.mxu0 0
      %970 = vmatpush1.bf16.xpose.msra.mxu0 0
      %971 = vmatprep.subr.bf16.mxu0 0
      %972 = vmatpush1.bf16.xpose.msra.mxu0 %v955
      %973 = vmatprep.subr.bf16.mxu0 0
      %974 = vmatpush2.bf16.xpose.msra.mxu0 0
      %975 = vmatprep.subr.bf16.mxu0 0
      %976 = vmatpush2.bf16.xpose.msra.mxu0 0
      %977 = vmatprep.subr.bf16.mxu0 0
      %978 = vmatpush2.bf16.xpose.msra.mxu0 0
      %979 = vmatprep.subr.bf16.mxu0 0
      %980 = vmatpush2.bf16.xpose.msra.mxu0 0
      %981 = vmatprep.subr.bf16.mxu0 0
      %982 = vmatpush2.bf16.xpose.msra.mxu0 0
      %983 = vmatprep.subr.bf16.mxu0 0
      %984 = vmatpush2.bf16.xpose.msra.mxu0 0
      %985 = vmatprep.subr.bf16.mxu0 0
      %986 = vmatpush2.bf16.xpose.msra.mxu0 0
      %987 = vmatprep.subr.bf16.mxu0 0
      %988 = vmatpush2.bf16.xpose.msra.mxu0 0
      %989 = vmatprep.mubr.bf16.mxu0 0
      %990 = vmatmul.mubr.bf16.gmra.mxu0 %v952
      %v991 = vpop.f32.mrf.mxu0
      %v992 = vadd.f32 0.0, %v991
      %v993 = vpop.f32.mrf.mxu0
      %v994 = vpop.f32.mrf.mxu0
      %v995 = vadd.f32 0.0, %v994
      %v996 = vpop.f32.mrf.mxu0
      %997 = vdwg.mxu0
      %999 = vrot.lane.b32.xlu0 %v491, 96
      %v1000 = vpop.permute.xlu0 %999
      %v1002 = vsel %vm500, %v491, 0
      %v1005 = vsel %vm500, %v1000, 0
      %1007 = vmatprep.subr.bf16.mxu0 0
      %1008 = vmatpush1.bf16.xpose.msra.mxu0 0
      %1009 = vmatprep.subr.bf16.mxu0 0
      %1010 = vmatpush1.bf16.xpose.msra.mxu0 0
      %1011 = vmatprep.subr.bf16.mxu0 0
      %1012 = vmatpush1.bf16.xpose.msra.mxu0 0
      %1013 = vmatprep.subr.bf16.mxu0 0
      %1014 = vmatpush1.bf16.xpose.msra.mxu0 0
      %1015 = vmatprep.subr.bf16.mxu0 0
      %1016 = vmatpush1.bf16.xpose.msra.mxu0 0
      %1017 = vmatprep.subr.bf16.mxu0 0
      %1018 = vmatpush1.bf16.xpose.msra.mxu0 0
      %1019 = vmatprep.subr.bf16.mxu0 0
      %1020 = vmatpush1.bf16.xpose.msra.mxu0 0
      %1021 = vmatprep.subr.bf16.mxu0 0
      %1022 = vmatpush1.bf16.xpose.msra.mxu0 %v1005
      %1023 = vmatprep.subr.bf16.mxu0 0
      %1024 = vmatpush2.bf16.xpose.msra.mxu0 0
      %1025 = vmatprep.subr.bf16.mxu0 0
      %1026 = vmatpush2.bf16.xpose.msra.mxu0 0
      %1027 = vmatprep.subr.bf16.mxu0 0
      %1028 = vmatpush2.bf16.xpose.msra.mxu0 0
      %1029 = vmatprep.subr.bf16.mxu0 0
      %1030 = vmatpush2.bf16.xpose.msra.mxu0 0
      %1031 = vmatprep.subr.bf16.mxu0 0
      %1032 = vmatpush2.bf16.xpose.msra.mxu0 0
      %1033 = vmatprep.subr.bf16.mxu0 0
      %1034 = vmatpush2.bf16.xpose.msra.mxu0 0
      %1035 = vmatprep.subr.bf16.mxu0 0
      %1036 = vmatpush2.bf16.xpose.msra.mxu0 0
      %1037 = vmatprep.subr.bf16.mxu0 0
      %1038 = vmatpush2.bf16.xpose.msra.mxu0 0
      %1039 = vmatprep.mubr.bf16.mxu0 0
      %1040 = vmatmul.mubr.bf16.gmra.mxu0 %v1002
      %v1041 = vpop.f32.mrf.mxu0
      %v1042 = vadd.f32 0.0, %v1041
      %v1043 = vpop.f32.mrf.mxu0
      %v1044 = vpop.f32.mrf.mxu0
      %v1045 = vadd.f32 0.0, %v1044
      %v1046 = vpop.f32.mrf.mxu0
      %1047 = vdwg.mxu0
      %1049 = vrot.lane.b32.xlu0 %v492, 96
      %v1050 = vpop.permute.xlu0 %1049
      %v1052 = vsel %vm500, %v492, 0
      %v1055 = vsel %vm500, %v1050, 0
      %1057 = vmatprep.subr.bf16.mxu0 0
      %1058 = vmatpush1.bf16.xpose.msra.mxu0 0
      %1059 = vmatprep.subr.bf16.mxu0 0
      %1060 = vmatpush1.bf16.xpose.msra.mxu0 0
      %1061 = vmatprep.subr.bf16.mxu0 0
      %1062 = vmatpush1.bf16.xpose.msra.mxu0 0
      %1063 = vmatprep.subr.bf16.mxu0 0
      %1064 = vmatpush1.bf16.xpose.msra.mxu0 0
      %1065 = vmatprep.subr.bf16.mxu0 0
      %1066 = vmatpush1.bf16.xpose.msra.mxu0 0
      %1067 = vmatprep.subr.bf16.mxu0 0
      %1068 = vmatpush1.bf16.xpose.msra.mxu0 0
      %1069 = vmatprep.subr.bf16.mxu0 0
      %1070 = vmatpush1.bf16.xpose.msra.mxu0 0
      %1071 = vmatprep.subr.bf16.mxu0 0
      %1072 = vmatpush1.bf16.xpose.msra.mxu0 %v1055
      %1073 = vmatprep.subr.bf16.mxu0 0
      %1074 = vmatpush2.bf16.xpose.msra.mxu0 0
      %1075 = vmatprep.subr.bf16.mxu0 0
      %1076 = vmatpush2.bf16.xpose.msra.mxu0 0
      %1077 = vmatprep.subr.bf16.mxu0 0
      %1078 = vmatpush2.bf16.xpose.msra.mxu0 0
      %1079 = vmatprep.subr.bf16.mxu0 0
      %1080 = vmatpush2.bf16.xpose.msra.mxu0 0
      %1081 = vmatprep.subr.bf16.mxu0 0
      %1082 = vmatpush2.bf16.xpose.msra.mxu0 0
      %1083 = vmatprep.subr.bf16.mxu0 0
      %1084 = vmatpush2.bf16.xpose.msra.mxu0 0
      %1085 = vmatprep.subr.bf16.mxu0 0
      %1086 = vmatpush2.bf16.xpose.msra.mxu0 0
      %1087 = vmatprep.subr.bf16.mxu0 0
      %1088 = vmatpush2.bf16.xpose.msra.mxu0 0
      %1089 = vmatprep.mubr.bf16.mxu0 0
      %1090 = vmatmul.mubr.bf16.gmra.mxu0 %v1052
      %v1091 = vpop.f32.mrf.mxu0
      %v1092 = vadd.f32 0.0, %v1091
      %v1093 = vpop.f32.mrf.mxu0
      %v1094 = vpop.f32.mrf.mxu0
      %v1095 = vadd.f32 0.0, %v1094
      %v1096 = vpop.f32.mrf.mxu0
      %1097 = vdwg.mxu0
      %1099 = vrot.lane.b32.xlu0 %v493, 96
      %v1100 = vpop.permute.xlu0 %1099
      %v1102 = vsel %vm500, %v493, 0
      %v1105 = vsel %vm500, %v1100, 0
      %1107 = vmatprep.subr.bf16.mxu0 0
      %1108 = vmatpush1.bf16.xpose.msra.mxu0 0
      %1109 = vmatprep.subr.bf16.mxu0 0
      %1110 = vmatpush1.bf16.xpose.msra.mxu0 0
      %1111 = vmatprep.subr.bf16.mxu0 0
      %1112 = vmatpush1.bf16.xpose.msra.mxu0 0
      %1113 = vmatprep.subr.bf16.mxu0 0
      %1114 = vmatpush1.bf16.xpose.msra.mxu0 0
      %1115 = vmatprep.subr.bf16.mxu0 0
      %1116 = vmatpush1.bf16.xpose.msra.mxu0 0
      %1117 = vmatprep.subr.bf16.mxu0 0
      %1118 = vmatpush1.bf16.xpose.msra.mxu0 0
      %1119 = vmatprep.subr.bf16.mxu0 0
      %1120 = vmatpush1.bf16.xpose.msra.mxu0 0
      %1121 = vmatprep.subr.bf16.mxu0 0
      %1122 = vmatpush1.bf16.xpose.msra.mxu0 %v1105
      %1123 = vmatprep.subr.bf16.mxu0 0
      %1124 = vmatpush2.bf16.xpose.msra.mxu0 0
      %1125 = vmatprep.subr.bf16.mxu0 0
      %1126 = vmatpush2.bf16.xpose.msra.mxu0 0
      %1127 = vmatprep.subr.bf16.mxu0 0
      %1128 = vmatpush2.bf16.xpose.msra.mxu0 0
      %1129 = vmatprep.subr.bf16.mxu0 0
      %1130 = vmatpush2.bf16.xpose.msra.mxu0 0
      %1131 = vmatprep.subr.bf16.mxu0 0
      %1132 = vmatpush2.bf16.xpose.msra.mxu0 0
      %1133 = vmatprep.subr.bf16.mxu0 0
      %1134 = vmatpush2.bf16.xpose.msra.mxu0 0
      %1135 = vmatprep.subr.bf16.mxu0 0
      %1136 = vmatpush2.bf16.xpose.msra.mxu0 0
      %1137 = vmatprep.subr.bf16.mxu0 0
      %1138 = vmatpush2.bf16.xpose.msra.mxu0 0
      %1139 = vmatprep.mubr.bf16.mxu0 0
      %1140 = vmatmul.mubr.bf16.gmra.mxu0 %v1102
      %v1141 = vpop.f32.mrf.mxu0
      %v1142 = vadd.f32 0.0, %v1141
      %v1143 = vpop.f32.mrf.mxu0
      %v1144 = vpop.f32.mrf.mxu0
      %v1145 = vadd.f32 0.0, %v1144
      %v1146 = vpop.f32.mrf.mxu0
      %1147 = vdwg.mxu0
      %1149 = vrot.lane.b32.xlu0 %v494, 96
      %v1150 = vpop.permute.xlu0 %1149
      %v1152 = vsel %vm500, %v494, 0
      %v1155 = vsel %vm500, %v1150, 0
      %1157 = vmatprep.subr.bf16.mxu0 0
      %1158 = vmatpush1.bf16.xpose.msra.mxu0 0
      %1159 = vmatprep.subr.bf16.mxu0 0
      %1160 = vmatpush1.bf16.xpose.msra.mxu0 0
      %1161 = vmatprep.subr.bf16.mxu0 0
      %1162 = vmatpush1.bf16.xpose.msra.mxu0 0
      %1163 = vmatprep.subr.bf16.mxu0 0
      %1164 = vmatpush1.bf16.xpose.msra.mxu0 0
      %1165 = vmatprep.subr.bf16.mxu0 0
      %1166 = vmatpush1.bf16.xpose.msra.mxu0 0
      %1167 = vmatprep.subr.bf16.mxu0 0
      %1168 = vmatpush1.bf16.xpose.msra.mxu0 0
      %1169 = vmatprep.subr.bf16.mxu0 0
      %1170 = vmatpush1.bf16.xpose.msra.mxu0 0
      %1171 = vmatprep.subr.bf16.mxu0 0
      %1172 = vmatpush1.bf16.xpose.msra.mxu0 %v1155
      %1173 = vmatprep.subr.bf16.mxu0 0
      %1174 = vmatpush2.bf16.xpose.msra.mxu0 0
      %1175 = vmatprep.subr.bf16.mxu0 0
      %1176 = vmatpush2.bf16.xpose.msra.mxu0 0
      %1177 = vmatprep.subr.bf16.mxu0 0
      %1178 = vmatpush2.bf16.xpose.msra.mxu0 0
      %1179 = vmatprep.subr.bf16.mxu0 0
      %1180 = vmatpush2.bf16.xpose.msra.mxu0 0
      %1181 = vmatprep.subr.bf16.mxu0 0
      %1182 = vmatpush2.bf16.xpose.msra.mxu0 0
      %1183 = vmatprep.subr.bf16.mxu0 0
      %1184 = vmatpush2.bf16.xpose.msra.mxu0 0
      %1185 = vmatprep.subr.bf16.mxu0 0
      %1186 = vmatpush2.bf16.xpose.msra.mxu0 0
      %1187 = vmatprep.subr.bf16.mxu0 0
      %1188 = vmatpush2.bf16.xpose.msra.mxu0 0
      %1189 = vmatprep.mubr.bf16.mxu0 0
      %1190 = vmatmul.mubr.bf16.gmra.mxu0 %v1152
      %v1191 = vpop.f32.mrf.mxu0
      %v1192 = vadd.f32 0.0, %v1191
      %v1193 = vpop.f32.mrf.mxu0
      %v1194 = vpop.f32.mrf.mxu0
      %v1195 = vadd.f32 0.0, %v1194
      %v1196 = vpop.f32.mrf.mxu0
      %1197 = vdwg.mxu0
      %1199 = vrot.lane.b32.xlu0 %v495, 96
      %v1200 = vpop.permute.xlu0 %1199
      %v1202 = vsel %vm500, %v495, 0
      %v1205 = vsel %vm500, %v1200, 0
      %1207 = vmatprep.subr.bf16.mxu0 0
      %1208 = vmatpush1.bf16.xpose.msra.mxu0 0
      %1209 = vmatprep.subr.bf16.mxu0 0
      %1210 = vmatpush1.bf16.xpose.msra.mxu0 0
      %1211 = vmatprep.subr.bf16.mxu0 0
      %1212 = vmatpush1.bf16.xpose.msra.mxu0 0
      %1213 = vmatprep.subr.bf16.mxu0 0
      %1214 = vmatpush1.bf16.xpose.msra.mxu0 0
      %1215 = vmatprep.subr.bf16.mxu0 0
      %1216 = vmatpush1.bf16.xpose.msra.mxu0 0
      %1217 = vmatprep.subr.bf16.mxu0 0
      %1218 = vmatpush1.bf16.xpose.msra.mxu0 0
      %1219 = vmatprep.subr.bf16.mxu0 0
      %1220 = vmatpush1.bf16.xpose.msra.mxu0 0
      %1221 = vmatprep.subr.bf16.mxu0 0
      %1222 = vmatpush1.bf16.xpose.msra.mxu0 %v1205
      %1223 = vmatprep.subr.bf16.mxu0 0
      %1224 = vmatpush2.bf16.xpose.msra.mxu0 0
      %1225 = vmatprep.subr.bf16.mxu0 0
      %1226 = vmatpush2.bf16.xpose.msra.mxu0 0
      %1227 = vmatprep.subr.bf16.mxu0 0
      %1228 = vmatpush2.bf16.xpose.msra.mxu0 0
      %1229 = vmatprep.subr.bf16.mxu0 0
      %1230 = vmatpush2.bf16.xpose.msra.mxu0 0
      %1231 = vmatprep.subr.bf16.mxu0 0
      %1232 = vmatpush2.bf16.xpose.msra.mxu0 0
      %1233 = vmatprep.subr.bf16.mxu0 0
      %1234 = vmatpush2.bf16.xpose.msra.mxu0 0
      %1235 = vmatprep.subr.bf16.mxu0 0
      %1236 = vmatpush2.bf16.xpose.msra.mxu0 0
      %1237 = vmatprep.subr.bf16.mxu0 0
      %1238 = vmatpush2.bf16.xpose.msra.mxu0 0
      %1239 = vmatprep.mubr.bf16.mxu0 0
      %1240 = vmatmul.mubr.bf16.gmra.mxu0 %v1202
      %v1241 = vpop.f32.mrf.mxu0
      %v1242 = vadd.f32 0.0, %v1241
      %v1243 = vpop.f32.mrf.mxu0
      %v1244 = vpop.f32.mrf.mxu0
      %v1245 = vadd.f32 0.0, %v1244
      %v1246 = vpop.f32.mrf.mxu0
      %1247 = vdwg.mxu0
      %1249 = vrot.lane.b32.xlu0 %v496, 96
      %v1250 = vpop.permute.xlu0 %1249
      %v1252 = vsel %vm500, %v496, 0
      %v1255 = vsel %vm500, %v1250, 0
      %1257 = vmatprep.subr.bf16.mxu0 0
      %1258 = vmatpush1.bf16.xpose.msra.mxu0 0
      %1259 = vmatprep.subr.bf16.mxu0 0
      %1260 = vmatpush1.bf16.xpose.msra.mxu0 0
      %1261 = vmatprep.subr.bf16.mxu0 0
      %1262 = vmatpush1.bf16.xpose.msra.mxu0 0
      %1263 = vmatprep.subr.bf16.mxu0 0
      %1264 = vmatpush1.bf16.xpose.msra.mxu0 0
      %1265 = vmatprep.subr.bf16.mxu0 0
      %1266 = vmatpush1.bf16.xpose.msra.mxu0 0
      %1267 = vmatprep.subr.bf16.mxu0 0
      %1268 = vmatpush1.bf16.xpose.msra.mxu0 0
      %1269 = vmatprep.subr.bf16.mxu0 0
      %1270 = vmatpush1.bf16.xpose.msra.mxu0 0
      %1271 = vmatprep.subr.bf16.mxu0 0
      %1272 = vmatpush1.bf16.xpose.msra.mxu0 %v1255
      %1273 = vmatprep.subr.bf16.mxu0 0
      %1274 = vmatpush2.bf16.xpose.msra.mxu0 0
      %1275 = vmatprep.subr.bf16.mxu0 0
      %1276 = vmatpush2.bf16.xpose.msra.mxu0 0
      %1277 = vmatprep.subr.bf16.mxu0 0
      %1278 = vmatpush2.bf16.xpose.msra.mxu0 0
      %1279 = vmatprep.subr.bf16.mxu0 0
      %1280 = vmatpush2.bf16.xpose.msra.mxu0 0
      %1281 = vmatprep.subr.bf16.mxu0 0
      %1282 = vmatpush2.bf16.xpose.msra.mxu0 0
      %1283 = vmatprep.subr.bf16.mxu0 0
      %1284 = vmatpush2.bf16.xpose.msra.mxu0 0
      %1285 = vmatprep.subr.bf16.mxu0 0
      %1286 = vmatpush2.bf16.xpose.msra.mxu0 0
      %1287 = vmatprep.subr.bf16.mxu0 0
      %1288 = vmatpush2.bf16.xpose.msra.mxu0 0
      %1289 = vmatprep.mubr.bf16.mxu0 0
      %1290 = vmatmul.mubr.bf16.gmra.mxu0 %v1252
      %v1291 = vpop.f32.mrf.mxu0
      %v1292 = vadd.f32 0.0, %v1291
      %v1293 = vpop.f32.mrf.mxu0
      %v1294 = vpop.f32.mrf.mxu0
      %v1295 = vadd.f32 0.0, %v1294
      %v1296 = vpop.f32.mrf.mxu0
      %1297 = vdwg.mxu0
      %v1298 = vsel %vm500, %v542, -inf
      %1299 = vmax.xlane.f32.xlu0 %v1298
      %v1300 = vpop.xlane.xlu0 %1299
      %v1301 = vsel %vm500, %v545, -inf
      %1302 = vmax.xlane.f32.xlu0 %v1301
      %v1303 = vpop.xlane.xlu0 %1302
      %v1304 = vsel %vm500, %v592, -inf
      %1305 = vmax.xlane.f32.xlu0 %v1304
      %v1306 = vpop.xlane.xlu0 %1305
      %v1307 = vsel %vm500, %v595, -inf
      %1308 = vmax.xlane.f32.xlu0 %v1307
      %v1309 = vpop.xlane.xlu0 %1308
      %v1310 = vsel %vm500, %v642, -inf
      %1311 = vmax.xlane.f32.xlu0 %v1310
      %v1312 = vpop.xlane.xlu0 %1311
      %v1313 = vsel %vm500, %v645, -inf
      %1314 = vmax.xlane.f32.xlu0 %v1313
      %v1315 = vpop.xlane.xlu0 %1314
      %v1316 = vsel %vm500, %v692, -inf
      %1317 = vmax.xlane.f32.xlu0 %v1316
      %v1318 = vpop.xlane.xlu0 %1317
      %v1319 = vsel %vm500, %v695, -inf
      %1320 = vmax.xlane.f32.xlu0 %v1319
      %v1321 = vpop.xlane.xlu0 %1320
      %v1322 = vsel %vm500, %v742, -inf
      %1323 = vmax.xlane.f32.xlu0 %v1322
      %v1324 = vpop.xlane.xlu0 %1323
      %v1325 = vsel %vm500, %v745, -inf
      %1326 = vmax.xlane.f32.xlu0 %v1325
      %v1327 = vpop.xlane.xlu0 %1326
      %v1328 = vsel %vm500, %v792, -inf
      %1329 = vmax.xlane.f32.xlu0 %v1328
      %v1330 = vpop.xlane.xlu0 %1329
      %v1331 = vsel %vm500, %v795, -inf
      %1332 = vmax.xlane.f32.xlu0 %v1331
      %v1333 = vpop.xlane.xlu0 %1332
      %v1334 = vsel %vm500, %v842, -inf
      %1335 = vmax.xlane.f32.xlu0 %v1334
      %v1336 = vpop.xlane.xlu0 %1335
      %v1337 = vsel %vm500, %v845, -inf
      %1338 = vmax.xlane.f32.xlu0 %v1337
      %v1339 = vpop.xlane.xlu0 %1338
      %v1340 = vsel %vm500, %v892, -inf
      %1341 = vmax.xlane.f32.xlu0 %v1340
      %v1342 = vpop.xlane.xlu0 %1341
      %v1343 = vsel %vm500, %v895, -inf
      %1344 = vmax.xlane.f32.xlu0 %v1343
      %v1345 = vpop.xlane.xlu0 %1344
      %v1346 = vsel %vm500, %v942, -inf
      %1347 = vmax.xlane.f32.xlu0 %v1346
      %v1348 = vpop.xlane.xlu0 %1347
      %v1349 = vsel %vm500, %v945, -inf
      %1350 = vmax.xlane.f32.xlu0 %v1349
      %v1351 = vpop.xlane.xlu0 %1350
      %v1352 = vsel %vm500, %v992, -inf
      %1353 = vmax.xlane.f32.xlu0 %v1352
      %v1354 = vpop.xlane.xlu0 %1353
      %v1355 = vsel %vm500, %v995, -inf
      %1356 = vmax.xlane.f32.xlu0 %v1355
      %v1357 = vpop.xlane.xlu0 %1356
      %v1358 = vsel %vm500, %v1042, -inf
      %1359 = vmax.xlane.f32.xlu0 %v1358
      %v1360 = vpop.xlane.xlu0 %1359
      %v1361 = vsel %vm500, %v1045, -inf
      %1362 = vmax.xlane.f32.xlu0 %v1361
      %v1363 = vpop.xlane.xlu0 %1362
      %v1364 = vsel %vm500, %v1092, -inf
      %1365 = vmax.xlane.f32.xlu0 %v1364
      %v1366 = vpop.xlane.xlu0 %1365
      %v1367 = vsel %vm500, %v1095, -inf
      %1368 = vmax.xlane.f32.xlu0 %v1367
      %v1369 = vpop.xlane.xlu0 %1368
      %v1370 = vsel %vm500, %v1142, -inf
      %1371 = vmax.xlane.f32.xlu0 %v1370
      %v1372 = vpop.xlane.xlu0 %1371
      %v1373 = vsel %vm500, %v1145, -inf
      %1374 = vmax.xlane.f32.xlu0 %v1373
      %v1375 = vpop.xlane.xlu0 %1374
      %v1376 = vsel %vm500, %v1192, -inf
      %1377 = vmax.xlane.f32.xlu0 %v1376
      %v1378 = vpop.xlane.xlu0 %1377
      %v1379 = vsel %vm500, %v1195, -inf
      %1380 = vmax.xlane.f32.xlu0 %v1379
      %v1381 = vpop.xlane.xlu0 %1380
      %v1382 = vsel %vm500, %v1242, -inf
      %1383 = vmax.xlane.f32.xlu0 %v1382
      %v1384 = vpop.xlane.xlu0 %1383
      %v1385 = vsel %vm500, %v1245, -inf
      %1386 = vmax.xlane.f32.xlu0 %v1385
      %v1387 = vpop.xlane.xlu0 %1386
      %v1388 = vsel %vm500, %v1292, -inf
      %1389 = vmax.xlane.f32.xlu0 %v1388
      %v1390 = vpop.xlane.xlu0 %1389
      %v1391 = vsel %vm500, %v1295, -inf
      %1392 = vmax.xlane.f32.xlu0 %v1391
      %v1393 = vpop.xlane.xlu0 %1392
      %v1394 = vsub.f32 %v542, %v1300
      %v1395 = vsub.f32 %v545, %v1303
      %v1396 = vsub.f32 %v592, %v1306
      %v1397 = vsub.f32 %v595, %v1309
      %v1398 = vsub.f32 %v642, %v1312
      %v1399 = vsub.f32 %v645, %v1315
      %v1400 = vsub.f32 %v692, %v1318
      %v1401 = vsub.f32 %v695, %v1321
      %v1402 = vsub.f32 %v742, %v1324
      %v1403 = vsub.f32 %v745, %v1327
      %v1404 = vsub.f32 %v792, %v1330
      %v1405 = vsub.f32 %v795, %v1333
      %v1406 = vsub.f32 %v842, %v1336
      %v1407 = vsub.f32 %v845, %v1339
      %v1408 = vsub.f32 %v892, %v1342
      %v1409 = vsub.f32 %v895, %v1345
      %v1410 = vsub.f32 %v942, %v1348
      %v1411 = vsub.f32 %v945, %v1351
      %v1412 = vsub.f32 %v992, %v1354
      %v1413 = vsub.f32 %v995, %v1357
      %v1414 = vsub.f32 %v1042, %v1360
      %v1415 = vsub.f32 %v1045, %v1363
      %v1416 = vsub.f32 %v1092, %v1366
      %v1417 = vsub.f32 %v1095, %v1369
      %v1418 = vsub.f32 %v1142, %v1372
      %v1419 = vsub.f32 %v1145, %v1375
      %v1420 = vsub.f32 %v1192, %v1378
      %v1421 = vsub.f32 %v1195, %v1381
      %v1422 = vsub.f32 %v1242, %v1384
      %v1423 = vsub.f32 %v1245, %v1387
      %v1424 = vsub.f32 %v1292, %v1390
      %v1425 = vsub.f32 %v1295, %v1393
      %v1426 = vmul.f32 %v1394, 1.442695
      %v1427 = vpow.pop %v1426
      %v1428 = vmul.f32 %v1395, 1.442695
      %v1429 = vpow.pop %v1428
      %v1430 = vmul.f32 %v1396, 1.442695
      %v1431 = vpow.pop %v1430
      %v1432 = vmul.f32 %v1397, 1.442695
      %v1433 = vpow.pop %v1432
      %v1434 = vmul.f32 %v1398, 1.442695
      %v1435 = vpow.pop %v1434
      %v1436 = vmul.f32 %v1399, 1.442695
      %v1437 = vpow.pop %v1436
      %v1438 = vmul.f32 %v1400, 1.442695
      %v1439 = vpow.pop %v1438
      %v1440 = vmul.f32 %v1401, 1.442695
      %v1441 = vpow.pop %v1440
      %v1442 = vmul.f32 %v1402, 1.442695
      %v1443 = vpow.pop %v1442
      %v1444 = vmul.f32 %v1403, 1.442695
      %v1445 = vpow.pop %v1444
      %v1446 = vmul.f32 %v1404, 1.442695
      %v1447 = vpow.pop %v1446
      %v1448 = vmul.f32 %v1405, 1.442695
      %v1449 = vpow.pop %v1448
      %v1450 = vmul.f32 %v1406, 1.442695
      %v1451 = vpow.pop %v1450
      %v1452 = vmul.f32 %v1407, 1.442695
      %v1453 = vpow.pop %v1452
      %v1454 = vmul.f32 %v1408, 1.442695
      %v1455 = vpow.pop %v1454
      %v1456 = vmul.f32 %v1409, 1.442695
      %v1457 = vpow.pop %v1456
      %v1458 = vmul.f32 %v1410, 1.442695
      %v1459 = vpow.pop %v1458
      %v1460 = vmul.f32 %v1411, 1.442695
      %v1461 = vpow.pop %v1460
      %v1462 = vmul.f32 %v1412, 1.442695
      %v1463 = vpow.pop %v1462
      %v1464 = vmul.f32 %v1413, 1.442695
      %v1465 = vpow.pop %v1464
      %v1466 = vmul.f32 %v1414, 1.442695
      %v1467 = vpow.pop %v1466
      %v1468 = vmul.f32 %v1415, 1.442695
      %v1469 = vpow.pop %v1468
      %v1470 = vmul.f32 %v1416, 1.442695
      %v1471 = vpow.pop %v1470
      %v1472 = vmul.f32 %v1417, 1.442695
      %v1473 = vpow.pop %v1472
      %v1474 = vmul.f32 %v1418, 1.442695
      %v1475 = vpow.pop %v1474
      %v1476 = vmul.f32 %v1419, 1.442695
      %v1477 = vpow.pop %v1476
      %v1478 = vmul.f32 %v1420, 1.442695
      %v1479 = vpow.pop %v1478
      %v1480 = vmul.f32 %v1421, 1.442695
      %v1481 = vpow.pop %v1480
      %v1482 = vmul.f32 %v1422, 1.442695
      %v1483 = vpow.pop %v1482
      %v1484 = vmul.f32 %v1423, 1.442695
      %v1485 = vpow.pop %v1484
      %v1486 = vmul.f32 %v1424, 1.442695
      %v1487 = vpow.pop %v1486
      %v1488 = vmul.f32 %v1425, 1.442695
      %v1489 = vpow.pop %v1488
      %v1490 = vsel %vm500, %v1427, 0.0
      %1491 = vadd.xlane.f32.xlu0 %v1490
      %v1492 = vpop.xlane.xlu0 %1491
      %v1493 = vsel %vm500, %v1429, 0.0
      %1494 = vadd.xlane.f32.xlu0 %v1493
      %v1495 = vpop.xlane.xlu0 %1494
      %v1496 = vsel %vm500, %v1431, 0.0
      %1497 = vadd.xlane.f32.xlu0 %v1496
      %v1498 = vpop.xlane.xlu0 %1497
      %v1499 = vsel %vm500, %v1433, 0.0
      %1500 = vadd.xlane.f32.xlu0 %v1499
      %v1501 = vpop.xlane.xlu0 %1500
      %v1502 = vsel %vm500, %v1435, 0.0
      %1503 = vadd.xlane.f32.xlu0 %v1502
      %v1504 = vpop.xlane.xlu0 %1503
      %v1505 = vsel %vm500, %v1437, 0.0
      %1506 = vadd.xlane.f32.xlu0 %v1505
      %v1507 = vpop.xlane.xlu0 %1506
      %v1508 = vsel %vm500, %v1439, 0.0
      %1509 = vadd.xlane.f32.xlu0 %v1508
      %v1510 = vpop.xlane.xlu0 %1509
      %v1511 = vsel %vm500, %v1441, 0.0
      %1512 = vadd.xlane.f32.xlu0 %v1511
      %v1513 = vpop.xlane.xlu0 %1512
      %v1514 = vsel %vm500, %v1443, 0.0
      %1515 = vadd.xlane.f32.xlu0 %v1514
      %v1516 = vpop.xlane.xlu0 %1515
      %v1517 = vsel %vm500, %v1445, 0.0
      %1518 = vadd.xlane.f32.xlu0 %v1517
      %v1519 = vpop.xlane.xlu0 %1518
      %v1520 = vsel %vm500, %v1447, 0.0
      %1521 = vadd.xlane.f32.xlu0 %v1520
      %v1522 = vpop.xlane.xlu0 %1521
      %v1523 = vsel %vm500, %v1449, 0.0
      %1524 = vadd.xlane.f32.xlu0 %v1523
      %v1525 = vpop.xlane.xlu0 %1524
      %v1526 = vsel %vm500, %v1451, 0.0
      %1527 = vadd.xlane.f32.xlu0 %v1526
      %v1528 = vpop.xlane.xlu0 %1527
      %v1529 = vsel %vm500, %v1453, 0.0
      %1530 = vadd.xlane.f32.xlu0 %v1529
      %v1531 = vpop.xlane.xlu0 %1530
      %v1532 = vsel %vm500, %v1455, 0.0
      %1533 = vadd.xlane.f32.xlu0 %v1532
      %v1534 = vpop.xlane.xlu0 %1533
      %v1535 = vsel %vm500, %v1457, 0.0
      %1536 = vadd.xlane.f32.xlu0 %v1535
      %v1537 = vpop.xlane.xlu0 %1536
      %v1538 = vsel %vm500, %v1459, 0.0
      %1539 = vadd.xlane.f32.xlu0 %v1538
      %v1540 = vpop.xlane.xlu0 %1539
      %v1541 = vsel %vm500, %v1461, 0.0
      %1542 = vadd.xlane.f32.xlu0 %v1541
      %v1543 = vpop.xlane.xlu0 %1542
      %v1544 = vsel %vm500, %v1463, 0.0
      %1545 = vadd.xlane.f32.xlu0 %v1544
      %v1546 = vpop.xlane.xlu0 %1545
      %v1547 = vsel %vm500, %v1465, 0.0
      %1548 = vadd.xlane.f32.xlu0 %v1547
      %v1549 = vpop.xlane.xlu0 %1548
      %v1550 = vsel %vm500, %v1467, 0.0
      %1551 = vadd.xlane.f32.xlu0 %v1550
      %v1552 = vpop.xlane.xlu0 %1551
      %v1553 = vsel %vm500, %v1469, 0.0
      %1554 = vadd.xlane.f32.xlu0 %v1553
      %v1555 = vpop.xlane.xlu0 %1554
      %v1556 = vsel %vm500, %v1471, 0.0
      %1557 = vadd.xlane.f32.xlu0 %v1556
      %v1558 = vpop.xlane.xlu0 %1557
      %v1559 = vsel %vm500, %v1473, 0.0
      %1560 = vadd.xlane.f32.xlu0 %v1559
      %v1561 = vpop.xlane.xlu0 %1560
      %v1562 = vsel %vm500, %v1475, 0.0
      %1563 = vadd.xlane.f32.xlu0 %v1562
      %v1564 = vpop.xlane.xlu0 %1563
      %v1565 = vsel %vm500, %v1477, 0.0
      %1566 = vadd.xlane.f32.xlu0 %v1565
      %v1567 = vpop.xlane.xlu0 %1566
      %v1568 = vsel %vm500, %v1479, 0.0
      %1569 = vadd.xlane.f32.xlu0 %v1568
      %v1570 = vpop.xlane.xlu0 %1569
      %v1571 = vsel %vm500, %v1481, 0.0
      %1572 = vadd.xlane.f32.xlu0 %v1571
      %v1573 = vpop.xlane.xlu0 %1572
      %v1574 = vsel %vm500, %v1483, 0.0
      %1575 = vadd.xlane.f32.xlu0 %v1574
      %v1576 = vpop.xlane.xlu0 %1575
      %v1577 = vsel %vm500, %v1485, 0.0
      %1578 = vadd.xlane.f32.xlu0 %v1577
      %v1579 = vpop.xlane.xlu0 %1578
      %v1580 = vsel %vm500, %v1487, 0.0
      %1581 = vadd.xlane.f32.xlu0 %v1580
      %v1582 = vpop.xlane.xlu0 %1581
      %v1583 = vsel %vm500, %v1489, 0.0
      %1584 = vadd.xlane.f32.xlu0 %v1583
      %v1585 = vpop.xlane.xlu0 %1584
      %v1586 = vrcp.pop %v1492
      %v1587 = vrcp.pop %v1495
      %v1588 = vrcp.pop %v1498
      %v1589 = vrcp.pop %v1501
      %v1590 = vrcp.pop %v1504
      %v1591 = vrcp.pop %v1507
      %v1592 = vrcp.pop %v1510
      %v1593 = vrcp.pop %v1513
      %v1594 = vrcp.pop %v1516
      %v1595 = vrcp.pop %v1519
      %v1596 = vrcp.pop %v1522
      %v1597 = vrcp.pop %v1525
      %v1598 = vrcp.pop %v1528
      %v1599 = vrcp.pop %v1531
      %v1600 = vrcp.pop %v1534
      %v1601 = vrcp.pop %v1537
      %v1602 = vrcp.pop %v1540
      %v1603 = vrcp.pop %v1543
      %v1604 = vrcp.pop %v1546
      %v1605 = vrcp.pop %v1549
      %v1606 = vrcp.pop %v1552
      %v1607 = vrcp.pop %v1555
      %v1608 = vrcp.pop %v1558
      %v1609 = vrcp.pop %v1561
      %v1610 = vrcp.pop %v1564
      %v1611 = vrcp.pop %v1567
      %v1612 = vrcp.pop %v1570
      %v1613 = vrcp.pop %v1573
      %v1614 = vrcp.pop %v1576
      %v1615 = vrcp.pop %v1579
      %v1616 = vrcp.pop %v1582
      %v1617 = vrcp.pop %v1585
      %v1618 = vmul.f32 %v1427, %v1586
      %v1619 = vmul.f32 %v1429, %v1587
      %v1620 = vmul.f32 %v1431, %v1588
      %v1621 = vmul.f32 %v1433, %v1589
      %v1622 = vmul.f32 %v1435, %v1590
      %v1623 = vmul.f32 %v1437, %v1591
      %v1624 = vmul.f32 %v1439, %v1592
      %v1625 = vmul.f32 %v1441, %v1593
      %v1626 = vmul.f32 %v1443, %v1594
      %v1627 = vmul.f32 %v1445, %v1595
      %v1628 = vmul.f32 %v1447, %v1596
      %v1629 = vmul.f32 %v1449, %v1597
      %v1630 = vmul.f32 %v1451, %v1598
      %v1631 = vmul.f32 %v1453, %v1599
      %v1632 = vmul.f32 %v1455, %v1600
      %v1633 = vmul.f32 %v1457, %v1601
      %v1634 = vmul.f32 %v1459, %v1602
      %v1635 = vmul.f32 %v1461, %v1603
      %v1636 = vmul.f32 %v1463, %v1604
      %v1637 = vmul.f32 %v1465, %v1605
      %v1638 = vmul.f32 %v1467, %v1606
      %v1639 = vmul.f32 %v1469, %v1607
      %v1640 = vmul.f32 %v1471, %v1608
      %v1641 = vmul.f32 %v1473, %v1609
      %v1642 = vmul.f32 %v1475, %v1610
      %v1643 = vmul.f32 %v1477, %v1611
      %v1644 = vmul.f32 %v1479, %v1612
      %v1645 = vmul.f32 %v1481, %v1613
      %v1646 = vmul.f32 %v1483, %v1614
      %v1647 = vmul.f32 %v1485, %v1615
      %v1648 = vmul.f32 %v1487, %v1616
      %v1649 = vmul.f32 %v1489, %v1617
      %v1650 = vpack.c.bf16 %v1619, %v1618
      %v1651 = vpack.c.bf16 %v1621, %v1620
      %v1652 = vpack.c.bf16 %v1623, %v1622
      %v1653 = vpack.c.bf16 %v1625, %v1624
      %v1654 = vpack.c.bf16 %v1627, %v1626
      %v1655 = vpack.c.bf16 %v1629, %v1628
      %v1656 = vpack.c.bf16 %v1631, %v1630
      %v1657 = vpack.c.bf16 %v1633, %v1632
      %v1658 = vpack.c.bf16 %v1635, %v1634
      %v1659 = vpack.c.bf16 %v1637, %v1636
      %v1660 = vpack.c.bf16 %v1639, %v1638
      %v1661 = vpack.c.bf16 %v1641, %v1640
      %v1662 = vpack.c.bf16 %v1643, %v1642
      %v1663 = vpack.c.bf16 %v1645, %v1644
      %v1664 = vpack.c.bf16 %v1647, %v1646
      %v1665 = vpack.c.bf16 %v1649, %v1648
      %1666 = vrot.lane.b32.xlu0 %v481, 64
      %v1667 = vpop.permute.xlu0 %1666
      %v1670 = vsel %vm500, %v1650, 0
      %1672 = vmatprep.subr.bf16.mxu0 0
      %1673 = vmatpush1.bf16.msra.mxu0 0
      %1674 = vmatprep.subr.bf16.mxu0 0
      %1675 = vmatpush1.bf16.msra.mxu0 0
      %1676 = vmatprep.subr.bf16.mxu0 0
      %1677 = vmatpush1.bf16.msra.mxu0 0
      %1678 = vmatprep.subr.bf16.mxu0 0
      %1679 = vmatpush1.bf16.msra.mxu0 0
      %1680 = vmatprep.subr.bf16.mxu0 0
      %1681 = vmatpush1.bf16.msra.mxu0 0
      %1682 = vmatprep.subr.bf16.mxu0 0
      %1683 = vmatpush1.bf16.msra.mxu0 0
      %1684 = vmatprep.subr.bf16.mxu0 0
      %1685 = vmatpush1.bf16.msra.mxu0 0
      %1686 = vmatprep.subr.bf16.mxu0 0
      %1687 = vmatpush1.bf16.msra.mxu0 %v1667
      %1688 = vmatprep.subr.bf16.mxu0 0
      %1689 = vmatpush2.bf16.msra.mxu0 0
      %1690 = vmatprep.subr.bf16.mxu0 0
      %1691 = vmatpush2.bf16.msra.mxu0 0
      %1692 = vmatprep.subr.bf16.mxu0 0
      %1693 = vmatpush2.bf16.msra.mxu0 0
      %1694 = vmatprep.subr.bf16.mxu0 0
      %1695 = vmatpush2.bf16.msra.mxu0 0
      %1696 = vmatprep.subr.bf16.mxu0 0
      %1697 = vmatpush2.bf16.msra.mxu0 0
      %1698 = vmatprep.subr.bf16.mxu0 0
      %1699 = vmatpush2.bf16.msra.mxu0 0
      %1700 = vmatprep.subr.bf16.mxu0 0
      %1701 = vmatpush2.bf16.msra.mxu0 0
      %1702 = vmatprep.subr.bf16.mxu0 0
      %1703 = vmatpush2.bf16.msra.mxu0 0
      %1704 = vmatprep.mubr.bf16.mxu0 0
      %1705 = vmatmul.mubr.bf16.gmra.mxu0 %v1670
      %v1706 = vpop.f32.mrf.mxu0
      %v1707 = vadd.f32 0.0, %v1706
      %v1708 = vpop.f32.mrf.mxu0
      %v1709 = vpop.f32.mrf.mxu0
      %v1710 = vadd.f32 0.0, %v1709
      %v1711 = vpop.f32.mrf.mxu0
      %1712 = vdwg.mxu0
      %1713 = vrot.lane.b32.xlu0 %v482, 64
      %v1714 = vpop.permute.xlu0 %1713
      %v1717 = vsel %vm500, %v1651, 0
      %1719 = vmatprep.subr.bf16.mxu0 0
      %1720 = vmatpush1.bf16.msra.mxu0 0
      %1721 = vmatprep.subr.bf16.mxu0 0
      %1722 = vmatpush1.bf16.msra.mxu0 0
      %1723 = vmatprep.subr.bf16.mxu0 0
      %1724 = vmatpush1.bf16.msra.mxu0 0
      %1725 = vmatprep.subr.bf16.mxu0 0
      %1726 = vmatpush1.bf16.msra.mxu0 0
      %1727 = vmatprep.subr.bf16.mxu0 0
      %1728 = vmatpush1.bf16.msra.mxu0 0
      %1729 = vmatprep.subr.bf16.mxu0 0
      %1730 = vmatpush1.bf16.msra.mxu0 0
      %1731 = vmatprep.subr.bf16.mxu0 0
      %1732 = vmatpush1.bf16.msra.mxu0 0
      %1733 = vmatprep.subr.bf16.mxu0 0
      %1734 = vmatpush1.bf16.msra.mxu0 %v1714
      %1735 = vmatprep.subr.bf16.mxu0 0
      %1736 = vmatpush2.bf16.msra.mxu0 0
      %1737 = vmatprep.subr.bf16.mxu0 0
      %1738 = vmatpush2.bf16.msra.mxu0 0
      %1739 = vmatprep.subr.bf16.mxu0 0
      %1740 = vmatpush2.bf16.msra.mxu0 0
      %1741 = vmatprep.subr.bf16.mxu0 0
      %1742 = vmatpush2.bf16.msra.mxu0 0
      %1743 = vmatprep.subr.bf16.mxu0 0
      %1744 = vmatpush2.bf16.msra.mxu0 0
      %1745 = vmatprep.subr.bf16.mxu0 0
      %1746 = vmatpush2.bf16.msra.mxu0 0
      %1747 = vmatprep.subr.bf16.mxu0 0
      %1748 = vmatpush2.bf16.msra.mxu0 0
      %1749 = vmatprep.subr.bf16.mxu0 0
      %1750 = vmatpush2.bf16.msra.mxu0 0
      %1751 = vmatprep.mubr.bf16.mxu0 0
      %1752 = vmatmul.mubr.bf16.gmra.mxu0 %v1717
      %v1753 = vpop.f32.mrf.mxu0
      %v1754 = vadd.f32 0.0, %v1753
      %v1755 = vpop.f32.mrf.mxu0
      %v1756 = vpop.f32.mrf.mxu0
      %v1757 = vadd.f32 0.0, %v1756
      %v1758 = vpop.f32.mrf.mxu0
      %1759 = vdwg.mxu0
      %1760 = vrot.lane.b32.xlu0 %v483, 64
      %v1761 = vpop.permute.xlu0 %1760
      %v1764 = vsel %vm500, %v1652, 0
      %1766 = vmatprep.subr.bf16.mxu0 0
      %1767 = vmatpush1.bf16.msra.mxu0 0
      %1768 = vmatprep.subr.bf16.mxu0 0
      %1769 = vmatpush1.bf16.msra.mxu0 0
      %1770 = vmatprep.subr.bf16.mxu0 0
      %1771 = vmatpush1.bf16.msra.mxu0 0
      %1772 = vmatprep.subr.bf16.mxu0 0
      %1773 = vmatpush1.bf16.msra.mxu0 0
      %1774 = vmatprep.subr.bf16.mxu0 0
      %1775 = vmatpush1.bf16.msra.mxu0 0
      %1776 = vmatprep.subr.bf16.mxu0 0
      %1777 = vmatpush1.bf16.msra.mxu0 0
      %1778 = vmatprep.subr.bf16.mxu0 0
      %1779 = vmatpush1.bf16.msra.mxu0 0
      %1780 = vmatprep.subr.bf16.mxu0 0
      %1781 = vmatpush1.bf16.msra.mxu0 %v1761
      %1782 = vmatprep.subr.bf16.mxu0 0
      %1783 = vmatpush2.bf16.msra.mxu0 0
      %1784 = vmatprep.subr.bf16.mxu0 0
      %1785 = vmatpush2.bf16.msra.mxu0 0
      %1786 = vmatprep.subr.bf16.mxu0 0
      %1787 = vmatpush2.bf16.msra.mxu0 0
      %1788 = vmatprep.subr.bf16.mxu0 0
      %1789 = vmatpush2.bf16.msra.mxu0 0
      %1790 = vmatprep.subr.bf16.mxu0 0
      %1791 = vmatpush2.bf16.msra.mxu0 0
      %1792 = vmatprep.subr.bf16.mxu0 0
      %1793 = vmatpush2.bf16.msra.mxu0 0
      %1794 = vmatprep.subr.bf16.mxu0 0
      %1795 = vmatpush2.bf16.msra.mxu0 0
      %1796 = vmatprep.subr.bf16.mxu0 0
      %1797 = vmatpush2.bf16.msra.mxu0 0
      %1798 = vmatprep.mubr.bf16.mxu0 0
      %1799 = vmatmul.mubr.bf16.gmra.mxu0 %v1764
      %v1800 = vpop.f32.mrf.mxu0
      %v1801 = vadd.f32 0.0, %v1800
      %v1802 = vpop.f32.mrf.mxu0
      %v1803 = vpop.f32.mrf.mxu0
      %v1804 = vadd.f32 0.0, %v1803
      %v1805 = vpop.f32.mrf.mxu0
      %1806 = vdwg.mxu0
      %1807 = vrot.lane.b32.xlu0 %v484, 64
      %v1808 = vpop.permute.xlu0 %1807
      %v1811 = vsel %vm500, %v1653, 0
      %1813 = vmatprep.subr.bf16.mxu0 0
      %1814 = vmatpush1.bf16.msra.mxu0 0
      %1815 = vmatprep.subr.bf16.mxu0 0
      %1816 = vmatpush1.bf16.msra.mxu0 0
      %1817 = vmatprep.subr.bf16.mxu0 0
      %1818 = vmatpush1.bf16.msra.mxu0 0
      %1819 = vmatprep.subr.bf16.mxu0 0
      %1820 = vmatpush1.bf16.msra.mxu0 0
      %1821 = vmatprep.subr.bf16.mxu0 0
      %1822 = vmatpush1.bf16.msra.mxu0 0
      %1823 = vmatprep.subr.bf16.mxu0 0
      %1824 = vmatpush1.bf16.msra.mxu0 0
      %1825 = vmatprep.subr.bf16.mxu0 0
      %1826 = vmatpush1.bf16.msra.mxu0 0
      %1827 = vmatprep.subr.bf16.mxu0 0
      %1828 = vmatpush1.bf16.msra.mxu0 %v1808
      %1829 = vmatprep.subr.bf16.mxu0 0
      %1830 = vmatpush2.bf16.msra.mxu0 0
      %1831 = vmatprep.subr.bf16.mxu0 0
      %1832 = vmatpush2.bf16.msra.mxu0 0
      %1833 = vmatprep.subr.bf16.mxu0 0
      %1834 = vmatpush2.bf16.msra.mxu0 0
      %1835 = vmatprep.subr.bf16.mxu0 0
      %1836 = vmatpush2.bf16.msra.mxu0 0
      %1837 = vmatprep.subr.bf16.mxu0 0
      %1838 = vmatpush2.bf16.msra.mxu0 0
      %1839 = vmatprep.subr.bf16.mxu0 0
      %1840 = vmatpush2.bf16.msra.mxu0 0
      %1841 = vmatprep.subr.bf16.mxu0 0
      %1842 = vmatpush2.bf16.msra.mxu0 0
      %1843 = vmatprep.subr.bf16.mxu0 0
      %1844 = vmatpush2.bf16.msra.mxu0 0
      %1845 = vmatprep.mubr.bf16.mxu0 0
      %1846 = vmatmul.mubr.bf16.gmra.mxu0 %v1811
      %v1847 = vpop.f32.mrf.mxu0
      %v1848 = vadd.f32 0.0, %v1847
      %v1849 = vpop.f32.mrf.mxu0
      %v1850 = vpop.f32.mrf.mxu0
      %v1851 = vadd.f32 0.0, %v1850
      %v1852 = vpop.f32.mrf.mxu0
      %1853 = vdwg.mxu0
      %1854 = vrot.lane.b32.xlu0 %v485, 64
      %v1855 = vpop.permute.xlu0 %1854
      %v1858 = vsel %vm500, %v1654, 0
      %1860 = vmatprep.subr.bf16.mxu0 0
      %1861 = vmatpush1.bf16.msra.mxu0 0
      %1862 = vmatprep.subr.bf16.mxu0 0
      %1863 = vmatpush1.bf16.msra.mxu0 0
      %1864 = vmatprep.subr.bf16.mxu0 0
      %1865 = vmatpush1.bf16.msra.mxu0 0
      %1866 = vmatprep.subr.bf16.mxu0 0
      %1867 = vmatpush1.bf16.msra.mxu0 0
      %1868 = vmatprep.subr.bf16.mxu0 0
      %1869 = vmatpush1.bf16.msra.mxu0 0
      %1870 = vmatprep.subr.bf16.mxu0 0
      %1871 = vmatpush1.bf16.msra.mxu0 0
      %1872 = vmatprep.subr.bf16.mxu0 0
      %1873 = vmatpush1.bf16.msra.mxu0 0
      %1874 = vmatprep.subr.bf16.mxu0 0
      %1875 = vmatpush1.bf16.msra.mxu0 %v1855
      %1876 = vmatprep.subr.bf16.mxu0 0
      %1877 = vmatpush2.bf16.msra.mxu0 0
      %1878 = vmatprep.subr.bf16.mxu0 0
      %1879 = vmatpush2.bf16.msra.mxu0 0
      %1880 = vmatprep.subr.bf16.mxu0 0
      %1881 = vmatpush2.bf16.msra.mxu0 0
      %1882 = vmatprep.subr.bf16.mxu0 0
      %1883 = vmatpush2.bf16.msra.mxu0 0
      %1884 = vmatprep.subr.bf16.mxu0 0
      %1885 = vmatpush2.bf16.msra.mxu0 0
      %1886 = vmatprep.subr.bf16.mxu0 0
      %1887 = vmatpush2.bf16.msra.mxu0 0
      %1888 = vmatprep.subr.bf16.mxu0 0
      %1889 = vmatpush2.bf16.msra.mxu0 0
      %1890 = vmatprep.subr.bf16.mxu0 0
      %1891 = vmatpush2.bf16.msra.mxu0 0
      %1892 = vmatprep.mubr.bf16.mxu0 0
      %1893 = vmatmul.mubr.bf16.gmra.mxu0 %v1858
      %v1894 = vpop.f32.mrf.mxu0
      %v1895 = vadd.f32 0.0, %v1894
      %v1896 = vpop.f32.mrf.mxu0
      %v1897 = vpop.f32.mrf.mxu0
      %v1898 = vadd.f32 0.0, %v1897
      %v1899 = vpop.f32.mrf.mxu0
      %1900 = vdwg.mxu0
      %1901 = vrot.lane.b32.xlu0 %v486, 64
      %v1902 = vpop.permute.xlu0 %1901
      %v1905 = vsel %vm500, %v1655, 0
      %1907 = vmatprep.subr.bf16.mxu0 0
      %1908 = vmatpush1.bf16.msra.mxu0 0
      %1909 = vmatprep.subr.bf16.mxu0 0
      %1910 = vmatpush1.bf16.msra.mxu0 0
      %1911 = vmatprep.subr.bf16.mxu0 0
      %1912 = vmatpush1.bf16.msra.mxu0 0
      %1913 = vmatprep.subr.bf16.mxu0 0
      %1914 = vmatpush1.bf16.msra.mxu0 0
      %1915 = vmatprep.subr.bf16.mxu0 0
      %1916 = vmatpush1.bf16.msra.mxu0 0
      %1917 = vmatprep.subr.bf16.mxu0 0
      %1918 = vmatpush1.bf16.msra.mxu0 0
      %1919 = vmatprep.subr.bf16.mxu0 0
      %1920 = vmatpush1.bf16.msra.mxu0 0
      %1921 = vmatprep.subr.bf16.mxu0 0
      %1922 = vmatpush1.bf16.msra.mxu0 %v1902
      %1923 = vmatprep.subr.bf16.mxu0 0
      %1924 = vmatpush2.bf16.msra.mxu0 0
      %1925 = vmatprep.subr.bf16.mxu0 0
      %1926 = vmatpush2.bf16.msra.mxu0 0
      %1927 = vmatprep.subr.bf16.mxu0 0
      %1928 = vmatpush2.bf16.msra.mxu0 0
      %1929 = vmatprep.subr.bf16.mxu0 0
      %1930 = vmatpush2.bf16.msra.mxu0 0
      %1931 = vmatprep.subr.bf16.mxu0 0
      %1932 = vmatpush2.bf16.msra.mxu0 0
      %1933 = vmatprep.subr.bf16.mxu0 0
      %1934 = vmatpush2.bf16.msra.mxu0 0
      %1935 = vmatprep.subr.bf16.mxu0 0
      %1936 = vmatpush2.bf16.msra.mxu0 0
      %1937 = vmatprep.subr.bf16.mxu0 0
      %1938 = vmatpush2.bf16.msra.mxu0 0
      %1939 = vmatprep.mubr.bf16.mxu0 0
      %1940 = vmatmul.mubr.bf16.gmra.mxu0 %v1905
      %v1941 = vpop.f32.mrf.mxu0
      %v1942 = vadd.f32 0.0, %v1941
      %v1943 = vpop.f32.mrf.mxu0
      %v1944 = vpop.f32.mrf.mxu0
      %v1945 = vadd.f32 0.0, %v1944
      %v1946 = vpop.f32.mrf.mxu0
      %1947 = vdwg.mxu0
      %1948 = vrot.lane.b32.xlu0 %v487, 64
      %v1949 = vpop.permute.xlu0 %1948
      %v1952 = vsel %vm500, %v1656, 0
      %1954 = vmatprep.subr.bf16.mxu0 0
      %1955 = vmatpush1.bf16.msra.mxu0 0
      %1956 = vmatprep.subr.bf16.mxu0 0
      %1957 = vmatpush1.bf16.msra.mxu0 0
      %1958 = vmatprep.subr.bf16.mxu0 0
      %1959 = vmatpush1.bf16.msra.mxu0 0
      %1960 = vmatprep.subr.bf16.mxu0 0
      %1961 = vmatpush1.bf16.msra.mxu0 0
      %1962 = vmatprep.subr.bf16.mxu0 0
      %1963 = vmatpush1.bf16.msra.mxu0 0
      %1964 = vmatprep.subr.bf16.mxu0 0
      %1965 = vmatpush1.bf16.msra.mxu0 0
      %1966 = vmatprep.subr.bf16.mxu0 0
      %1967 = vmatpush1.bf16.msra.mxu0 0
      %1968 = vmatprep.subr.bf16.mxu0 0
      %1969 = vmatpush1.bf16.msra.mxu0 %v1949
      %1970 = vmatprep.subr.bf16.mxu0 0
      %1971 = vmatpush2.bf16.msra.mxu0 0
      %1972 = vmatprep.subr.bf16.mxu0 0
      %1973 = vmatpush2.bf16.msra.mxu0 0
      %1974 = vmatprep.subr.bf16.mxu0 0
      %1975 = vmatpush2.bf16.msra.mxu0 0
      %1976 = vmatprep.subr.bf16.mxu0 0
      %1977 = vmatpush2.bf16.msra.mxu0 0
      %1978 = vmatprep.subr.bf16.mxu0 0
      %1979 = vmatpush2.bf16.msra.mxu0 0
      %1980 = vmatprep.subr.bf16.mxu0 0
      %1981 = vmatpush2.bf16.msra.mxu0 0
      %1982 = vmatprep.subr.bf16.mxu0 0
      %1983 = vmatpush2.bf16.msra.mxu0 0
      %1984 = vmatprep.subr.bf16.mxu0 0
      %1985 = vmatpush2.bf16.msra.mxu0 0
      %1986 = vmatprep.mubr.bf16.mxu0 0
      %1987 = vmatmul.mubr.bf16.gmra.mxu0 %v1952
      %v1988 = vpop.f32.mrf.mxu0
      %v1989 = vadd.f32 0.0, %v1988
      %v1990 = vpop.f32.mrf.mxu0
      %v1991 = vpop.f32.mrf.mxu0
      %v1992 = vadd.f32 0.0, %v1991
      %v1993 = vpop.f32.mrf.mxu0
      %1994 = vdwg.mxu0
      %1995 = vrot.lane.b32.xlu0 %v488, 64
      %v1996 = vpop.permute.xlu0 %1995
      %v1999 = vsel %vm500, %v1657, 0
      %2001 = vmatprep.subr.bf16.mxu0 0
      %2002 = vmatpush1.bf16.msra.mxu0 0
      %2003 = vmatprep.subr.bf16.mxu0 0
      %2004 = vmatpush1.bf16.msra.mxu0 0
      %2005 = vmatprep.subr.bf16.mxu0 0
      %2006 = vmatpush1.bf16.msra.mxu0 0
      %2007 = vmatprep.subr.bf16.mxu0 0
      %2008 = vmatpush1.bf16.msra.mxu0 0
      %2009 = vmatprep.subr.bf16.mxu0 0
      %2010 = vmatpush1.bf16.msra.mxu0 0
      %2011 = vmatprep.subr.bf16.mxu0 0
      %2012 = vmatpush1.bf16.msra.mxu0 0
      %2013 = vmatprep.subr.bf16.mxu0 0
      %2014 = vmatpush1.bf16.msra.mxu0 0
      %2015 = vmatprep.subr.bf16.mxu0 0
      %2016 = vmatpush1.bf16.msra.mxu0 %v1996
      %2017 = vmatprep.subr.bf16.mxu0 0
      %2018 = vmatpush2.bf16.msra.mxu0 0
      %2019 = vmatprep.subr.bf16.mxu0 0
      %2020 = vmatpush2.bf16.msra.mxu0 0
      %2021 = vmatprep.subr.bf16.mxu0 0
      %2022 = vmatpush2.bf16.msra.mxu0 0
      %2023 = vmatprep.subr.bf16.mxu0 0
      %2024 = vmatpush2.bf16.msra.mxu0 0
      %2025 = vmatprep.subr.bf16.mxu0 0
      %2026 = vmatpush2.bf16.msra.mxu0 0
      %2027 = vmatprep.subr.bf16.mxu0 0
      %2028 = vmatpush2.bf16.msra.mxu0 0
      %2029 = vmatprep.subr.bf16.mxu0 0
      %2030 = vmatpush2.bf16.msra.mxu0 0
      %2031 = vmatprep.subr.bf16.mxu0 0
      %2032 = vmatpush2.bf16.msra.mxu0 0
      %2033 = vmatprep.mubr.bf16.mxu0 0
      %2034 = vmatmul.mubr.bf16.gmra.mxu0 %v1999
      %v2035 = vpop.f32.mrf.mxu0
      %v2036 = vadd.f32 0.0, %v2035
      %v2037 = vpop.f32.mrf.mxu0
      %v2038 = vpop.f32.mrf.mxu0
      %v2039 = vadd.f32 0.0, %v2038
      %v2040 = vpop.f32.mrf.mxu0
      %2041 = vdwg.mxu0
      %2042 = vrot.lane.b32.xlu0 %v489, 64
      %v2043 = vpop.permute.xlu0 %2042
      %v2046 = vsel %vm500, %v1658, 0
      %2048 = vmatprep.subr.bf16.mxu0 0
      %2049 = vmatpush1.bf16.msra.mxu0 0
      %2050 = vmatprep.subr.bf16.mxu0 0
      %2051 = vmatpush1.bf16.msra.mxu0 0
      %2052 = vmatprep.subr.bf16.mxu0 0
      %2053 = vmatpush1.bf16.msra.mxu0 0
      %2054 = vmatprep.subr.bf16.mxu0 0
      %2055 = vmatpush1.bf16.msra.mxu0 0
      %2056 = vmatprep.subr.bf16.mxu0 0
      %2057 = vmatpush1.bf16.msra.mxu0 0
      %2058 = vmatprep.subr.bf16.mxu0 0
      %2059 = vmatpush1.bf16.msra.mxu0 0
      %2060 = vmatprep.subr.bf16.mxu0 0
      %2061 = vmatpush1.bf16.msra.mxu0 0
      %2062 = vmatprep.subr.bf16.mxu0 0
      %2063 = vmatpush1.bf16.msra.mxu0 %v2043
      %2064 = vmatprep.subr.bf16.mxu0 0
      %2065 = vmatpush2.bf16.msra.mxu0 0
      %2066 = vmatprep.subr.bf16.mxu0 0
      %2067 = vmatpush2.bf16.msra.mxu0 0
      %2068 = vmatprep.subr.bf16.mxu0 0
      %2069 = vmatpush2.bf16.msra.mxu0 0
      %2070 = vmatprep.subr.bf16.mxu0 0
      %2071 = vmatpush2.bf16.msra.mxu0 0
      %2072 = vmatprep.subr.bf16.mxu0 0
      %2073 = vmatpush2.bf16.msra.mxu0 0
      %2074 = vmatprep.subr.bf16.mxu0 0
      %2075 = vmatpush2.bf16.msra.mxu0 0
      %2076 = vmatprep.subr.bf16.mxu0 0
      %2077 = vmatpush2.bf16.msra.mxu0 0
      %2078 = vmatprep.subr.bf16.mxu0 0
      %2079 = vmatpush2.bf16.msra.mxu0 0
      %2080 = vmatprep.mubr.bf16.mxu0 0
      %2081 = vmatmul.mubr.bf16.gmra.mxu0 %v2046
      %v2082 = vpop.f32.mrf.mxu0
      %v2083 = vadd.f32 0.0, %v2082
      %v2084 = vpop.f32.mrf.mxu0
      %v2085 = vpop.f32.mrf.mxu0
      %v2086 = vadd.f32 0.0, %v2085
      %v2087 = vpop.f32.mrf.mxu0
      %2088 = vdwg.mxu0
      %2089 = vrot.lane.b32.xlu0 %v490, 64
      %v2090 = vpop.permute.xlu0 %2089
      %v2093 = vsel %vm500, %v1659, 0
      %2095 = vmatprep.subr.bf16.mxu0 0
      %2096 = vmatpush1.bf16.msra.mxu0 0
      %2097 = vmatprep.subr.bf16.mxu0 0
      %2098 = vmatpush1.bf16.msra.mxu0 0
      %2099 = vmatprep.subr.bf16.mxu0 0
      %2100 = vmatpush1.bf16.msra.mxu0 0
      %2101 = vmatprep.subr.bf16.mxu0 0
      %2102 = vmatpush1.bf16.msra.mxu0 0
      %2103 = vmatprep.subr.bf16.mxu0 0
      %2104 = vmatpush1.bf16.msra.mxu0 0
      %2105 = vmatprep.subr.bf16.mxu0 0
      %2106 = vmatpush1.bf16.msra.mxu0 0
      %2107 = vmatprep.subr.bf16.mxu0 0
      %2108 = vmatpush1.bf16.msra.mxu0 0
      %2109 = vmatprep.subr.bf16.mxu0 0
      %2110 = vmatpush1.bf16.msra.mxu0 %v2090
      %2111 = vmatprep.subr.bf16.mxu0 0
      %2112 = vmatpush2.bf16.msra.mxu0 0
      %2113 = vmatprep.subr.bf16.mxu0 0
      %2114 = vmatpush2.bf16.msra.mxu0 0
      %2115 = vmatprep.subr.bf16.mxu0 0
      %2116 = vmatpush2.bf16.msra.mxu0 0
      %2117 = vmatprep.subr.bf16.mxu0 0
      %2118 = vmatpush2.bf16.msra.mxu0 0
      %2119 = vmatprep.subr.bf16.mxu0 0
      %2120 = vmatpush2.bf16.msra.mxu0 0
      %2121 = vmatprep.subr.bf16.mxu0 0
      %2122 = vmatpush2.bf16.msra.mxu0 0
      %2123 = vmatprep.subr.bf16.mxu0 0
      %2124 = vmatpush2.bf16.msra.mxu0 0
      %2125 = vmatprep.subr.bf16.mxu0 0
      %2126 = vmatpush2.bf16.msra.mxu0 0
      %2127 = vmatprep.mubr.bf16.mxu0 0
      %2128 = vmatmul.mubr.bf16.gmra.mxu0 %v2093
      %v2129 = vpop.f32.mrf.mxu0
      %v2130 = vadd.f32 0.0, %v2129
      %v2131 = vpop.f32.mrf.mxu0
      %v2132 = vpop.f32.mrf.mxu0
      %v2133 = vadd.f32 0.0, %v2132
      %v2134 = vpop.f32.mrf.mxu0
      %2135 = vdwg.mxu0
      %2136 = vrot.lane.b32.xlu0 %v491, 64
      %v2137 = vpop.permute.xlu0 %2136
      %v2140 = vsel %vm500, %v1660, 0
      %2142 = vmatprep.subr.bf16.mxu0 0
      %2143 = vmatpush1.bf16.msra.mxu0 0
      %2144 = vmatprep.subr.bf16.mxu0 0
      %2145 = vmatpush1.bf16.msra.mxu0 0
      %2146 = vmatprep.subr.bf16.mxu0 0
      %2147 = vmatpush1.bf16.msra.mxu0 0
      %2148 = vmatprep.subr.bf16.mxu0 0
      %2149 = vmatpush1.bf16.msra.mxu0 0
      %2150 = vmatprep.subr.bf16.mxu0 0
      %2151 = vmatpush1.bf16.msra.mxu0 0
      %2152 = vmatprep.subr.bf16.mxu0 0
      %2153 = vmatpush1.bf16.msra.mxu0 0
      %2154 = vmatprep.subr.bf16.mxu0 0
      %2155 = vmatpush1.bf16.msra.mxu0 0
      %2156 = vmatprep.subr.bf16.mxu0 0
      %2157 = vmatpush1.bf16.msra.mxu0 %v2137
      %2158 = vmatprep.subr.bf16.mxu0 0
      %2159 = vmatpush2.bf16.msra.mxu0 0
      %2160 = vmatprep.subr.bf16.mxu0 0
      %2161 = vmatpush2.bf16.msra.mxu0 0
      %2162 = vmatprep.subr.bf16.mxu0 0
      %2163 = vmatpush2.bf16.msra.mxu0 0
      %2164 = vmatprep.subr.bf16.mxu0 0
      %2165 = vmatpush2.bf16.msra.mxu0 0
      %2166 = vmatprep.subr.bf16.mxu0 0
      %2167 = vmatpush2.bf16.msra.mxu0 0
      %2168 = vmatprep.subr.bf16.mxu0 0
      %2169 = vmatpush2.bf16.msra.mxu0 0
      %2170 = vmatprep.subr.bf16.mxu0 0
      %2171 = vmatpush2.bf16.msra.mxu0 0
      %2172 = vmatprep.subr.bf16.mxu0 0
      %2173 = vmatpush2.bf16.msra.mxu0 0
      %2174 = vmatprep.mubr.bf16.mxu0 0
      %2175 = vmatmul.mubr.bf16.gmra.mxu0 %v2140
      %v2176 = vpop.f32.mrf.mxu0
      %v2177 = vadd.f32 0.0, %v2176
      %v2178 = vpop.f32.mrf.mxu0
      %v2179 = vpop.f32.mrf.mxu0
      %v2180 = vadd.f32 0.0, %v2179
      %v2181 = vpop.f32.mrf.mxu0
      %2182 = vdwg.mxu0
      %2183 = vrot.lane.b32.xlu0 %v492, 64
      %v2184 = vpop.permute.xlu0 %2183
      %v2187 = vsel %vm500, %v1661, 0
      %2189 = vmatprep.subr.bf16.mxu0 0
      %2190 = vmatpush1.bf16.msra.mxu0 0
      %2191 = vmatprep.subr.bf16.mxu0 0
      %2192 = vmatpush1.bf16.msra.mxu0 0
      %2193 = vmatprep.subr.bf16.mxu0 0
      %2194 = vmatpush1.bf16.msra.mxu0 0
      %2195 = vmatprep.subr.bf16.mxu0 0
      %2196 = vmatpush1.bf16.msra.mxu0 0
      %2197 = vmatprep.subr.bf16.mxu0 0
      %2198 = vmatpush1.bf16.msra.mxu0 0
      %2199 = vmatprep.subr.bf16.mxu0 0
      %2200 = vmatpush1.bf16.msra.mxu0 0
      %2201 = vmatprep.subr.bf16.mxu0 0
      %2202 = vmatpush1.bf16.msra.mxu0 0
      %2203 = vmatprep.subr.bf16.mxu0 0
      %2204 = vmatpush1.bf16.msra.mxu0 %v2184
      %2205 = vmatprep.subr.bf16.mxu0 0
      %2206 = vmatpush2.bf16.msra.mxu0 0
      %2207 = vmatprep.subr.bf16.mxu0 0
      %2208 = vmatpush2.bf16.msra.mxu0 0
      %2209 = vmatprep.subr.bf16.mxu0 0
      %2210 = vmatpush2.bf16.msra.mxu0 0
      %2211 = vmatprep.subr.bf16.mxu0 0
      %2212 = vmatpush2.bf16.msra.mxu0 0
      %2213 = vmatprep.subr.bf16.mxu0 0
      %2214 = vmatpush2.bf16.msra.mxu0 0
      %2215 = vmatprep.subr.bf16.mxu0 0
      %2216 = vmatpush2.bf16.msra.mxu0 0
      %2217 = vmatprep.subr.bf16.mxu0 0
      %2218 = vmatpush2.bf16.msra.mxu0 0
      %2219 = vmatprep.subr.bf16.mxu0 0
      %2220 = vmatpush2.bf16.msra.mxu0 0
      %2221 = vmatprep.mubr.bf16.mxu0 0
      %2222 = vmatmul.mubr.bf16.gmra.mxu0 %v2187
      %v2223 = vpop.f32.mrf.mxu0
      %v2224 = vadd.f32 0.0, %v2223
      %v2225 = vpop.f32.mrf.mxu0
      %v2226 = vpop.f32.mrf.mxu0
      %v2227 = vadd.f32 0.0, %v2226
      %v2228 = vpop.f32.mrf.mxu0
      %2229 = vdwg.mxu0
      %2230 = vrot.lane.b32.xlu0 %v493, 64
      %v2231 = vpop.permute.xlu0 %2230
      %v2234 = vsel %vm500, %v1662, 0
      %2236 = vmatprep.subr.bf16.mxu0 0
      %2237 = vmatpush1.bf16.msra.mxu0 0
      %2238 = vmatprep.subr.bf16.mxu0 0
      %2239 = vmatpush1.bf16.msra.mxu0 0
      %2240 = vmatprep.subr.bf16.mxu0 0
      %2241 = vmatpush1.bf16.msra.mxu0 0
      %2242 = vmatprep.subr.bf16.mxu0 0
      %2243 = vmatpush1.bf16.msra.mxu0 0
      %2244 = vmatprep.subr.bf16.mxu0 0
      %2245 = vmatpush1.bf16.msra.mxu0 0
      %2246 = vmatprep.subr.bf16.mxu0 0
      %2247 = vmatpush1.bf16.msra.mxu0 0
      %2248 = vmatprep.subr.bf16.mxu0 0
      %2249 = vmatpush1.bf16.msra.mxu0 0
      %2250 = vmatprep.subr.bf16.mxu0 0
      %2251 = vmatpush1.bf16.msra.mxu0 %v2231
      %2252 = vmatprep.subr.bf16.mxu0 0
      %2253 = vmatpush2.bf16.msra.mxu0 0
      %2254 = vmatprep.subr.bf16.mxu0 0
      %2255 = vmatpush2.bf16.msra.mxu0 0
      %2256 = vmatprep.subr.bf16.mxu0 0
      %2257 = vmatpush2.bf16.msra.mxu0 0
      %2258 = vmatprep.subr.bf16.mxu0 0
      %2259 = vmatpush2.bf16.msra.mxu0 0
      %2260 = vmatprep.subr.bf16.mxu0 0
      %2261 = vmatpush2.bf16.msra.mxu0 0
      %2262 = vmatprep.subr.bf16.mxu0 0
      %2263 = vmatpush2.bf16.msra.mxu0 0
      %2264 = vmatprep.subr.bf16.mxu0 0
      %2265 = vmatpush2.bf16.msra.mxu0 0
      %2266 = vmatprep.subr.bf16.mxu0 0
      %2267 = vmatpush2.bf16.msra.mxu0 0
      %2268 = vmatprep.mubr.bf16.mxu0 0
      %2269 = vmatmul.mubr.bf16.gmra.mxu0 %v2234
      %v2270 = vpop.f32.mrf.mxu0
      %v2271 = vadd.f32 0.0, %v2270
      %v2272 = vpop.f32.mrf.mxu0
      %v2273 = vpop.f32.mrf.mxu0
      %v2274 = vadd.f32 0.0, %v2273
      %v2275 = vpop.f32.mrf.mxu0
      %2276 = vdwg.mxu0
      %2277 = vrot.lane.b32.xlu0 %v494, 64
      %v2278 = vpop.permute.xlu0 %2277
      %v2281 = vsel %vm500, %v1663, 0
      %2283 = vmatprep.subr.bf16.mxu0 0
      %2284 = vmatpush1.bf16.msra.mxu0 0
      %2285 = vmatprep.subr.bf16.mxu0 0
      %2286 = vmatpush1.bf16.msra.mxu0 0
      %2287 = vmatprep.subr.bf16.mxu0 0
      %2288 = vmatpush1.bf16.msra.mxu0 0
      %2289 = vmatprep.subr.bf16.mxu0 0
      %2290 = vmatpush1.bf16.msra.mxu0 0
      %2291 = vmatprep.subr.bf16.mxu0 0
      %2292 = vmatpush1.bf16.msra.mxu0 0
      %2293 = vmatprep.subr.bf16.mxu0 0
      %2294 = vmatpush1.bf16.msra.mxu0 0
      %2295 = vmatprep.subr.bf16.mxu0 0
      %2296 = vmatpush1.bf16.msra.mxu0 0
      %2297 = vmatprep.subr.bf16.mxu0 0
      %2298 = vmatpush1.bf16.msra.mxu0 %v2278
      %2299 = vmatprep.subr.bf16.mxu0 0
      %2300 = vmatpush2.bf16.msra.mxu0 0
      %2301 = vmatprep.subr.bf16.mxu0 0
      %2302 = vmatpush2.bf16.msra.mxu0 0
      %2303 = vmatprep.subr.bf16.mxu0 0
      %2304 = vmatpush2.bf16.msra.mxu0 0
      %2305 = vmatprep.subr.bf16.mxu0 0
      %2306 = vmatpush2.bf16.msra.mxu0 0
      %2307 = vmatprep.subr.bf16.mxu0 0
      %2308 = vmatpush2.bf16.msra.mxu0 0
      %2309 = vmatprep.subr.bf16.mxu0 0
      %2310 = vmatpush2.bf16.msra.mxu0 0
      %2311 = vmatprep.subr.bf16.mxu0 0
      %2312 = vmatpush2.bf16.msra.mxu0 0
      %2313 = vmatprep.subr.bf16.mxu0 0
      %2314 = vmatpush2.bf16.msra.mxu0 0
      %2315 = vmatprep.mubr.bf16.mxu0 0
      %2316 = vmatmul.mubr.bf16.gmra.mxu0 %v2281
      %v2317 = vpop.f32.mrf.mxu0
      %v2318 = vadd.f32 0.0, %v2317
      %v2319 = vpop.f32.mrf.mxu0
      %v2320 = vpop.f32.mrf.mxu0
      %v2321 = vadd.f32 0.0, %v2320
      %v2322 = vpop.f32.mrf.mxu0
      %2323 = vdwg.mxu0
      %2324 = vrot.lane.b32.xlu0 %v495, 64
      %v2325 = vpop.permute.xlu0 %2324
      %v2328 = vsel %vm500, %v1664, 0
      %2330 = vmatprep.subr.bf16.mxu0 0
      %2331 = vmatpush1.bf16.msra.mxu0 0
      %2332 = vmatprep.subr.bf16.mxu0 0
      %2333 = vmatpush1.bf16.msra.mxu0 0
      %2334 = vmatprep.subr.bf16.mxu0 0
      %2335 = vmatpush1.bf16.msra.mxu0 0
      %2336 = vmatprep.subr.bf16.mxu0 0
      %2337 = vmatpush1.bf16.msra.mxu0 0
      %2338 = vmatprep.subr.bf16.mxu0 0
      %2339 = vmatpush1.bf16.msra.mxu0 0
      %2340 = vmatprep.subr.bf16.mxu0 0
      %2341 = vmatpush1.bf16.msra.mxu0 0
      %2342 = vmatprep.subr.bf16.mxu0 0
      %2343 = vmatpush1.bf16.msra.mxu0 0
      %2344 = vmatprep.subr.bf16.mxu0 0
      %2345 = vmatpush1.bf16.msra.mxu0 %v2325
      %2346 = vmatprep.subr.bf16.mxu0 0
      %2347 = vmatpush2.bf16.msra.mxu0 0
      %2348 = vmatprep.subr.bf16.mxu0 0
      %2349 = vmatpush2.bf16.msra.mxu0 0
      %2350 = vmatprep.subr.bf16.mxu0 0
      %2351 = vmatpush2.bf16.msra.mxu0 0
      %2352 = vmatprep.subr.bf16.mxu0 0
      %2353 = vmatpush2.bf16.msra.mxu0 0
      %2354 = vmatprep.subr.bf16.mxu0 0
      %2355 = vmatpush2.bf16.msra.mxu0 0
      %2356 = vmatprep.subr.bf16.mxu0 0
      %2357 = vmatpush2.bf16.msra.mxu0 0
      %2358 = vmatprep.subr.bf16.mxu0 0
      %2359 = vmatpush2.bf16.msra.mxu0 0
      %2360 = vmatprep.subr.bf16.mxu0 0
      %2361 = vmatpush2.bf16.msra.mxu0 0
      %2362 = vmatprep.mubr.bf16.mxu0 0
      %2363 = vmatmul.mubr.bf16.gmra.mxu0 %v2328
      %v2364 = vpop.f32.mrf.mxu0
      %v2365 = vadd.f32 0.0, %v2364
      %v2366 = vpop.f32.mrf.mxu0
      %v2367 = vpop.f32.mrf.mxu0
      %v2368 = vadd.f32 0.0, %v2367
      %v2369 = vpop.f32.mrf.mxu0
      %2370 = vdwg.mxu0
      %2371 = vrot.lane.b32.xlu0 %v496, 64
      %v2372 = vpop.permute.xlu0 %2371
      %v2375 = vsel %vm500, %v1665, 0
      %2377 = vmatprep.subr.bf16.mxu0 0
      %2378 = vmatpush1.bf16.msra.mxu0 0
      %2379 = vmatprep.subr.bf16.mxu0 0
      %2380 = vmatpush1.bf16.msra.mxu0 0
      %2381 = vmatprep.subr.bf16.mxu0 0
      %2382 = vmatpush1.bf16.msra.mxu0 0
      %2383 = vmatprep.subr.bf16.mxu0 0
      %2384 = vmatpush1.bf16.msra.mxu0 0
      %2385 = vmatprep.subr.bf16.mxu0 0
      %2386 = vmatpush1.bf16.msra.mxu0 0
      %2387 = vmatprep.subr.bf16.mxu0 0
      %2388 = vmatpush1.bf16.msra.mxu0 0
      %2389 = vmatprep.subr.bf16.mxu0 0
      %2390 = vmatpush1.bf16.msra.mxu0 0
      %2391 = vmatprep.subr.bf16.mxu0 0
      %2392 = vmatpush1.bf16.msra.mxu0 %v2372
      %2393 = vmatprep.subr.bf16.mxu0 0
      %2394 = vmatpush2.bf16.msra.mxu0 0
      %2395 = vmatprep.subr.bf16.mxu0 0
      %2396 = vmatpush2.bf16.msra.mxu0 0
      %2397 = vmatprep.subr.bf16.mxu0 0
      %2398 = vmatpush2.bf16.msra.mxu0 0
      %2399 = vmatprep.subr.bf16.mxu0 0
      %2400 = vmatpush2.bf16.msra.mxu0 0
      %2401 = vmatprep.subr.bf16.mxu0 0
      %2402 = vmatpush2.bf16.msra.mxu0 0
      %2403 = vmatprep.subr.bf16.mxu0 0
      %2404 = vmatpush2.bf16.msra.mxu0 0
      %2405 = vmatprep.subr.bf16.mxu0 0
      %2406 = vmatpush2.bf16.msra.mxu0 0
      %2407 = vmatprep.subr.bf16.mxu0 0
      %2408 = vmatpush2.bf16.msra.mxu0 0
      %2409 = vmatprep.mubr.bf16.mxu0 0
      %2410 = vmatmul.mubr.bf16.gmra.mxu0 %v2375
      %v2411 = vpop.f32.mrf.mxu0
      %v2412 = vadd.f32 0.0, %v2411
      %v2413 = vpop.f32.mrf.mxu0
      %v2414 = vpop.f32.mrf.mxu0
      %v2415 = vadd.f32 0.0, %v2414
      %v2416 = vpop.f32.mrf.mxu0
      %2417 = vdwg.mxu0
      %2418 = vrot.lane.b32.xlu0 %v481, 112
      %v2419 = vpop.permute.xlu0 %2418
      %2420 = vrot.lane.b32.xlu0 %v481, 80
      %v2421 = vpop.permute.xlu0 %2420
      %v2423 = vsel %vm500, %v2419, 0
      %v2426 = vsel %vm500, %v2421, 0
      %2428 = vmatprep.subr.bf16.mxu0 0
      %2429 = vmatpush1.bf16.xpose.msra.mxu0 0
      %2430 = vmatprep.subr.bf16.mxu0 0
      %2431 = vmatpush1.bf16.xpose.msra.mxu0 0
      %2432 = vmatprep.subr.bf16.mxu0 0
      %2433 = vmatpush1.bf16.xpose.msra.mxu0 0
      %2434 = vmatprep.subr.bf16.mxu0 0
      %2435 = vmatpush1.bf16.xpose.msra.mxu0 0
      %2436 = vmatprep.subr.bf16.mxu0 0
      %2437 = vmatpush1.bf16.xpose.msra.mxu0 0
      %2438 = vmatprep.subr.bf16.mxu0 0
      %2439 = vmatpush1.bf16.xpose.msra.mxu0 0
      %2440 = vmatprep.subr.bf16.mxu0 0
      %2441 = vmatpush1.bf16.xpose.msra.mxu0 0
      %2442 = vmatprep.subr.bf16.mxu0 0
      %2443 = vmatpush1.bf16.xpose.msra.mxu0 %v2426
      %2444 = vmatprep.subr.bf16.mxu0 0
      %2445 = vmatpush2.bf16.xpose.msra.mxu0 0
      %2446 = vmatprep.subr.bf16.mxu0 0
      %2447 = vmatpush2.bf16.xpose.msra.mxu0 0
      %2448 = vmatprep.subr.bf16.mxu0 0
      %2449 = vmatpush2.bf16.xpose.msra.mxu0 0
      %2450 = vmatprep.subr.bf16.mxu0 0
      %2451 = vmatpush2.bf16.xpose.msra.mxu0 0
      %2452 = vmatprep.subr.bf16.mxu0 0
      %2453 = vmatpush2.bf16.xpose.msra.mxu0 0
      %2454 = vmatprep.subr.bf16.mxu0 0
      %2455 = vmatpush2.bf16.xpose.msra.mxu0 0
      %2456 = vmatprep.subr.bf16.mxu0 0
      %2457 = vmatpush2.bf16.xpose.msra.mxu0 0
      %2458 = vmatprep.subr.bf16.mxu0 0
      %2459 = vmatpush2.bf16.xpose.msra.mxu0 0
      %2460 = vmatprep.mubr.bf16.mxu0 0
      %2461 = vmatmul.mubr.bf16.gmra.mxu0 %v2423
      %v2462 = vpop.f32.mrf.mxu0
      %v2463 = vadd.f32 0.0, %v2462
      %v2464 = vpop.f32.mrf.mxu0
      %v2465 = vpop.f32.mrf.mxu0
      %v2466 = vadd.f32 0.0, %v2465
      %v2467 = vpop.f32.mrf.mxu0
      %2468 = vdwg.mxu0
      %2469 = vrot.lane.b32.xlu0 %v482, 112
      %v2470 = vpop.permute.xlu0 %2469
      %2471 = vrot.lane.b32.xlu0 %v482, 80
      %v2472 = vpop.permute.xlu0 %2471
      %v2474 = vsel %vm500, %v2470, 0
      %v2477 = vsel %vm500, %v2472, 0
      %2479 = vmatprep.subr.bf16.mxu0 0
      %2480 = vmatpush1.bf16.xpose.msra.mxu0 0
      %2481 = vmatprep.subr.bf16.mxu0 0
      %2482 = vmatpush1.bf16.xpose.msra.mxu0 0
      %2483 = vmatprep.subr.bf16.mxu0 0
      %2484 = vmatpush1.bf16.xpose.msra.mxu0 0
      %2485 = vmatprep.subr.bf16.mxu0 0
      %2486 = vmatpush1.bf16.xpose.msra.mxu0 0
      %2487 = vmatprep.subr.bf16.mxu0 0
      %2488 = vmatpush1.bf16.xpose.msra.mxu0 0
      %2489 = vmatprep.subr.bf16.mxu0 0
      %2490 = vmatpush1.bf16.xpose.msra.mxu0 0
      %2491 = vmatprep.subr.bf16.mxu0 0
      %2492 = vmatpush1.bf16.xpose.msra.mxu0 0
      %2493 = vmatprep.subr.bf16.mxu0 0
      %2494 = vmatpush1.bf16.xpose.msra.mxu0 %v2477
      %2495 = vmatprep.subr.bf16.mxu0 0
      %2496 = vmatpush2.bf16.xpose.msra.mxu0 0
      %2497 = vmatprep.subr.bf16.mxu0 0
      %2498 = vmatpush2.bf16.xpose.msra.mxu0 0
      %2499 = vmatprep.subr.bf16.mxu0 0
      %2500 = vmatpush2.bf16.xpose.msra.mxu0 0
      %2501 = vmatprep.subr.bf16.mxu0 0
      %2502 = vmatpush2.bf16.xpose.msra.mxu0 0
      %2503 = vmatprep.subr.bf16.mxu0 0
      %2504 = vmatpush2.bf16.xpose.msra.mxu0 0
      %2505 = vmatprep.subr.bf16.mxu0 0
      %2506 = vmatpush2.bf16.xpose.msra.mxu0 0
      %2507 = vmatprep.subr.bf16.mxu0 0
      %2508 = vmatpush2.bf16.xpose.msra.mxu0 0
      %2509 = vmatprep.subr.bf16.mxu0 0
      %2510 = vmatpush2.bf16.xpose.msra.mxu0 0
      %2511 = vmatprep.mubr.bf16.mxu0 0
      %2512 = vmatmul.mubr.bf16.gmra.mxu0 %v2474
      %v2513 = vpop.f32.mrf.mxu0
      %v2514 = vadd.f32 0.0, %v2513
      %v2515 = vpop.f32.mrf.mxu0
      %v2516 = vpop.f32.mrf.mxu0
      %v2517 = vadd.f32 0.0, %v2516
      %v2518 = vpop.f32.mrf.mxu0
      %2519 = vdwg.mxu0
      %2520 = vrot.lane.b32.xlu0 %v483, 112
      %v2521 = vpop.permute.xlu0 %2520
      %2522 = vrot.lane.b32.xlu0 %v483, 80
      %v2523 = vpop.permute.xlu0 %2522
      %v2525 = vsel %vm500, %v2521, 0
      %v2528 = vsel %vm500, %v2523, 0
      %2530 = vmatprep.subr.bf16.mxu0 0
      %2531 = vmatpush1.bf16.xpose.msra.mxu0 0
      %2532 = vmatprep.subr.bf16.mxu0 0
      %2533 = vmatpush1.bf16.xpose.msra.mxu0 0
      %2534 = vmatprep.subr.bf16.mxu0 0
      %2535 = vmatpush1.bf16.xpose.msra.mxu0 0
      %2536 = vmatprep.subr.bf16.mxu0 0
      %2537 = vmatpush1.bf16.xpose.msra.mxu0 0
      %2538 = vmatprep.subr.bf16.mxu0 0
      %2539 = vmatpush1.bf16.xpose.msra.mxu0 0
      %2540 = vmatprep.subr.bf16.mxu0 0
      %2541 = vmatpush1.bf16.xpose.msra.mxu0 0
      %2542 = vmatprep.subr.bf16.mxu0 0
      %2543 = vmatpush1.bf16.xpose.msra.mxu0 0
      %2544 = vmatprep.subr.bf16.mxu0 0
      %2545 = vmatpush1.bf16.xpose.msra.mxu0 %v2528
      %2546 = vmatprep.subr.bf16.mxu0 0
      %2547 = vmatpush2.bf16.xpose.msra.mxu0 0
      %2548 = vmatprep.subr.bf16.mxu0 0
      %2549 = vmatpush2.bf16.xpose.msra.mxu0 0
      %2550 = vmatprep.subr.bf16.mxu0 0
      %2551 = vmatpush2.bf16.xpose.msra.mxu0 0
      %2552 = vmatprep.subr.bf16.mxu0 0
      %2553 = vmatpush2.bf16.xpose.msra.mxu0 0
      %2554 = vmatprep.subr.bf16.mxu0 0
      %2555 = vmatpush2.bf16.xpose.msra.mxu0 0
      %2556 = vmatprep.subr.bf16.mxu0 0
      %2557 = vmatpush2.bf16.xpose.msra.mxu0 0
      %2558 = vmatprep.subr.bf16.mxu0 0
      %2559 = vmatpush2.bf16.xpose.msra.mxu0 0
      %2560 = vmatprep.subr.bf16.mxu0 0
      %2561 = vmatpush2.bf16.xpose.msra.mxu0 0
      %2562 = vmatprep.mubr.bf16.mxu0 0
      %2563 = vmatmul.mubr.bf16.gmra.mxu0 %v2525
      %v2564 = vpop.f32.mrf.mxu0
      %v2565 = vadd.f32 0.0, %v2564
      %v2566 = vpop.f32.mrf.mxu0
      %v2567 = vpop.f32.mrf.mxu0
      %v2568 = vadd.f32 0.0, %v2567
      %v2569 = vpop.f32.mrf.mxu0
      %2570 = vdwg.mxu0
      %2571 = vrot.lane.b32.xlu0 %v484, 112
      %v2572 = vpop.permute.xlu0 %2571
      %2573 = vrot.lane.b32.xlu0 %v484, 80
      %v2574 = vpop.permute.xlu0 %2573
      %v2576 = vsel %vm500, %v2572, 0
      %v2579 = vsel %vm500, %v2574, 0
      %2581 = vmatprep.subr.bf16.mxu0 0
      %2582 = vmatpush1.bf16.xpose.msra.mxu0 0
      %2583 = vmatprep.subr.bf16.mxu0 0
      %2584 = vmatpush1.bf16.xpose.msra.mxu0 0
      %2585 = vmatprep.subr.bf16.mxu0 0
      %2586 = vmatpush1.bf16.xpose.msra.mxu0 0
      %2587 = vmatprep.subr.bf16.mxu0 0
      %2588 = vmatpush1.bf16.xpose.msra.mxu0 0
      %2589 = vmatprep.subr.bf16.mxu0 0
      %2590 = vmatpush1.bf16.xpose.msra.mxu0 0
      %2591 = vmatprep.subr.bf16.mxu0 0
      %2592 = vmatpush1.bf16.xpose.msra.mxu0 0
      %2593 = vmatprep.subr.bf16.mxu0 0
      %2594 = vmatpush1.bf16.xpose.msra.mxu0 0
      %2595 = vmatprep.subr.bf16.mxu0 0
      %2596 = vmatpush1.bf16.xpose.msra.mxu0 %v2579
      %2597 = vmatprep.subr.bf16.mxu0 0
      %2598 = vmatpush2.bf16.xpose.msra.mxu0 0
      %2599 = vmatprep.subr.bf16.mxu0 0
      %2600 = vmatpush2.bf16.xpose.msra.mxu0 0
      %2601 = vmatprep.subr.bf16.mxu0 0
      %2602 = vmatpush2.bf16.xpose.msra.mxu0 0
      %2603 = vmatprep.subr.bf16.mxu0 0
      %2604 = vmatpush2.bf16.xpose.msra.mxu0 0
      %2605 = vmatprep.subr.bf16.mxu0 0
      %2606 = vmatpush2.bf16.xpose.msra.mxu0 0
      %2607 = vmatprep.subr.bf16.mxu0 0
      %2608 = vmatpush2.bf16.xpose.msra.mxu0 0
      %2609 = vmatprep.subr.bf16.mxu0 0
      %2610 = vmatpush2.bf16.xpose.msra.mxu0 0
      %2611 = vmatprep.subr.bf16.mxu0 0
      %2612 = vmatpush2.bf16.xpose.msra.mxu0 0
      %2613 = vmatprep.mubr.bf16.mxu0 0
      %2614 = vmatmul.mubr.bf16.gmra.mxu0 %v2576
      %v2615 = vpop.f32.mrf.mxu0
      %v2616 = vadd.f32 0.0, %v2615
      %v2617 = vpop.f32.mrf.mxu0
      %v2618 = vpop.f32.mrf.mxu0
      %v2619 = vadd.f32 0.0, %v2618
      %v2620 = vpop.f32.mrf.mxu0
      %2621 = vdwg.mxu0
      %2622 = vrot.lane.b32.xlu0 %v485, 112
      %v2623 = vpop.permute.xlu0 %2622
      %2624 = vrot.lane.b32.xlu0 %v485, 80
      %v2625 = vpop.permute.xlu0 %2624
      %v2627 = vsel %vm500, %v2623, 0
      %v2630 = vsel %vm500, %v2625, 0
      %2632 = vmatprep.subr.bf16.mxu0 0
      %2633 = vmatpush1.bf16.xpose.msra.mxu0 0
      %2634 = vmatprep.subr.bf16.mxu0 0
      %2635 = vmatpush1.bf16.xpose.msra.mxu0 0
      %2636 = vmatprep.subr.bf16.mxu0 0
      %2637 = vmatpush1.bf16.xpose.msra.mxu0 0
      %2638 = vmatprep.subr.bf16.mxu0 0
      %2639 = vmatpush1.bf16.xpose.msra.mxu0 0
      %2640 = vmatprep.subr.bf16.mxu0 0
      %2641 = vmatpush1.bf16.xpose.msra.mxu0 0
      %2642 = vmatprep.subr.bf16.mxu0 0
      %2643 = vmatpush1.bf16.xpose.msra.mxu0 0
      %2644 = vmatprep.subr.bf16.mxu0 0
      %2645 = vmatpush1.bf16.xpose.msra.mxu0 0
      %2646 = vmatprep.subr.bf16.mxu0 0
      %2647 = vmatpush1.bf16.xpose.msra.mxu0 %v2630
      %2648 = vmatprep.subr.bf16.mxu0 0
      %2649 = vmatpush2.bf16.xpose.msra.mxu0 0
      %2650 = vmatprep.subr.bf16.mxu0 0
      %2651 = vmatpush2.bf16.xpose.msra.mxu0 0
      %2652 = vmatprep.subr.bf16.mxu0 0
      %2653 = vmatpush2.bf16.xpose.msra.mxu0 0
      %2654 = vmatprep.subr.bf16.mxu0 0
      %2655 = vmatpush2.bf16.xpose.msra.mxu0 0
      %2656 = vmatprep.subr.bf16.mxu0 0
      %2657 = vmatpush2.bf16.xpose.msra.mxu0 0
      %2658 = vmatprep.subr.bf16.mxu0 0
      %2659 = vmatpush2.bf16.xpose.msra.mxu0 0
      %2660 = vmatprep.subr.bf16.mxu0 0
      %2661 = vmatpush2.bf16.xpose.msra.mxu0 0
      %2662 = vmatprep.subr.bf16.mxu0 0
      %2663 = vmatpush2.bf16.xpose.msra.mxu0 0
      %2664 = vmatprep.mubr.bf16.mxu0 0
      %2665 = vmatmul.mubr.bf16.gmra.mxu0 %v2627
      %v2666 = vpop.f32.mrf.mxu0
      %v2667 = vadd.f32 0.0, %v2666
      %v2668 = vpop.f32.mrf.mxu0
      %v2669 = vpop.f32.mrf.mxu0
      %v2670 = vadd.f32 0.0, %v2669
      %v2671 = vpop.f32.mrf.mxu0
      %2672 = vdwg.mxu0
      %2673 = vrot.lane.b32.xlu0 %v486, 112
      %v2674 = vpop.permute.xlu0 %2673
      %2675 = vrot.lane.b32.xlu0 %v486, 80
      %v2676 = vpop.permute.xlu0 %2675
      %v2678 = vsel %vm500, %v2674, 0
      %v2681 = vsel %vm500, %v2676, 0
      %2683 = vmatprep.subr.bf16.mxu0 0
      %2684 = vmatpush1.bf16.xpose.msra.mxu0 0
      %2685 = vmatprep.subr.bf16.mxu0 0
      %2686 = vmatpush1.bf16.xpose.msra.mxu0 0
      %2687 = vmatprep.subr.bf16.mxu0 0
      %2688 = vmatpush1.bf16.xpose.msra.mxu0 0
      %2689 = vmatprep.subr.bf16.mxu0 0
      %2690 = vmatpush1.bf16.xpose.msra.mxu0 0
      %2691 = vmatprep.subr.bf16.mxu0 0
      %2692 = vmatpush1.bf16.xpose.msra.mxu0 0
      %2693 = vmatprep.subr.bf16.mxu0 0
      %2694 = vmatpush1.bf16.xpose.msra.mxu0 0
      %2695 = vmatprep.subr.bf16.mxu0 0
      %2696 = vmatpush1.bf16.xpose.msra.mxu0 0
      %2697 = vmatprep.subr.bf16.mxu0 0
      %2698 = vmatpush1.bf16.xpose.msra.mxu0 %v2681
      %2699 = vmatprep.subr.bf16.mxu0 0
      %2700 = vmatpush2.bf16.xpose.msra.mxu0 0
      %2701 = vmatprep.subr.bf16.mxu0 0
      %2702 = vmatpush2.bf16.xpose.msra.mxu0 0
      %2703 = vmatprep.subr.bf16.mxu0 0
      %2704 = vmatpush2.bf16.xpose.msra.mxu0 0
      %2705 = vmatprep.subr.bf16.mxu0 0
      %2706 = vmatpush2.bf16.xpose.msra.mxu0 0
      %2707 = vmatprep.subr.bf16.mxu0 0
      %2708 = vmatpush2.bf16.xpose.msra.mxu0 0
      %2709 = vmatprep.subr.bf16.mxu0 0
      %2710 = vmatpush2.bf16.xpose.msra.mxu0 0
      %2711 = vmatprep.subr.bf16.mxu0 0
      %2712 = vmatpush2.bf16.xpose.msra.mxu0 0
      %2713 = vmatprep.subr.bf16.mxu0 0
      %2714 = vmatpush2.bf16.xpose.msra.mxu0 0
      %2715 = vmatprep.mubr.bf16.mxu0 0
      %2716 = vmatmul.mubr.bf16.gmra.mxu0 %v2678
      %v2717 = vpop.f32.mrf.mxu0
      %v2718 = vadd.f32 0.0, %v2717
      %v2719 = vpop.f32.mrf.mxu0
      %v2720 = vpop.f32.mrf.mxu0
      %v2721 = vadd.f32 0.0, %v2720
      %v2722 = vpop.f32.mrf.mxu0
      %2723 = vdwg.mxu0
      %2724 = vrot.lane.b32.xlu0 %v487, 112
      %v2725 = vpop.permute.xlu0 %2724
      %2726 = vrot.lane.b32.xlu0 %v487, 80
      %v2727 = vpop.permute.xlu0 %2726
      %v2729 = vsel %vm500, %v2725, 0
      %v2732 = vsel %vm500, %v2727, 0
      %2734 = vmatprep.subr.bf16.mxu0 0
      %2735 = vmatpush1.bf16.xpose.msra.mxu0 0
      %2736 = vmatprep.subr.bf16.mxu0 0
      %2737 = vmatpush1.bf16.xpose.msra.mxu0 0
      %2738 = vmatprep.subr.bf16.mxu0 0
      %2739 = vmatpush1.bf16.xpose.msra.mxu0 0
      %2740 = vmatprep.subr.bf16.mxu0 0
      %2741 = vmatpush1.bf16.xpose.msra.mxu0 0
      %2742 = vmatprep.subr.bf16.mxu0 0
      %2743 = vmatpush1.bf16.xpose.msra.mxu0 0
      %2744 = vmatprep.subr.bf16.mxu0 0
      %2745 = vmatpush1.bf16.xpose.msra.mxu0 0
      %2746 = vmatprep.subr.bf16.mxu0 0
      %2747 = vmatpush1.bf16.xpose.msra.mxu0 0
      %2748 = vmatprep.subr.bf16.mxu0 0
      %2749 = vmatpush1.bf16.xpose.msra.mxu0 %v2732
      %2750 = vmatprep.subr.bf16.mxu0 0
      %2751 = vmatpush2.bf16.xpose.msra.mxu0 0
      %2752 = vmatprep.subr.bf16.mxu0 0
      %2753 = vmatpush2.bf16.xpose.msra.mxu0 0
      %2754 = vmatprep.subr.bf16.mxu0 0
      %2755 = vmatpush2.bf16.xpose.msra.mxu0 0
      %2756 = vmatprep.subr.bf16.mxu0 0
      %2757 = vmatpush2.bf16.xpose.msra.mxu0 0
      %2758 = vmatprep.subr.bf16.mxu0 0
      %2759 = vmatpush2.bf16.xpose.msra.mxu0 0
      %2760 = vmatprep.subr.bf16.mxu0 0
      %2761 = vmatpush2.bf16.xpose.msra.mxu0 0
      %2762 = vmatprep.subr.bf16.mxu0 0
      %2763 = vmatpush2.bf16.xpose.msra.mxu0 0
      %2764 = vmatprep.subr.bf16.mxu0 0
      %2765 = vmatpush2.bf16.xpose.msra.mxu0 0
      %2766 = vmatprep.mubr.bf16.mxu0 0
      %2767 = vmatmul.mubr.bf16.gmra.mxu0 %v2729
      %v2768 = vpop.f32.mrf.mxu0
      %v2769 = vadd.f32 0.0, %v2768
      %v2770 = vpop.f32.mrf.mxu0
      %v2771 = vpop.f32.mrf.mxu0
      %v2772 = vadd.f32 0.0, %v2771
      %v2773 = vpop.f32.mrf.mxu0
      %2774 = vdwg.mxu0
      %2775 = vrot.lane.b32.xlu0 %v488, 112
      %v2776 = vpop.permute.xlu0 %2775
      %2777 = vrot.lane.b32.xlu0 %v488, 80
      %v2778 = vpop.permute.xlu0 %2777
      %v2780 = vsel %vm500, %v2776, 0
      %v2783 = vsel %vm500, %v2778, 0
      %2785 = vmatprep.subr.bf16.mxu0 0
      %2786 = vmatpush1.bf16.xpose.msra.mxu0 0
      %2787 = vmatprep.subr.bf16.mxu0 0
      %2788 = vmatpush1.bf16.xpose.msra.mxu0 0
      %2789 = vmatprep.subr.bf16.mxu0 0
      %2790 = vmatpush1.bf16.xpose.msra.mxu0 0
      %2791 = vmatprep.subr.bf16.mxu0 0
      %2792 = vmatpush1.bf16.xpose.msra.mxu0 0
      %2793 = vmatprep.subr.bf16.mxu0 0
      %2794 = vmatpush1.bf16.xpose.msra.mxu0 0
      %2795 = vmatprep.subr.bf16.mxu0 0
      %2796 = vmatpush1.bf16.xpose.msra.mxu0 0
      %2797 = vmatprep.subr.bf16.mxu0 0
      %2798 = vmatpush1.bf16.xpose.msra.mxu0 0
      %2799 = vmatprep.subr.bf16.mxu0 0
      %2800 = vmatpush1.bf16.xpose.msra.mxu0 %v2783
      %2801 = vmatprep.subr.bf16.mxu0 0
      %2802 = vmatpush2.bf16.xpose.msra.mxu0 0
      %2803 = vmatprep.subr.bf16.mxu0 0
      %2804 = vmatpush2.bf16.xpose.msra.mxu0 0
      %2805 = vmatprep.subr.bf16.mxu0 0
      %2806 = vmatpush2.bf16.xpose.msra.mxu0 0
      %2807 = vmatprep.subr.bf16.mxu0 0
      %2808 = vmatpush2.bf16.xpose.msra.mxu0 0
      %2809 = vmatprep.subr.bf16.mxu0 0
      %2810 = vmatpush2.bf16.xpose.msra.mxu0 0
      %2811 = vmatprep.subr.bf16.mxu0 0
      %2812 = vmatpush2.bf16.xpose.msra.mxu0 0
      %2813 = vmatprep.subr.bf16.mxu0 0
      %2814 = vmatpush2.bf16.xpose.msra.mxu0 0
      %2815 = vmatprep.subr.bf16.mxu0 0
      %2816 = vmatpush2.bf16.xpose.msra.mxu0 0
      %2817 = vmatprep.mubr.bf16.mxu0 0
      %2818 = vmatmul.mubr.bf16.gmra.mxu0 %v2780
      %v2819 = vpop.f32.mrf.mxu0
      %v2820 = vadd.f32 0.0, %v2819
      %v2821 = vpop.f32.mrf.mxu0
      %v2822 = vpop.f32.mrf.mxu0
      %v2823 = vadd.f32 0.0, %v2822
      %v2824 = vpop.f32.mrf.mxu0
      %2825 = vdwg.mxu0
      %2826 = vrot.lane.b32.xlu0 %v489, 112
      %v2827 = vpop.permute.xlu0 %2826
      %2828 = vrot.lane.b32.xlu0 %v489, 80
      %v2829 = vpop.permute.xlu0 %2828
      %v2831 = vsel %vm500, %v2827, 0
      %v2834 = vsel %vm500, %v2829, 0
      %2836 = vmatprep.subr.bf16.mxu0 0
      %2837 = vmatpush1.bf16.xpose.msra.mxu0 0
      %2838 = vmatprep.subr.bf16.mxu0 0
      %2839 = vmatpush1.bf16.xpose.msra.mxu0 0
      %2840 = vmatprep.subr.bf16.mxu0 0
      %2841 = vmatpush1.bf16.xpose.msra.mxu0 0
      %2842 = vmatprep.subr.bf16.mxu0 0
      %2843 = vmatpush1.bf16.xpose.msra.mxu0 0
      %2844 = vmatprep.subr.bf16.mxu0 0
      %2845 = vmatpush1.bf16.xpose.msra.mxu0 0
      %2846 = vmatprep.subr.bf16.mxu0 0
      %2847 = vmatpush1.bf16.xpose.msra.mxu0 0
      %2848 = vmatprep.subr.bf16.mxu0 0
      %2849 = vmatpush1.bf16.xpose.msra.mxu0 0
      %2850 = vmatprep.subr.bf16.mxu0 0
      %2851 = vmatpush1.bf16.xpose.msra.mxu0 %v2834
      %2852 = vmatprep.subr.bf16.mxu0 0
      %2853 = vmatpush2.bf16.xpose.msra.mxu0 0
      %2854 = vmatprep.subr.bf16.mxu0 0
      %2855 = vmatpush2.bf16.xpose.msra.mxu0 0
      %2856 = vmatprep.subr.bf16.mxu0 0
      %2857 = vmatpush2.bf16.xpose.msra.mxu0 0
      %2858 = vmatprep.subr.bf16.mxu0 0
      %2859 = vmatpush2.bf16.xpose.msra.mxu0 0
      %2860 = vmatprep.subr.bf16.mxu0 0
      %2861 = vmatpush2.bf16.xpose.msra.mxu0 0
      %2862 = vmatprep.subr.bf16.mxu0 0
      %2863 = vmatpush2.bf16.xpose.msra.mxu0 0
      %2864 = vmatprep.subr.bf16.mxu0 0
      %2865 = vmatpush2.bf16.xpose.msra.mxu0 0
      %2866 = vmatprep.subr.bf16.mxu0 0
      %2867 = vmatpush2.bf16.xpose.msra.mxu0 0
      %2868 = vmatprep.mubr.bf16.mxu0 0
      %2869 = vmatmul.mubr.bf16.gmra.mxu0 %v2831
      %v2870 = vpop.f32.mrf.mxu0
      %v2871 = vadd.f32 0.0, %v2870
      %v2872 = vpop.f32.mrf.mxu0
      %v2873 = vpop.f32.mrf.mxu0
      %v2874 = vadd.f32 0.0, %v2873
      %v2875 = vpop.f32.mrf.mxu0
      %2876 = vdwg.mxu0
      %2877 = vrot.lane.b32.xlu0 %v490, 112
      %v2878 = vpop.permute.xlu0 %2877
      %2879 = vrot.lane.b32.xlu0 %v490, 80
      %v2880 = vpop.permute.xlu0 %2879
      %v2882 = vsel %vm500, %v2878, 0
      %v2885 = vsel %vm500, %v2880, 0
      %2887 = vmatprep.subr.bf16.mxu0 0
      %2888 = vmatpush1.bf16.xpose.msra.mxu0 0
      %2889 = vmatprep.subr.bf16.mxu0 0
      %2890 = vmatpush1.bf16.xpose.msra.mxu0 0
      %2891 = vmatprep.subr.bf16.mxu0 0
      %2892 = vmatpush1.bf16.xpose.msra.mxu0 0
      %2893 = vmatprep.subr.bf16.mxu0 0
      %2894 = vmatpush1.bf16.xpose.msra.mxu0 0
      %2895 = vmatprep.subr.bf16.mxu0 0
      %2896 = vmatpush1.bf16.xpose.msra.mxu0 0
      %2897 = vmatprep.subr.bf16.mxu0 0
      %2898 = vmatpush1.bf16.xpose.msra.mxu0 0
      %2899 = vmatprep.subr.bf16.mxu0 0
      %2900 = vmatpush1.bf16.xpose.msra.mxu0 0
      %2901 = vmatprep.subr.bf16.mxu0 0
      %2902 = vmatpush1.bf16.xpose.msra.mxu0 %v2885
      %2903 = vmatprep.subr.bf16.mxu0 0
      %2904 = vmatpush2.bf16.xpose.msra.mxu0 0
      %2905 = vmatprep.subr.bf16.mxu0 0
      %2906 = vmatpush2.bf16.xpose.msra.mxu0 0
      %2907 = vmatprep.subr.bf16.mxu0 0
      %2908 = vmatpush2.bf16.xpose.msra.mxu0 0
      %2909 = vmatprep.subr.bf16.mxu0 0
      %2910 = vmatpush2.bf16.xpose.msra.mxu0 0
      %2911 = vmatprep.subr.bf16.mxu0 0
      %2912 = vmatpush2.bf16.xpose.msra.mxu0 0
      %2913 = vmatprep.subr.bf16.mxu0 0
      %2914 = vmatpush2.bf16.xpose.msra.mxu0 0
      %2915 = vmatprep.subr.bf16.mxu0 0
      %2916 = vmatpush2.bf16.xpose.msra.mxu0 0
      %2917 = vmatprep.subr.bf16.mxu0 0
      %2918 = vmatpush2.bf16.xpose.msra.mxu0 0
      %2919 = vmatprep.mubr.bf16.mxu0 0
      %2920 = vmatmul.mubr.bf16.gmra.mxu0 %v2882
      %v2921 = vpop.f32.mrf.mxu0
      %v2922 = vadd.f32 0.0, %v2921
      %v2923 = vpop.f32.mrf.mxu0
      %v2924 = vpop.f32.mrf.mxu0
      %v2925 = vadd.f32 0.0, %v2924
      %v2926 = vpop.f32.mrf.mxu0
      %2927 = vdwg.mxu0
      %2928 = vrot.lane.b32.xlu0 %v491, 112
      %v2929 = vpop.permute.xlu0 %2928
      %2930 = vrot.lane.b32.xlu0 %v491, 80
      %v2931 = vpop.permute.xlu0 %2930
      %v2933 = vsel %vm500, %v2929, 0
      %v2936 = vsel %vm500, %v2931, 0
      %2938 = vmatprep.subr.bf16.mxu0 0
      %2939 = vmatpush1.bf16.xpose.msra.mxu0 0
      %2940 = vmatprep.subr.bf16.mxu0 0
      %2941 = vmatpush1.bf16.xpose.msra.mxu0 0
      %2942 = vmatprep.subr.bf16.mxu0 0
      %2943 = vmatpush1.bf16.xpose.msra.mxu0 0
      %2944 = vmatprep.subr.bf16.mxu0 0
      %2945 = vmatpush1.bf16.xpose.msra.mxu0 0
      %2946 = vmatprep.subr.bf16.mxu0 0
      %2947 = vmatpush1.bf16.xpose.msra.mxu0 0
      %2948 = vmatprep.subr.bf16.mxu0 0
      %2949 = vmatpush1.bf16.xpose.msra.mxu0 0
      %2950 = vmatprep.subr.bf16.mxu0 0
      %2951 = vmatpush1.bf16.xpose.msra.mxu0 0
      %2952 = vmatprep.subr.bf16.mxu0 0
      %2953 = vmatpush1.bf16.xpose.msra.mxu0 %v2936
      %2954 = vmatprep.subr.bf16.mxu0 0
      %2955 = vmatpush2.bf16.xpose.msra.mxu0 0
      %2956 = vmatprep.subr.bf16.mxu0 0
      %2957 = vmatpush2.bf16.xpose.msra.mxu0 0
      %2958 = vmatprep.subr.bf16.mxu0 0
      %2959 = vmatpush2.bf16.xpose.msra.mxu0 0
      %2960 = vmatprep.subr.bf16.mxu0 0
      %2961 = vmatpush2.bf16.xpose.msra.mxu0 0
      %2962 = vmatprep.subr.bf16.mxu0 0
      %2963 = vmatpush2.bf16.xpose.msra.mxu0 0
      %2964 = vmatprep.subr.bf16.mxu0 0
      %2965 = vmatpush2.bf16.xpose.msra.mxu0 0
      %2966 = vmatprep.subr.bf16.mxu0 0
      %2967 = vmatpush2.bf16.xpose.msra.mxu0 0
      %2968 = vmatprep.subr.bf16.mxu0 0
      %2969 = vmatpush2.bf16.xpose.msra.mxu0 0
      %2970 = vmatprep.mubr.bf16.mxu0 0
      %2971 = vmatmul.mubr.bf16.gmra.mxu0 %v2933
      %v2972 = vpop.f32.mrf.mxu0
      %v2973 = vadd.f32 0.0, %v2972
      %v2974 = vpop.f32.mrf.mxu0
      %v2975 = vpop.f32.mrf.mxu0
      %v2976 = vadd.f32 0.0, %v2975
      %v2977 = vpop.f32.mrf.mxu0
      %2978 = vdwg.mxu0
      %2979 = vrot.lane.b32.xlu0 %v492, 112
      %v2980 = vpop.permute.xlu0 %2979
      %2981 = vrot.lane.b32.xlu0 %v492, 80
      %v2982 = vpop.permute.xlu0 %2981
      %v2984 = vsel %vm500, %v2980, 0
      %v2987 = vsel %vm500, %v2982, 0
      %2989 = vmatprep.subr.bf16.mxu0 0
      %2990 = vmatpush1.bf16.xpose.msra.mxu0 0
      %2991 = vmatprep.subr.bf16.mxu0 0
      %2992 = vmatpush1.bf16.xpose.msra.mxu0 0
      %2993 = vmatprep.subr.bf16.mxu0 0
      %2994 = vmatpush1.bf16.xpose.msra.mxu0 0
      %2995 = vmatprep.subr.bf16.mxu0 0
      %2996 = vmatpush1.bf16.xpose.msra.mxu0 0
      %2997 = vmatprep.subr.bf16.mxu0 0
      %2998 = vmatpush1.bf16.xpose.msra.mxu0 0
      %2999 = vmatprep.subr.bf16.mxu0 0
      %3000 = vmatpush1.bf16.xpose.msra.mxu0 0
      %3001 = vmatprep.subr.bf16.mxu0 0
      %3002 = vmatpush1.bf16.xpose.msra.mxu0 0
      %3003 = vmatprep.subr.bf16.mxu0 0
      %3004 = vmatpush1.bf16.xpose.msra.mxu0 %v2987
      %3005 = vmatprep.subr.bf16.mxu0 0
      %3006 = vmatpush2.bf16.xpose.msra.mxu0 0
      %3007 = vmatprep.subr.bf16.mxu0 0
      %3008 = vmatpush2.bf16.xpose.msra.mxu0 0
      %3009 = vmatprep.subr.bf16.mxu0 0
      %3010 = vmatpush2.bf16.xpose.msra.mxu0 0
      %3011 = vmatprep.subr.bf16.mxu0 0
      %3012 = vmatpush2.bf16.xpose.msra.mxu0 0
      %3013 = vmatprep.subr.bf16.mxu0 0
      %3014 = vmatpush2.bf16.xpose.msra.mxu0 0
      %3015 = vmatprep.subr.bf16.mxu0 0
      %3016 = vmatpush2.bf16.xpose.msra.mxu0 0
      %3017 = vmatprep.subr.bf16.mxu0 0
      %3018 = vmatpush2.bf16.xpose.msra.mxu0 0
      %3019 = vmatprep.subr.bf16.mxu0 0
      %3020 = vmatpush2.bf16.xpose.msra.mxu0 0
      %3021 = vmatprep.mubr.bf16.mxu0 0
      %3022 = vmatmul.mubr.bf16.gmra.mxu0 %v2984
      %v3023 = vpop.f32.mrf.mxu0
      %v3024 = vadd.f32 0.0, %v3023
      %v3025 = vpop.f32.mrf.mxu0
      %v3026 = vpop.f32.mrf.mxu0
      %v3027 = vadd.f32 0.0, %v3026
      %v3028 = vpop.f32.mrf.mxu0
      %3029 = vdwg.mxu0
      %3030 = vrot.lane.b32.xlu0 %v493, 112
      %v3031 = vpop.permute.xlu0 %3030
      %3032 = vrot.lane.b32.xlu0 %v493, 80
      %v3033 = vpop.permute.xlu0 %3032
      %v3035 = vsel %vm500, %v3031, 0
      %v3038 = vsel %vm500, %v3033, 0
      %3040 = vmatprep.subr.bf16.mxu0 0
      %3041 = vmatpush1.bf16.xpose.msra.mxu0 0
      %3042 = vmatprep.subr.bf16.mxu0 0
      %3043 = vmatpush1.bf16.xpose.msra.mxu0 0
      %3044 = vmatprep.subr.bf16.mxu0 0
      %3045 = vmatpush1.bf16.xpose.msra.mxu0 0
      %3046 = vmatprep.subr.bf16.mxu0 0
      %3047 = vmatpush1.bf16.xpose.msra.mxu0 0
      %3048 = vmatprep.subr.bf16.mxu0 0
      %3049 = vmatpush1.bf16.xpose.msra.mxu0 0
      %3050 = vmatprep.subr.bf16.mxu0 0
      %3051 = vmatpush1.bf16.xpose.msra.mxu0 0
      %3052 = vmatprep.subr.bf16.mxu0 0
      %3053 = vmatpush1.bf16.xpose.msra.mxu0 0
      %3054 = vmatprep.subr.bf16.mxu0 0
      %3055 = vmatpush1.bf16.xpose.msra.mxu0 %v3038
      %3056 = vmatprep.subr.bf16.mxu0 0
      %3057 = vmatpush2.bf16.xpose.msra.mxu0 0
      %3058 = vmatprep.subr.bf16.mxu0 0
      %3059 = vmatpush2.bf16.xpose.msra.mxu0 0
      %3060 = vmatprep.subr.bf16.mxu0 0
      %3061 = vmatpush2.bf16.xpose.msra.mxu0 0
      %3062 = vmatprep.subr.bf16.mxu0 0
      %3063 = vmatpush2.bf16.xpose.msra.mxu0 0
      %3064 = vmatprep.subr.bf16.mxu0 0
      %3065 = vmatpush2.bf16.xpose.msra.mxu0 0
      %3066 = vmatprep.subr.bf16.mxu0 0
      %3067 = vmatpush2.bf16.xpose.msra.mxu0 0
      %3068 = vmatprep.subr.bf16.mxu0 0
      %3069 = vmatpush2.bf16.xpose.msra.mxu0 0
      %3070 = vmatprep.subr.bf16.mxu0 0
      %3071 = vmatpush2.bf16.xpose.msra.mxu0 0
      %3072 = vmatprep.mubr.bf16.mxu0 0
      %3073 = vmatmul.mubr.bf16.gmra.mxu0 %v3035
      %v3074 = vpop.f32.mrf.mxu0
      %v3075 = vadd.f32 0.0, %v3074
      %v3076 = vpop.f32.mrf.mxu0
      %v3077 = vpop.f32.mrf.mxu0
      %v3078 = vadd.f32 0.0, %v3077
      %v3079 = vpop.f32.mrf.mxu0
      %3080 = vdwg.mxu0
      %3081 = vrot.lane.b32.xlu0 %v494, 112
      %v3082 = vpop.permute.xlu0 %3081
      %3083 = vrot.lane.b32.xlu0 %v494, 80
      %v3084 = vpop.permute.xlu0 %3083
      %v3086 = vsel %vm500, %v3082, 0
      %v3089 = vsel %vm500, %v3084, 0
      %3091 = vmatprep.subr.bf16.mxu0 0
      %3092 = vmatpush1.bf16.xpose.msra.mxu0 0
      %3093 = vmatprep.subr.bf16.mxu0 0
      %3094 = vmatpush1.bf16.xpose.msra.mxu0 0
      %3095 = vmatprep.subr.bf16.mxu0 0
      %3096 = vmatpush1.bf16.xpose.msra.mxu0 0
      %3097 = vmatprep.subr.bf16.mxu0 0
      %3098 = vmatpush1.bf16.xpose.msra.mxu0 0
      %3099 = vmatprep.subr.bf16.mxu0 0
      %3100 = vmatpush1.bf16.xpose.msra.mxu0 0
      %3101 = vmatprep.subr.bf16.mxu0 0
      %3102 = vmatpush1.bf16.xpose.msra.mxu0 0
      %3103 = vmatprep.subr.bf16.mxu0 0
      %3104 = vmatpush1.bf16.xpose.msra.mxu0 0
      %3105 = vmatprep.subr.bf16.mxu0 0
      %3106 = vmatpush1.bf16.xpose.msra.mxu0 %v3089
      %3107 = vmatprep.subr.bf16.mxu0 0
      %3108 = vmatpush2.bf16.xpose.msra.mxu0 0
      %3109 = vmatprep.subr.bf16.mxu0 0
      %3110 = vmatpush2.bf16.xpose.msra.mxu0 0
      %3111 = vmatprep.subr.bf16.mxu0 0
      %3112 = vmatpush2.bf16.xpose.msra.mxu0 0
      %3113 = vmatprep.subr.bf16.mxu0 0
      %3114 = vmatpush2.bf16.xpose.msra.mxu0 0
      %3115 = vmatprep.subr.bf16.mxu0 0
      %3116 = vmatpush2.bf16.xpose.msra.mxu0 0
      %3117 = vmatprep.subr.bf16.mxu0 0
      %3118 = vmatpush2.bf16.xpose.msra.mxu0 0
      %3119 = vmatprep.subr.bf16.mxu0 0
      %3120 = vmatpush2.bf16.xpose.msra.mxu0 0
      %3121 = vmatprep.subr.bf16.mxu0 0
      %3122 = vmatpush2.bf16.xpose.msra.mxu0 0
      %3123 = vmatprep.mubr.bf16.mxu0 0
      %3124 = vmatmul.mubr.bf16.gmra.mxu0 %v3086
      %v3125 = vpop.f32.mrf.mxu0
      %v3126 = vadd.f32 0.0, %v3125
      %v3127 = vpop.f32.mrf.mxu0
      %v3128 = vpop.f32.mrf.mxu0
      %v3129 = vadd.f32 0.0, %v3128
      %v3130 = vpop.f32.mrf.mxu0
      %3131 = vdwg.mxu0
      %3132 = vrot.lane.b32.xlu0 %v495, 112
      %v3133 = vpop.permute.xlu0 %3132
      %3134 = vrot.lane.b32.xlu0 %v495, 80
      %v3135 = vpop.permute.xlu0 %3134
      %v3137 = vsel %vm500, %v3133, 0
      %v3140 = vsel %vm500, %v3135, 0
      %3142 = vmatprep.subr.bf16.mxu0 0
      %3143 = vmatpush1.bf16.xpose.msra.mxu0 0
      %3144 = vmatprep.subr.bf16.mxu0 0
      %3145 = vmatpush1.bf16.xpose.msra.mxu0 0
      %3146 = vmatprep.subr.bf16.mxu0 0
      %3147 = vmatpush1.bf16.xpose.msra.mxu0 0
      %3148 = vmatprep.subr.bf16.mxu0 0
      %3149 = vmatpush1.bf16.xpose.msra.mxu0 0
      %3150 = vmatprep.subr.bf16.mxu0 0
      %3151 = vmatpush1.bf16.xpose.msra.mxu0 0
      %3152 = vmatprep.subr.bf16.mxu0 0
      %3153 = vmatpush1.bf16.xpose.msra.mxu0 0
      %3154 = vmatprep.subr.bf16.mxu0 0
      %3155 = vmatpush1.bf16.xpose.msra.mxu0 0
      %3156 = vmatprep.subr.bf16.mxu0 0
      %3157 = vmatpush1.bf16.xpose.msra.mxu0 %v3140
      %3158 = vmatprep.subr.bf16.mxu0 0
      %3159 = vmatpush2.bf16.xpose.msra.mxu0 0
      %3160 = vmatprep.subr.bf16.mxu0 0
      %3161 = vmatpush2.bf16.xpose.msra.mxu0 0
      %3162 = vmatprep.subr.bf16.mxu0 0
      %3163 = vmatpush2.bf16.xpose.msra.mxu0 0
      %3164 = vmatprep.subr.bf16.mxu0 0
      %3165 = vmatpush2.bf16.xpose.msra.mxu0 0
      %3166 = vmatprep.subr.bf16.mxu0 0
      %3167 = vmatpush2.bf16.xpose.msra.mxu0 0
      %3168 = vmatprep.subr.bf16.mxu0 0
      %3169 = vmatpush2.bf16.xpose.msra.mxu0 0
      %3170 = vmatprep.subr.bf16.mxu0 0
      %3171 = vmatpush2.bf16.xpose.msra.mxu0 0
      %3172 = vmatprep.subr.bf16.mxu0 0
      %3173 = vmatpush2.bf16.xpose.msra.mxu0 0
      %3174 = vmatprep.mubr.bf16.mxu0 0
      %3175 = vmatmul.mubr.bf16.gmra.mxu0 %v3137
      %v3176 = vpop.f32.mrf.mxu0
      %v3177 = vadd.f32 0.0, %v3176
      %v3178 = vpop.f32.mrf.mxu0
      %v3179 = vpop.f32.mrf.mxu0
      %v3180 = vadd.f32 0.0, %v3179
      %v3181 = vpop.f32.mrf.mxu0
      %3182 = vdwg.mxu0
      %3183 = vrot.lane.b32.xlu0 %v496, 112
      %v3184 = vpop.permute.xlu0 %3183
      %3185 = vrot.lane.b32.xlu0 %v496, 80
      %v3186 = vpop.permute.xlu0 %3185
      %v3188 = vsel %vm500, %v3184, 0
      %v3191 = vsel %vm500, %v3186, 0
      %3193 = vmatprep.subr.bf16.mxu0 0
      %3194 = vmatpush1.bf16.xpose.msra.mxu0 0
      %3195 = vmatprep.subr.bf16.mxu0 0
      %3196 = vmatpush1.bf16.xpose.msra.mxu0 0
      %3197 = vmatprep.subr.bf16.mxu0 0
      %3198 = vmatpush1.bf16.xpose.msra.mxu0 0
      %3199 = vmatprep.subr.bf16.mxu0 0
      %3200 = vmatpush1.bf16.xpose.msra.mxu0 0
      %3201 = vmatprep.subr.bf16.mxu0 0
      %3202 = vmatpush1.bf16.xpose.msra.mxu0 0
      %3203 = vmatprep.subr.bf16.mxu0 0
      %3204 = vmatpush1.bf16.xpose.msra.mxu0 0
      %3205 = vmatprep.subr.bf16.mxu0 0
      %3206 = vmatpush1.bf16.xpose.msra.mxu0 0
      %3207 = vmatprep.subr.bf16.mxu0 0
      %3208 = vmatpush1.bf16.xpose.msra.mxu0 %v3191
      %3209 = vmatprep.subr.bf16.mxu0 0
      %3210 = vmatpush2.bf16.xpose.msra.mxu0 0
      %3211 = vmatprep.subr.bf16.mxu0 0
      %3212 = vmatpush2.bf16.xpose.msra.mxu0 0
      %3213 = vmatprep.subr.bf16.mxu0 0
      %3214 = vmatpush2.bf16.xpose.msra.mxu0 0
      %3215 = vmatprep.subr.bf16.mxu0 0
      %3216 = vmatpush2.bf16.xpose.msra.mxu0 0
      %3217 = vmatprep.subr.bf16.mxu0 0
      %3218 = vmatpush2.bf16.xpose.msra.mxu0 0
      %3219 = vmatprep.subr.bf16.mxu0 0
      %3220 = vmatpush2.bf16.xpose.msra.mxu0 0
      %3221 = vmatprep.subr.bf16.mxu0 0
      %3222 = vmatpush2.bf16.xpose.msra.mxu0 0
      %3223 = vmatprep.subr.bf16.mxu0 0
      %3224 = vmatpush2.bf16.xpose.msra.mxu0 0
      %3225 = vmatprep.mubr.bf16.mxu0 0
      %3226 = vmatmul.mubr.bf16.gmra.mxu0 %v3188
      %v3227 = vpop.f32.mrf.mxu0
      %v3228 = vadd.f32 0.0, %v3227
      %v3229 = vpop.f32.mrf.mxu0
      %v3230 = vpop.f32.mrf.mxu0
      %v3231 = vadd.f32 0.0, %v3230
      %v3232 = vpop.f32.mrf.mxu0
      %3233 = vdwg.mxu0
      %v3234 = vsel %vm500, %v2463, -inf
      %3235 = vmax.xlane.f32.xlu0 %v3234
      %v3236 = vpop.xlane.xlu0 %3235
      %v3237 = vsel %vm500, %v2466, -inf
      %3238 = vmax.xlane.f32.xlu0 %v3237
      %v3239 = vpop.xlane.xlu0 %3238
      %v3240 = vsel %vm500, %v2514, -inf
      %3241 = vmax.xlane.f32.xlu0 %v3240
      %v3242 = vpop.xlane.xlu0 %3241
      %v3243 = vsel %vm500, %v2517, -inf
      %3244 = vmax.xlane.f32.xlu0 %v3243
      %v3245 = vpop.xlane.xlu0 %3244
      %v3246 = vsel %vm500, %v2565, -inf
      %3247 = vmax.xlane.f32.xlu0 %v3246
      %v3248 = vpop.xlane.xlu0 %3247
      %v3249 = vsel %vm500, %v2568, -inf
      %3250 = vmax.xlane.f32.xlu0 %v3249
      %v3251 = vpop.xlane.xlu0 %3250
      %v3252 = vsel %vm500, %v2616, -inf
      %3253 = vmax.xlane.f32.xlu0 %v3252
      %v3254 = vpop.xlane.xlu0 %3253
      %v3255 = vsel %vm500, %v2619, -inf
      %3256 = vmax.xlane.f32.xlu0 %v3255
      %v3257 = vpop.xlane.xlu0 %3256
      %v3258 = vsel %vm500, %v2667, -inf
      %3259 = vmax.xlane.f32.xlu0 %v3258
      %v3260 = vpop.xlane.xlu0 %3259
      %v3261 = vsel %vm500, %v2670, -inf
      %3262 = vmax.xlane.f32.xlu0 %v3261
      %v3263 = vpop.xlane.xlu0 %3262
      %v3264 = vsel %vm500, %v2718, -inf
      %3265 = vmax.xlane.f32.xlu0 %v3264
      %v3266 = vpop.xlane.xlu0 %3265
      %v3267 = vsel %vm500, %v2721, -inf
      %3268 = vmax.xlane.f32.xlu0 %v3267
      %v3269 = vpop.xlane.xlu0 %3268
      %v3270 = vsel %vm500, %v2769, -inf
      %3271 = vmax.xlane.f32.xlu0 %v3270
      %v3272 = vpop.xlane.xlu0 %3271
      %v3273 = vsel %vm500, %v2772, -inf
      %3274 = vmax.xlane.f32.xlu0 %v3273
      %v3275 = vpop.xlane.xlu0 %3274
      %v3276 = vsel %vm500, %v2820, -inf
      %3277 = vmax.xlane.f32.xlu0 %v3276
      %v3278 = vpop.xlane.xlu0 %3277
      %v3279 = vsel %vm500, %v2823, -inf
      %3280 = vmax.xlane.f32.xlu0 %v3279
      %v3281 = vpop.xlane.xlu0 %3280
      %v3282 = vsel %vm500, %v2871, -inf
      %3283 = vmax.xlane.f32.xlu0 %v3282
      %v3284 = vpop.xlane.xlu0 %3283
      %v3285 = vsel %vm500, %v2874, -inf
      %3286 = vmax.xlane.f32.xlu0 %v3285
      %v3287 = vpop.xlane.xlu0 %3286
      %v3288 = vsel %vm500, %v2922, -inf
      %3289 = vmax.xlane.f32.xlu0 %v3288
      %v3290 = vpop.xlane.xlu0 %3289
      %v3291 = vsel %vm500, %v2925, -inf
      %3292 = vmax.xlane.f32.xlu0 %v3291
      %v3293 = vpop.xlane.xlu0 %3292
      %v3294 = vsel %vm500, %v2973, -inf
      %3295 = vmax.xlane.f32.xlu0 %v3294
      %v3296 = vpop.xlane.xlu0 %3295
      %v3297 = vsel %vm500, %v2976, -inf
      %3298 = vmax.xlane.f32.xlu0 %v3297
      %v3299 = vpop.xlane.xlu0 %3298
      %v3300 = vsel %vm500, %v3024, -inf
      %3301 = vmax.xlane.f32.xlu0 %v3300
      %v3302 = vpop.xlane.xlu0 %3301
      %v3303 = vsel %vm500, %v3027, -inf
      %3304 = vmax.xlane.f32.xlu0 %v3303
      %v3305 = vpop.xlane.xlu0 %3304
      %v3306 = vsel %vm500, %v3075, -inf
      %3307 = vmax.xlane.f32.xlu0 %v3306
      %v3308 = vpop.xlane.xlu0 %3307
      %v3309 = vsel %vm500, %v3078, -inf
      %3310 = vmax.xlane.f32.xlu0 %v3309
      %v3311 = vpop.xlane.xlu0 %3310
      %v3312 = vsel %vm500, %v3126, -inf
      %3313 = vmax.xlane.f32.xlu0 %v3312
      %v3314 = vpop.xlane.xlu0 %3313
      %v3315 = vsel %vm500, %v3129, -inf
      %3316 = vmax.xlane.f32.xlu0 %v3315
      %v3317 = vpop.xlane.xlu0 %3316
      %v3318 = vsel %vm500, %v3177, -inf
      %3319 = vmax.xlane.f32.xlu0 %v3318
      %v3320 = vpop.xlane.xlu0 %3319
      %v3321 = vsel %vm500, %v3180, -inf
      %3322 = vmax.xlane.f32.xlu0 %v3321
      %v3323 = vpop.xlane.xlu0 %3322
      %v3324 = vsel %vm500, %v3228, -inf
      %3325 = vmax.xlane.f32.xlu0 %v3324
      %v3326 = vpop.xlane.xlu0 %3325
      %v3327 = vsel %vm500, %v3231, -inf
      %3328 = vmax.xlane.f32.xlu0 %v3327
      %v3329 = vpop.xlane.xlu0 %3328
      %v3330 = vsub.f32 %v2463, %v3236
      %v3331 = vsub.f32 %v2466, %v3239
      %v3332 = vsub.f32 %v2514, %v3242
      %v3333 = vsub.f32 %v2517, %v3245
      %v3334 = vsub.f32 %v2565, %v3248
      %v3335 = vsub.f32 %v2568, %v3251
      %v3336 = vsub.f32 %v2616, %v3254
      %v3337 = vsub.f32 %v2619, %v3257
      %v3338 = vsub.f32 %v2667, %v3260
      %v3339 = vsub.f32 %v2670, %v3263
      %v3340 = vsub.f32 %v2718, %v3266
      %v3341 = vsub.f32 %v2721, %v3269
      %v3342 = vsub.f32 %v2769, %v3272
      %v3343 = vsub.f32 %v2772, %v3275
      %v3344 = vsub.f32 %v2820, %v3278
      %v3345 = vsub.f32 %v2823, %v3281
      %v3346 = vsub.f32 %v2871, %v3284
      %v3347 = vsub.f32 %v2874, %v3287
      %v3348 = vsub.f32 %v2922, %v3290
      %v3349 = vsub.f32 %v2925, %v3293
      %v3350 = vsub.f32 %v2973, %v3296
      %v3351 = vsub.f32 %v2976, %v3299
      %v3352 = vsub.f32 %v3024, %v3302
      %v3353 = vsub.f32 %v3027, %v3305
      %v3354 = vsub.f32 %v3075, %v3308
      %v3355 = vsub.f32 %v3078, %v3311
      %v3356 = vsub.f32 %v3126, %v3314
      %v3357 = vsub.f32 %v3129, %v3317
      %v3358 = vsub.f32 %v3177, %v3320
      %v3359 = vsub.f32 %v3180, %v3323
      %v3360 = vsub.f32 %v3228, %v3326
      %v3361 = vsub.f32 %v3231, %v3329
      %v3362 = vmul.f32 %v3330, 1.442695
      %v3363 = vpow.pop %v3362
      %v3364 = vmul.f32 %v3331, 1.442695
      %v3365 = vpow.pop %v3364
      %v3366 = vmul.f32 %v3332, 1.442695
      %v3367 = vpow.pop %v3366
      %v3368 = vmul.f32 %v3333, 1.442695
      %v3369 = vpow.pop %v3368
      %v3370 = vmul.f32 %v3334, 1.442695
      %v3371 = vpow.pop %v3370
      %v3372 = vmul.f32 %v3335, 1.442695
      %v3373 = vpow.pop %v3372
      %v3374 = vmul.f32 %v3336, 1.442695
      %v3375 = vpow.pop %v3374
      %v3376 = vmul.f32 %v3337, 1.442695
      %v3377 = vpow.pop %v3376
      %v3378 = vmul.f32 %v3338, 1.442695
      %v3379 = vpow.pop %v3378
      %v3380 = vmul.f32 %v3339, 1.442695
      %v3381 = vpow.pop %v3380
      %v3382 = vmul.f32 %v3340, 1.442695
      %v3383 = vpow.pop %v3382
      %v3384 = vmul.f32 %v3341, 1.442695
      %v3385 = vpow.pop %v3384
      %v3386 = vmul.f32 %v3342, 1.442695
      %v3387 = vpow.pop %v3386
      %v3388 = vmul.f32 %v3343, 1.442695
      %v3389 = vpow.pop %v3388
      %v3390 = vmul.f32 %v3344, 1.442695
      %v3391 = vpow.pop %v3390
      %v3392 = vmul.f32 %v3345, 1.442695
      %v3393 = vpow.pop %v3392
      %v3394 = vmul.f32 %v3346, 1.442695
      %v3395 = vpow.pop %v3394
      %v3396 = vmul.f32 %v3347, 1.442695
      %v3397 = vpow.pop %v3396
      %v3398 = vmul.f32 %v3348, 1.442695
      %v3399 = vpow.pop %v3398
      %v3400 = vmul.f32 %v3349, 1.442695
      %v3401 = vpow.pop %v3400
      %v3402 = vmul.f32 %v3350, 1.442695
      %v3403 = vpow.pop %v3402
      %v3404 = vmul.f32 %v3351, 1.442695
      %v3405 = vpow.pop %v3404
      %v3406 = vmul.f32 %v3352, 1.442695
      %v3407 = vpow.pop %v3406
      %v3408 = vmul.f32 %v3353, 1.442695
      %v3409 = vpow.pop %v3408
      %v3410 = vmul.f32 %v3354, 1.442695
      %v3411 = vpow.pop %v3410
      %v3412 = vmul.f32 %v3355, 1.442695
      %v3413 = vpow.pop %v3412
      %v3414 = vmul.f32 %v3356, 1.442695
      %v3415 = vpow.pop %v3414
      %v3416 = vmul.f32 %v3357, 1.442695
      %v3417 = vpow.pop %v3416
      %v3418 = vmul.f32 %v3358, 1.442695
      %v3419 = vpow.pop %v3418
      %v3420 = vmul.f32 %v3359, 1.442695
      %v3421 = vpow.pop %v3420
      %v3422 = vmul.f32 %v3360, 1.442695
      %v3423 = vpow.pop %v3422
      %v3424 = vmul.f32 %v3361, 1.442695
      %v3425 = vpow.pop %v3424
      %v3426 = vsel %vm500, %v3363, 0.0
      %3427 = vadd.xlane.f32.xlu0 %v3426
      %v3428 = vpop.xlane.xlu0 %3427
      %v3429 = vsel %vm500, %v3365, 0.0
      %3430 = vadd.xlane.f32.xlu0 %v3429
      %v3431 = vpop.xlane.xlu0 %3430
      %v3432 = vsel %vm500, %v3367, 0.0
      %3433 = vadd.xlane.f32.xlu0 %v3432
      %v3434 = vpop.xlane.xlu0 %3433
      %v3435 = vsel %vm500, %v3369, 0.0
      %3436 = vadd.xlane.f32.xlu0 %v3435
      %v3437 = vpop.xlane.xlu0 %3436
      %v3438 = vsel %vm500, %v3371, 0.0
      %3439 = vadd.xlane.f32.xlu0 %v3438
      %v3440 = vpop.xlane.xlu0 %3439
      %v3441 = vsel %vm500, %v3373, 0.0
      %3442 = vadd.xlane.f32.xlu0 %v3441
      %v3443 = vpop.xlane.xlu0 %3442
      %v3444 = vsel %vm500, %v3375, 0.0
      %3445 = vadd.xlane.f32.xlu0 %v3444
      %v3446 = vpop.xlane.xlu0 %3445
      %v3447 = vsel %vm500, %v3377, 0.0
      %3448 = vadd.xlane.f32.xlu0 %v3447
      %v3449 = vpop.xlane.xlu0 %3448
      %v3450 = vsel %vm500, %v3379, 0.0
      %3451 = vadd.xlane.f32.xlu0 %v3450
      %v3452 = vpop.xlane.xlu0 %3451
      %v3453 = vsel %vm500, %v3381, 0.0
      %3454 = vadd.xlane.f32.xlu0 %v3453
      %v3455 = vpop.xlane.xlu0 %3454
      %v3456 = vsel %vm500, %v3383, 0.0
      %3457 = vadd.xlane.f32.xlu0 %v3456
      %v3458 = vpop.xlane.xlu0 %3457
      %v3459 = vsel %vm500, %v3385, 0.0
      %3460 = vadd.xlane.f32.xlu0 %v3459
      %v3461 = vpop.xlane.xlu0 %3460
      %v3462 = vsel %vm500, %v3387, 0.0
      %3463 = vadd.xlane.f32.xlu0 %v3462
      %v3464 = vpop.xlane.xlu0 %3463
      %v3465 = vsel %vm500, %v3389, 0.0
      %3466 = vadd.xlane.f32.xlu0 %v3465
      %v3467 = vpop.xlane.xlu0 %3466
      %v3468 = vsel %vm500, %v3391, 0.0
      %3469 = vadd.xlane.f32.xlu0 %v3468
      %v3470 = vpop.xlane.xlu0 %3469
      %v3471 = vsel %vm500, %v3393, 0.0
      %3472 = vadd.xlane.f32.xlu0 %v3471
      %v3473 = vpop.xlane.xlu0 %3472
      %v3474 = vsel %vm500, %v3395, 0.0
      %3475 = vadd.xlane.f32.xlu0 %v3474
      %v3476 = vpop.xlane.xlu0 %3475
      %v3477 = vsel %vm500, %v3397, 0.0
      %3478 = vadd.xlane.f32.xlu0 %v3477
      %v3479 = vpop.xlane.xlu0 %3478
      %v3480 = vsel %vm500, %v3399, 0.0
      %3481 = vadd.xlane.f32.xlu0 %v3480
      %v3482 = vpop.xlane.xlu0 %3481
      %v3483 = vsel %vm500, %v3401, 0.0
      %3484 = vadd.xlane.f32.xlu0 %v3483
      %v3485 = vpop.xlane.xlu0 %3484
      %v3486 = vsel %vm500, %v3403, 0.0
      %3487 = vadd.xlane.f32.xlu0 %v3486
      %v3488 = vpop.xlane.xlu0 %3487
      %v3489 = vsel %vm500, %v3405, 0.0
      %3490 = vadd.xlane.f32.xlu0 %v3489
      %v3491 = vpop.xlane.xlu0 %3490
      %v3492 = vsel %vm500, %v3407, 0.0
      %3493 = vadd.xlane.f32.xlu0 %v3492
      %v3494 = vpop.xlane.xlu0 %3493
      %v3495 = vsel %vm500, %v3409, 0.0
      %3496 = vadd.xlane.f32.xlu0 %v3495
      %v3497 = vpop.xlane.xlu0 %3496
      %v3498 = vsel %vm500, %v3411, 0.0
      %3499 = vadd.xlane.f32.xlu0 %v3498
      %v3500 = vpop.xlane.xlu0 %3499
      %v3501 = vsel %vm500, %v3413, 0.0
      %3502 = vadd.xlane.f32.xlu0 %v3501
      %v3503 = vpop.xlane.xlu0 %3502
      %v3504 = vsel %vm500, %v3415, 0.0
      %3505 = vadd.xlane.f32.xlu0 %v3504
      %v3506 = vpop.xlane.xlu0 %3505
      %v3507 = vsel %vm500, %v3417, 0.0
      %3508 = vadd.xlane.f32.xlu0 %v3507
      %v3509 = vpop.xlane.xlu0 %3508
      %v3510 = vsel %vm500, %v3419, 0.0
      %3511 = vadd.xlane.f32.xlu0 %v3510
      %v3512 = vpop.xlane.xlu0 %3511
      %v3513 = vsel %vm500, %v3421, 0.0
      %3514 = vadd.xlane.f32.xlu0 %v3513
      %v3515 = vpop.xlane.xlu0 %3514
      %v3516 = vsel %vm500, %v3423, 0.0
      %3517 = vadd.xlane.f32.xlu0 %v3516
      %v3518 = vpop.xlane.xlu0 %3517
      %v3519 = vsel %vm500, %v3425, 0.0
      %3520 = vadd.xlane.f32.xlu0 %v3519
      %v3521 = vpop.xlane.xlu0 %3520
      %v3522 = vrcp.pop %v3428
      %v3523 = vrcp.pop %v3431
      %v3524 = vrcp.pop %v3434
      %v3525 = vrcp.pop %v3437
      %v3526 = vrcp.pop %v3440
      %v3527 = vrcp.pop %v3443
      %v3528 = vrcp.pop %v3446
      %v3529 = vrcp.pop %v3449
      %v3530 = vrcp.pop %v3452
      %v3531 = vrcp.pop %v3455
      %v3532 = vrcp.pop %v3458
      %v3533 = vrcp.pop %v3461
      %v3534 = vrcp.pop %v3464
      %v3535 = vrcp.pop %v3467
      %v3536 = vrcp.pop %v3470
      %v3537 = vrcp.pop %v3473
      %v3538 = vrcp.pop %v3476
      %v3539 = vrcp.pop %v3479
      %v3540 = vrcp.pop %v3482
      %v3541 = vrcp.pop %v3485
      %v3542 = vrcp.pop %v3488
      %v3543 = vrcp.pop %v3491
      %v3544 = vrcp.pop %v3494
      %v3545 = vrcp.pop %v3497
      %v3546 = vrcp.pop %v3500
      %v3547 = vrcp.pop %v3503
      %v3548 = vrcp.pop %v3506
      %v3549 = vrcp.pop %v3509
      %v3550 = vrcp.pop %v3512
      %v3551 = vrcp.pop %v3515
      %v3552 = vrcp.pop %v3518
      %v3553 = vrcp.pop %v3521
      %v3554 = vmul.f32 %v3363, %v3522
      %v3555 = vmul.f32 %v3365, %v3523
      %v3556 = vmul.f32 %v3367, %v3524
      %v3557 = vmul.f32 %v3369, %v3525
      %v3558 = vmul.f32 %v3371, %v3526
      %v3559 = vmul.f32 %v3373, %v3527
      %v3560 = vmul.f32 %v3375, %v3528
      %v3561 = vmul.f32 %v3377, %v3529
      %v3562 = vmul.f32 %v3379, %v3530
      %v3563 = vmul.f32 %v3381, %v3531
      %v3564 = vmul.f32 %v3383, %v3532
      %v3565 = vmul.f32 %v3385, %v3533
      %v3566 = vmul.f32 %v3387, %v3534
      %v3567 = vmul.f32 %v3389, %v3535
      %v3568 = vmul.f32 %v3391, %v3536
      %v3569 = vmul.f32 %v3393, %v3537
      %v3570 = vmul.f32 %v3395, %v3538
      %v3571 = vmul.f32 %v3397, %v3539
      %v3572 = vmul.f32 %v3399, %v3540
      %v3573 = vmul.f32 %v3401, %v3541
      %v3574 = vmul.f32 %v3403, %v3542
      %v3575 = vmul.f32 %v3405, %v3543
      %v3576 = vmul.f32 %v3407, %v3544
      %v3577 = vmul.f32 %v3409, %v3545
      %v3578 = vmul.f32 %v3411, %v3546
      %v3579 = vmul.f32 %v3413, %v3547
      %v3580 = vmul.f32 %v3415, %v3548
      %v3581 = vmul.f32 %v3417, %v3549
      %v3582 = vmul.f32 %v3419, %v3550
      %v3583 = vmul.f32 %v3421, %v3551
      %v3584 = vmul.f32 %v3423, %v3552
      %v3585 = vmul.f32 %v3425, %v3553
      %v3586 = vpack.c.bf16 %v3555, %v3554
      %v3587 = vpack.c.bf16 %v3557, %v3556
      %v3588 = vpack.c.bf16 %v3559, %v3558
      %v3589 = vpack.c.bf16 %v3561, %v3560
      %v3590 = vpack.c.bf16 %v3563, %v3562
      %v3591 = vpack.c.bf16 %v3565, %v3564
      %v3592 = vpack.c.bf16 %v3567, %v3566
      %v3593 = vpack.c.bf16 %v3569, %v3568
      %v3594 = vpack.c.bf16 %v3571, %v3570
      %v3595 = vpack.c.bf16 %v3573, %v3572
      %v3596 = vpack.c.bf16 %v3575, %v3574
      %v3597 = vpack.c.bf16 %v3577, %v3576
      %v3598 = vpack.c.bf16 %v3579, %v3578
      %v3599 = vpack.c.bf16 %v3581, %v3580
      %v3600 = vpack.c.bf16 %v3583, %v3582
      %v3601 = vpack.c.bf16 %v3585, %v3584
      %3602 = vrot.lane.b32.xlu0 %v481, 48
      %v3603 = vpop.permute.xlu0 %3602
      %v3606 = vsel %vm500, %v3586, 0
      %3608 = vmatprep.subr.bf16.mxu0 0
      %3609 = vmatpush1.bf16.msra.mxu0 0
      %3610 = vmatprep.subr.bf16.mxu0 0
      %3611 = vmatpush1.bf16.msra.mxu0 0
      %3612 = vmatprep.subr.bf16.mxu0 0
      %3613 = vmatpush1.bf16.msra.mxu0 0
      %3614 = vmatprep.subr.bf16.mxu0 0
      %3615 = vmatpush1.bf16.msra.mxu0 0
      %3616 = vmatprep.subr.bf16.mxu0 0
      %3617 = vmatpush1.bf16.msra.mxu0 0
      %3618 = vmatprep.subr.bf16.mxu0 0
      %3619 = vmatpush1.bf16.msra.mxu0 0
      %3620 = vmatprep.subr.bf16.mxu0 0
      %3621 = vmatpush1.bf16.msra.mxu0 0
      %3622 = vmatprep.subr.bf16.mxu0 0
      %3623 = vmatpush1.bf16.msra.mxu0 %v3603
      %3624 = vmatprep.subr.bf16.mxu0 0
      %3625 = vmatpush2.bf16.msra.mxu0 0
      %3626 = vmatprep.subr.bf16.mxu0 0
      %3627 = vmatpush2.bf16.msra.mxu0 0
      %3628 = vmatprep.subr.bf16.mxu0 0
      %3629 = vmatpush2.bf16.msra.mxu0 0
      %3630 = vmatprep.subr.bf16.mxu0 0
      %3631 = vmatpush2.bf16.msra.mxu0 0
      %3632 = vmatprep.subr.bf16.mxu0 0
      %3633 = vmatpush2.bf16.msra.mxu0 0
      %3634 = vmatprep.subr.bf16.mxu0 0
      %3635 = vmatpush2.bf16.msra.mxu0 0
      %3636 = vmatprep.subr.bf16.mxu0 0
      %3637 = vmatpush2.bf16.msra.mxu0 0
      %3638 = vmatprep.subr.bf16.mxu0 0
      %3639 = vmatpush2.bf16.msra.mxu0 0
      %3640 = vmatprep.mubr.bf16.mxu0 0
      %3641 = vmatmul.mubr.bf16.gmra.mxu0 %v3606
      %v3642 = vpop.f32.mrf.mxu0
      %v3643 = vadd.f32 0.0, %v3642
      %v3644 = vpop.f32.mrf.mxu0
      %v3645 = vpop.f32.mrf.mxu0
      %v3646 = vadd.f32 0.0, %v3645
      %v3647 = vpop.f32.mrf.mxu0
      %3648 = vdwg.mxu0
      %3649 = vrot.lane.b32.xlu0 %v482, 48
      %v3650 = vpop.permute.xlu0 %3649
      %v3653 = vsel %vm500, %v3587, 0
      %3655 = vmatprep.subr.bf16.mxu0 0
      %3656 = vmatpush1.bf16.msra.mxu0 0
      %3657 = vmatprep.subr.bf16.mxu0 0
      %3658 = vmatpush1.bf16.msra.mxu0 0
      %3659 = vmatprep.subr.bf16.mxu0 0
      %3660 = vmatpush1.bf16.msra.mxu0 0
      %3661 = vmatprep.subr.bf16.mxu0 0
      %3662 = vmatpush1.bf16.msra.mxu0 0
      %3663 = vmatprep.subr.bf16.mxu0 0
      %3664 = vmatpush1.bf16.msra.mxu0 0
      %3665 = vmatprep.subr.bf16.mxu0 0
      %3666 = vmatpush1.bf16.msra.mxu0 0
      %3667 = vmatprep.subr.bf16.mxu0 0
      %3668 = vmatpush1.bf16.msra.mxu0 0
      %3669 = vmatprep.subr.bf16.mxu0 0
      %3670 = vmatpush1.bf16.msra.mxu0 %v3650
      %3671 = vmatprep.subr.bf16.mxu0 0
      %3672 = vmatpush2.bf16.msra.mxu0 0
      %3673 = vmatprep.subr.bf16.mxu0 0
      %3674 = vmatpush2.bf16.msra.mxu0 0
      %3675 = vmatprep.subr.bf16.mxu0 0
      %3676 = vmatpush2.bf16.msra.mxu0 0
      %3677 = vmatprep.subr.bf16.mxu0 0
      %3678 = vmatpush2.bf16.msra.mxu0 0
      %3679 = vmatprep.subr.bf16.mxu0 0
      %3680 = vmatpush2.bf16.msra.mxu0 0
      %3681 = vmatprep.subr.bf16.mxu0 0
      %3682 = vmatpush2.bf16.msra.mxu0 0
      %3683 = vmatprep.subr.bf16.mxu0 0
      %3684 = vmatpush2.bf16.msra.mxu0 0
      %3685 = vmatprep.subr.bf16.mxu0 0
      %3686 = vmatpush2.bf16.msra.mxu0 0
      %3687 = vmatprep.mubr.bf16.mxu0 0
      %3688 = vmatmul.mubr.bf16.gmra.mxu0 %v3653
      %v3689 = vpop.f32.mrf.mxu0
      %v3690 = vadd.f32 0.0, %v3689
      %v3691 = vpop.f32.mrf.mxu0
      %v3692 = vpop.f32.mrf.mxu0
      %v3693 = vadd.f32 0.0, %v3692
      %v3694 = vpop.f32.mrf.mxu0
      %3695 = vdwg.mxu0
      %3696 = vrot.lane.b32.xlu0 %v483, 48
      %v3697 = vpop.permute.xlu0 %3696
      %v3700 = vsel %vm500, %v3588, 0
      %3702 = vmatprep.subr.bf16.mxu0 0
      %3703 = vmatpush1.bf16.msra.mxu0 0
      %3704 = vmatprep.subr.bf16.mxu0 0
      %3705 = vmatpush1.bf16.msra.mxu0 0
      %3706 = vmatprep.subr.bf16.mxu0 0
      %3707 = vmatpush1.bf16.msra.mxu0 0
      %3708 = vmatprep.subr.bf16.mxu0 0
      %3709 = vmatpush1.bf16.msra.mxu0 0
      %3710 = vmatprep.subr.bf16.mxu0 0
      %3711 = vmatpush1.bf16.msra.mxu0 0
      %3712 = vmatprep.subr.bf16.mxu0 0
      %3713 = vmatpush1.bf16.msra.mxu0 0
      %3714 = vmatprep.subr.bf16.mxu0 0
      %3715 = vmatpush1.bf16.msra.mxu0 0
      %3716 = vmatprep.subr.bf16.mxu0 0
      %3717 = vmatpush1.bf16.msra.mxu0 %v3697
      %3718 = vmatprep.subr.bf16.mxu0 0
      %3719 = vmatpush2.bf16.msra.mxu0 0
      %3720 = vmatprep.subr.bf16.mxu0 0
      %3721 = vmatpush2.bf16.msra.mxu0 0
      %3722 = vmatprep.subr.bf16.mxu0 0
      %3723 = vmatpush2.bf16.msra.mxu0 0
      %3724 = vmatprep.subr.bf16.mxu0 0
      %3725 = vmatpush2.bf16.msra.mxu0 0
      %3726 = vmatprep.subr.bf16.mxu0 0
      %3727 = vmatpush2.bf16.msra.mxu0 0
      %3728 = vmatprep.subr.bf16.mxu0 0
      %3729 = vmatpush2.bf16.msra.mxu0 0
      %3730 = vmatprep.subr.bf16.mxu0 0
      %3731 = vmatpush2.bf16.msra.mxu0 0
      %3732 = vmatprep.subr.bf16.mxu0 0
      %3733 = vmatpush2.bf16.msra.mxu0 0
      %3734 = vmatprep.mubr.bf16.mxu0 0
      %3735 = vmatmul.mubr.bf16.gmra.mxu0 %v3700
      %v3736 = vpop.f32.mrf.mxu0
      %v3737 = vadd.f32 0.0, %v3736
      %v3738 = vpop.f32.mrf.mxu0
      %v3739 = vpop.f32.mrf.mxu0
      %v3740 = vadd.f32 0.0, %v3739
      %v3741 = vpop.f32.mrf.mxu0
      %3742 = vdwg.mxu0
      %3743 = vrot.lane.b32.xlu0 %v484, 48
      %v3744 = vpop.permute.xlu0 %3743
      %v3747 = vsel %vm500, %v3589, 0
      %3749 = vmatprep.subr.bf16.mxu0 0
      %3750 = vmatpush1.bf16.msra.mxu0 0
      %3751 = vmatprep.subr.bf16.mxu0 0
      %3752 = vmatpush1.bf16.msra.mxu0 0
      %3753 = vmatprep.subr.bf16.mxu0 0
      %3754 = vmatpush1.bf16.msra.mxu0 0
      %3755 = vmatprep.subr.bf16.mxu0 0
      %3756 = vmatpush1.bf16.msra.mxu0 0
      %3757 = vmatprep.subr.bf16.mxu0 0
      %3758 = vmatpush1.bf16.msra.mxu0 0
      %3759 = vmatprep.subr.bf16.mxu0 0
      %3760 = vmatpush1.bf16.msra.mxu0 0
      %3761 = vmatprep.subr.bf16.mxu0 0
      %3762 = vmatpush1.bf16.msra.mxu0 0
      %3763 = vmatprep.subr.bf16.mxu0 0
      %3764 = vmatpush1.bf16.msra.mxu0 %v3744
      %3765 = vmatprep.subr.bf16.mxu0 0
      %3766 = vmatpush2.bf16.msra.mxu0 0
      %3767 = vmatprep.subr.bf16.mxu0 0
      %3768 = vmatpush2.bf16.msra.mxu0 0
      %3769 = vmatprep.subr.bf16.mxu0 0
      %3770 = vmatpush2.bf16.msra.mxu0 0
      %3771 = vmatprep.subr.bf16.mxu0 0
      %3772 = vmatpush2.bf16.msra.mxu0 0
      %3773 = vmatprep.subr.bf16.mxu0 0
      %3774 = vmatpush2.bf16.msra.mxu0 0
      %3775 = vmatprep.subr.bf16.mxu0 0
      %3776 = vmatpush2.bf16.msra.mxu0 0
      %3777 = vmatprep.subr.bf16.mxu0 0
      %3778 = vmatpush2.bf16.msra.mxu0 0
      %3779 = vmatprep.subr.bf16.mxu0 0
      %3780 = vmatpush2.bf16.msra.mxu0 0
      %3781 = vmatprep.mubr.bf16.mxu0 0
      %3782 = vmatmul.mubr.bf16.gmra.mxu0 %v3747
      %v3783 = vpop.f32.mrf.mxu0
      %v3784 = vadd.f32 0.0, %v3783
      %v3785 = vpop.f32.mrf.mxu0
      %v3786 = vpop.f32.mrf.mxu0
      %v3787 = vadd.f32 0.0, %v3786
      %v3788 = vpop.f32.mrf.mxu0
      %3789 = vdwg.mxu0
      %3790 = vrot.lane.b32.xlu0 %v485, 48
      %v3791 = vpop.permute.xlu0 %3790
      %v3794 = vsel %vm500, %v3590, 0
      %3796 = vmatprep.subr.bf16.mxu0 0
      %3797 = vmatpush1.bf16.msra.mxu0 0
      %3798 = vmatprep.subr.bf16.mxu0 0
      %3799 = vmatpush1.bf16.msra.mxu0 0
      %3800 = vmatprep.subr.bf16.mxu0 0
      %3801 = vmatpush1.bf16.msra.mxu0 0
      %3802 = vmatprep.subr.bf16.mxu0 0
      %3803 = vmatpush1.bf16.msra.mxu0 0
      %3804 = vmatprep.subr.bf16.mxu0 0
      %3805 = vmatpush1.bf16.msra.mxu0 0
      %3806 = vmatprep.subr.bf16.mxu0 0
      %3807 = vmatpush1.bf16.msra.mxu0 0
      %3808 = vmatprep.subr.bf16.mxu0 0
      %3809 = vmatpush1.bf16.msra.mxu0 0
      %3810 = vmatprep.subr.bf16.mxu0 0
      %3811 = vmatpush1.bf16.msra.mxu0 %v3791
      %3812 = vmatprep.subr.bf16.mxu0 0
      %3813 = vmatpush2.bf16.msra.mxu0 0
      %3814 = vmatprep.subr.bf16.mxu0 0
      %3815 = vmatpush2.bf16.msra.mxu0 0
      %3816 = vmatprep.subr.bf16.mxu0 0
      %3817 = vmatpush2.bf16.msra.mxu0 0
      %3818 = vmatprep.subr.bf16.mxu0 0
      %3819 = vmatpush2.bf16.msra.mxu0 0
      %3820 = vmatprep.subr.bf16.mxu0 0
      %3821 = vmatpush2.bf16.msra.mxu0 0
      %3822 = vmatprep.subr.bf16.mxu0 0
      %3823 = vmatpush2.bf16.msra.mxu0 0
      %3824 = vmatprep.subr.bf16.mxu0 0
      %3825 = vmatpush2.bf16.msra.mxu0 0
      %3826 = vmatprep.subr.bf16.mxu0 0
      %3827 = vmatpush2.bf16.msra.mxu0 0
      %3828 = vmatprep.mubr.bf16.mxu0 0
      %3829 = vmatmul.mubr.bf16.gmra.mxu0 %v3794
      %v3830 = vpop.f32.mrf.mxu0
      %v3831 = vadd.f32 0.0, %v3830
      %v3832 = vpop.f32.mrf.mxu0
      %v3833 = vpop.f32.mrf.mxu0
      %v3834 = vadd.f32 0.0, %v3833
      %v3835 = vpop.f32.mrf.mxu0
      %3836 = vdwg.mxu0
      %3837 = vrot.lane.b32.xlu0 %v486, 48
      %v3838 = vpop.permute.xlu0 %3837
      %v3841 = vsel %vm500, %v3591, 0
      %3843 = vmatprep.subr.bf16.mxu0 0
      %3844 = vmatpush1.bf16.msra.mxu0 0
      %3845 = vmatprep.subr.bf16.mxu0 0
      %3846 = vmatpush1.bf16.msra.mxu0 0
      %3847 = vmatprep.subr.bf16.mxu0 0
      %3848 = vmatpush1.bf16.msra.mxu0 0
      %3849 = vmatprep.subr.bf16.mxu0 0
      %3850 = vmatpush1.bf16.msra.mxu0 0
      %3851 = vmatprep.subr.bf16.mxu0 0
      %3852 = vmatpush1.bf16.msra.mxu0 0
      %3853 = vmatprep.subr.bf16.mxu0 0
      %3854 = vmatpush1.bf16.msra.mxu0 0
      %3855 = vmatprep.subr.bf16.mxu0 0
      %3856 = vmatpush1.bf16.msra.mxu0 0
      %3857 = vmatprep.subr.bf16.mxu0 0
      %3858 = vmatpush1.bf16.msra.mxu0 %v3838
      %3859 = vmatprep.subr.bf16.mxu0 0
      %3860 = vmatpush2.bf16.msra.mxu0 0
      %3861 = vmatprep.subr.bf16.mxu0 0
      %3862 = vmatpush2.bf16.msra.mxu0 0
      %3863 = vmatprep.subr.bf16.mxu0 0
      %3864 = vmatpush2.bf16.msra.mxu0 0
      %3865 = vmatprep.subr.bf16.mxu0 0
      %3866 = vmatpush2.bf16.msra.mxu0 0
      %3867 = vmatprep.subr.bf16.mxu0 0
      %3868 = vmatpush2.bf16.msra.mxu0 0
      %3869 = vmatprep.subr.bf16.mxu0 0
      %3870 = vmatpush2.bf16.msra.mxu0 0
      %3871 = vmatprep.subr.bf16.mxu0 0
      %3872 = vmatpush2.bf16.msra.mxu0 0
      %3873 = vmatprep.subr.bf16.mxu0 0
      %3874 = vmatpush2.bf16.msra.mxu0 0
      %3875 = vmatprep.mubr.bf16.mxu0 0
      %3876 = vmatmul.mubr.bf16.gmra.mxu0 %v3841
      %v3877 = vpop.f32.mrf.mxu0
      %v3878 = vadd.f32 0.0, %v3877
      %v3879 = vpop.f32.mrf.mxu0
      %v3880 = vpop.f32.mrf.mxu0
      %v3881 = vadd.f32 0.0, %v3880
      %v3882 = vpop.f32.mrf.mxu0
      %3883 = vdwg.mxu0
      %3884 = vrot.lane.b32.xlu0 %v487, 48
      %v3885 = vpop.permute.xlu0 %3884
      %v3888 = vsel %vm500, %v3592, 0
      %3890 = vmatprep.subr.bf16.mxu0 0
      %3891 = vmatpush1.bf16.msra.mxu0 0
      %3892 = vmatprep.subr.bf16.mxu0 0
      %3893 = vmatpush1.bf16.msra.mxu0 0
      %3894 = vmatprep.subr.bf16.mxu0 0
      %3895 = vmatpush1.bf16.msra.mxu0 0
      %3896 = vmatprep.subr.bf16.mxu0 0
      %3897 = vmatpush1.bf16.msra.mxu0 0
      %3898 = vmatprep.subr.bf16.mxu0 0
      %3899 = vmatpush1.bf16.msra.mxu0 0
      %3900 = vmatprep.subr.bf16.mxu0 0
      %3901 = vmatpush1.bf16.msra.mxu0 0
      %3902 = vmatprep.subr.bf16.mxu0 0
      %3903 = vmatpush1.bf16.msra.mxu0 0
      %3904 = vmatprep.subr.bf16.mxu0 0
      %3905 = vmatpush1.bf16.msra.mxu0 %v3885
      %3906 = vmatprep.subr.bf16.mxu0 0
      %3907 = vmatpush2.bf16.msra.mxu0 0
      %3908 = vmatprep.subr.bf16.mxu0 0
      %3909 = vmatpush2.bf16.msra.mxu0 0
      %3910 = vmatprep.subr.bf16.mxu0 0
      %3911 = vmatpush2.bf16.msra.mxu0 0
      %3912 = vmatprep.subr.bf16.mxu0 0
      %3913 = vmatpush2.bf16.msra.mxu0 0
      %3914 = vmatprep.subr.bf16.mxu0 0
      %3915 = vmatpush2.bf16.msra.mxu0 0
      %3916 = vmatprep.subr.bf16.mxu0 0
      %3917 = vmatpush2.bf16.msra.mxu0 0
      %3918 = vmatprep.subr.bf16.mxu0 0
      %3919 = vmatpush2.bf16.msra.mxu0 0
      %3920 = vmatprep.subr.bf16.mxu0 0
      %3921 = vmatpush2.bf16.msra.mxu0 0
      %3922 = vmatprep.mubr.bf16.mxu0 0
      %3923 = vmatmul.mubr.bf16.gmra.mxu0 %v3888
      %v3924 = vpop.f32.mrf.mxu0
      %v3925 = vadd.f32 0.0, %v3924
      %v3926 = vpop.f32.mrf.mxu0
      %v3927 = vpop.f32.mrf.mxu0
      %v3928 = vadd.f32 0.0, %v3927
      %v3929 = vpop.f32.mrf.mxu0
      %3930 = vdwg.mxu0
      %3931 = vrot.lane.b32.xlu0 %v488, 48
      %v3932 = vpop.permute.xlu0 %3931
      %v3935 = vsel %vm500, %v3593, 0
      %3937 = vmatprep.subr.bf16.mxu0 0
      %3938 = vmatpush1.bf16.msra.mxu0 0
      %3939 = vmatprep.subr.bf16.mxu0 0
      %3940 = vmatpush1.bf16.msra.mxu0 0
      %3941 = vmatprep.subr.bf16.mxu0 0
      %3942 = vmatpush1.bf16.msra.mxu0 0
      %3943 = vmatprep.subr.bf16.mxu0 0
      %3944 = vmatpush1.bf16.msra.mxu0 0
      %3945 = vmatprep.subr.bf16.mxu0 0
      %3946 = vmatpush1.bf16.msra.mxu0 0
      %3947 = vmatprep.subr.bf16.mxu0 0
      %3948 = vmatpush1.bf16.msra.mxu0 0
      %3949 = vmatprep.subr.bf16.mxu0 0
      %3950 = vmatpush1.bf16.msra.mxu0 0
      %3951 = vmatprep.subr.bf16.mxu0 0
      %3952 = vmatpush1.bf16.msra.mxu0 %v3932
      %3953 = vmatprep.subr.bf16.mxu0 0
      %3954 = vmatpush2.bf16.msra.mxu0 0
      %3955 = vmatprep.subr.bf16.mxu0 0
      %3956 = vmatpush2.bf16.msra.mxu0 0
      %3957 = vmatprep.subr.bf16.mxu0 0
      %3958 = vmatpush2.bf16.msra.mxu0 0
      %3959 = vmatprep.subr.bf16.mxu0 0
      %3960 = vmatpush2.bf16.msra.mxu0 0
      %3961 = vmatprep.subr.bf16.mxu0 0
      %3962 = vmatpush2.bf16.msra.mxu0 0
      %3963 = vmatprep.subr.bf16.mxu0 0
      %3964 = vmatpush2.bf16.msra.mxu0 0
      %3965 = vmatprep.subr.bf16.mxu0 0
      %3966 = vmatpush2.bf16.msra.mxu0 0
      %3967 = vmatprep.subr.bf16.mxu0 0
      %3968 = vmatpush2.bf16.msra.mxu0 0
      %3969 = vmatprep.mubr.bf16.mxu0 0
      %3970 = vmatmul.mubr.bf16.gmra.mxu0 %v3935
      %v3971 = vpop.f32.mrf.mxu0
      %v3972 = vadd.f32 0.0, %v3971
      %v3973 = vpop.f32.mrf.mxu0
      %v3974 = vpop.f32.mrf.mxu0
      %v3975 = vadd.f32 0.0, %v3974
      %v3976 = vpop.f32.mrf.mxu0
      %3977 = vdwg.mxu0
      %3978 = vrot.lane.b32.xlu0 %v489, 48
      %v3979 = vpop.permute.xlu0 %3978
      %v3982 = vsel %vm500, %v3594, 0
      %3984 = vmatprep.subr.bf16.mxu0 0
      %3985 = vmatpush1.bf16.msra.mxu0 0
      %3986 = vmatprep.subr.bf16.mxu0 0
      %3987 = vmatpush1.bf16.msra.mxu0 0
      %3988 = vmatprep.subr.bf16.mxu0 0
      %3989 = vmatpush1.bf16.msra.mxu0 0
      %3990 = vmatprep.subr.bf16.mxu0 0
      %3991 = vmatpush1.bf16.msra.mxu0 0
      %3992 = vmatprep.subr.bf16.mxu0 0
      %3993 = vmatpush1.bf16.msra.mxu0 0
      %3994 = vmatprep.subr.bf16.mxu0 0
      %3995 = vmatpush1.bf16.msra.mxu0 0
      %3996 = vmatprep.subr.bf16.mxu0 0
      %3997 = vmatpush1.bf16.msra.mxu0 0
      %3998 = vmatprep.subr.bf16.mxu0 0
      %3999 = vmatpush1.bf16.msra.mxu0 %v3979
      %4000 = vmatprep.subr.bf16.mxu0 0
      %4001 = vmatpush2.bf16.msra.mxu0 0
      %4002 = vmatprep.subr.bf16.mxu0 0
      %4003 = vmatpush2.bf16.msra.mxu0 0
      %4004 = vmatprep.subr.bf16.mxu0 0
      %4005 = vmatpush2.bf16.msra.mxu0 0
      %4006 = vmatprep.subr.bf16.mxu0 0
      %4007 = vmatpush2.bf16.msra.mxu0 0
      %4008 = vmatprep.subr.bf16.mxu0 0
      %4009 = vmatpush2.bf16.msra.mxu0 0
      %4010 = vmatprep.subr.bf16.mxu0 0
      %4011 = vmatpush2.bf16.msra.mxu0 0
      %4012 = vmatprep.subr.bf16.mxu0 0
      %4013 = vmatpush2.bf16.msra.mxu0 0
      %4014 = vmatprep.subr.bf16.mxu0 0
      %4015 = vmatpush2.bf16.msra.mxu0 0
      %4016 = vmatprep.mubr.bf16.mxu0 0
      %4017 = vmatmul.mubr.bf16.gmra.mxu0 %v3982
      %v4018 = vpop.f32.mrf.mxu0
      %v4019 = vadd.f32 0.0, %v4018
      %v4020 = vpop.f32.mrf.mxu0
      %v4021 = vpop.f32.mrf.mxu0
      %v4022 = vadd.f32 0.0, %v4021
      %v4023 = vpop.f32.mrf.mxu0
      %4024 = vdwg.mxu0
      %4025 = vrot.lane.b32.xlu0 %v490, 48
      %v4026 = vpop.permute.xlu0 %4025
      %v4029 = vsel %vm500, %v3595, 0
      %4031 = vmatprep.subr.bf16.mxu0 0
      %4032 = vmatpush1.bf16.msra.mxu0 0
      %4033 = vmatprep.subr.bf16.mxu0 0
      %4034 = vmatpush1.bf16.msra.mxu0 0
      %4035 = vmatprep.subr.bf16.mxu0 0
      %4036 = vmatpush1.bf16.msra.mxu0 0
      %4037 = vmatprep.subr.bf16.mxu0 0
      %4038 = vmatpush1.bf16.msra.mxu0 0
      %4039 = vmatprep.subr.bf16.mxu0 0
      %4040 = vmatpush1.bf16.msra.mxu0 0
      %4041 = vmatprep.subr.bf16.mxu0 0
      %4042 = vmatpush1.bf16.msra.mxu0 0
      %4043 = vmatprep.subr.bf16.mxu0 0
      %4044 = vmatpush1.bf16.msra.mxu0 0
      %4045 = vmatprep.subr.bf16.mxu0 0
      %4046 = vmatpush1.bf16.msra.mxu0 %v4026
      %4047 = vmatprep.subr.bf16.mxu0 0
      %4048 = vmatpush2.bf16.msra.mxu0 0
      %4049 = vmatprep.subr.bf16.mxu0 0
      %4050 = vmatpush2.bf16.msra.mxu0 0
      %4051 = vmatprep.subr.bf16.mxu0 0
      %4052 = vmatpush2.bf16.msra.mxu0 0
      %4053 = vmatprep.subr.bf16.mxu0 0
      %4054 = vmatpush2.bf16.msra.mxu0 0
      %4055 = vmatprep.subr.bf16.mxu0 0
      %4056 = vmatpush2.bf16.msra.mxu0 0
      %4057 = vmatprep.subr.bf16.mxu0 0
      %4058 = vmatpush2.bf16.msra.mxu0 0
      %4059 = vmatprep.subr.bf16.mxu0 0
      %4060 = vmatpush2.bf16.msra.mxu0 0
      %4061 = vmatprep.subr.bf16.mxu0 0
      %4062 = vmatpush2.bf16.msra.mxu0 0
      %4063 = vmatprep.mubr.bf16.mxu0 0
      %4064 = vmatmul.mubr.bf16.gmra.mxu0 %v4029
      %v4065 = vpop.f32.mrf.mxu0
      %v4066 = vadd.f32 0.0, %v4065
      %v4067 = vpop.f32.mrf.mxu0
      %v4068 = vpop.f32.mrf.mxu0
      %v4069 = vadd.f32 0.0, %v4068
      %v4070 = vpop.f32.mrf.mxu0
      %4071 = vdwg.mxu0
      %4072 = vrot.lane.b32.xlu0 %v491, 48
      %v4073 = vpop.permute.xlu0 %4072
      %v4076 = vsel %vm500, %v3596, 0
      %4078 = vmatprep.subr.bf16.mxu0 0
      %4079 = vmatpush1.bf16.msra.mxu0 0
      %4080 = vmatprep.subr.bf16.mxu0 0
      %4081 = vmatpush1.bf16.msra.mxu0 0
      %4082 = vmatprep.subr.bf16.mxu0 0
      %4083 = vmatpush1.bf16.msra.mxu0 0
      %4084 = vmatprep.subr.bf16.mxu0 0
      %4085 = vmatpush1.bf16.msra.mxu0 0
      %4086 = vmatprep.subr.bf16.mxu0 0
      %4087 = vmatpush1.bf16.msra.mxu0 0
      %4088 = vmatprep.subr.bf16.mxu0 0
      %4089 = vmatpush1.bf16.msra.mxu0 0
      %4090 = vmatprep.subr.bf16.mxu0 0
      %4091 = vmatpush1.bf16.msra.mxu0 0
      %4092 = vmatprep.subr.bf16.mxu0 0
      %4093 = vmatpush1.bf16.msra.mxu0 %v4073
      %4094 = vmatprep.subr.bf16.mxu0 0
      %4095 = vmatpush2.bf16.msra.mxu0 0
      %4096 = vmatprep.subr.bf16.mxu0 0
      %4097 = vmatpush2.bf16.msra.mxu0 0
      %4098 = vmatprep.subr.bf16.mxu0 0
      %4099 = vmatpush2.bf16.msra.mxu0 0
      %4100 = vmatprep.subr.bf16.mxu0 0
      %4101 = vmatpush2.bf16.msra.mxu0 0
      %4102 = vmatprep.subr.bf16.mxu0 0
      %4103 = vmatpush2.bf16.msra.mxu0 0
      %4104 = vmatprep.subr.bf16.mxu0 0
      %4105 = vmatpush2.bf16.msra.mxu0 0
      %4106 = vmatprep.subr.bf16.mxu0 0
      %4107 = vmatpush2.bf16.msra.mxu0 0
      %4108 = vmatprep.subr.bf16.mxu0 0
      %4109 = vmatpush2.bf16.msra.mxu0 0
      %4110 = vmatprep.mubr.bf16.mxu0 0
      %4111 = vmatmul.mubr.bf16.gmra.mxu0 %v4076
      %v4112 = vpop.f32.mrf.mxu0
      %v4113 = vadd.f32 0.0, %v4112
      %v4114 = vpop.f32.mrf.mxu0
      %v4115 = vpop.f32.mrf.mxu0
      %v4116 = vadd.f32 0.0, %v4115
      %v4117 = vpop.f32.mrf.mxu0
      %4118 = vdwg.mxu0
      %4119 = vrot.lane.b32.xlu0 %v492, 48
      %v4120 = vpop.permute.xlu0 %4119
      %v4123 = vsel %vm500, %v3597, 0
      %4125 = vmatprep.subr.bf16.mxu0 0
      %4126 = vmatpush1.bf16.msra.mxu0 0
      %4127 = vmatprep.subr.bf16.mxu0 0
      %4128 = vmatpush1.bf16.msra.mxu0 0
      %4129 = vmatprep.subr.bf16.mxu0 0
      %4130 = vmatpush1.bf16.msra.mxu0 0
      %4131 = vmatprep.subr.bf16.mxu0 0
      %4132 = vmatpush1.bf16.msra.mxu0 0
      %4133 = vmatprep.subr.bf16.mxu0 0
      %4134 = vmatpush1.bf16.msra.mxu0 0
      %4135 = vmatprep.subr.bf16.mxu0 0
      %4136 = vmatpush1.bf16.msra.mxu0 0
      %4137 = vmatprep.subr.bf16.mxu0 0
      %4138 = vmatpush1.bf16.msra.mxu0 0
      %4139 = vmatprep.subr.bf16.mxu0 0
      %4140 = vmatpush1.bf16.msra.mxu0 %v4120
      %4141 = vmatprep.subr.bf16.mxu0 0
      %4142 = vmatpush2.bf16.msra.mxu0 0
      %4143 = vmatprep.subr.bf16.mxu0 0
      %4144 = vmatpush2.bf16.msra.mxu0 0
      %4145 = vmatprep.subr.bf16.mxu0 0
      %4146 = vmatpush2.bf16.msra.mxu0 0
      %4147 = vmatprep.subr.bf16.mxu0 0
      %4148 = vmatpush2.bf16.msra.mxu0 0
      %4149 = vmatprep.subr.bf16.mxu0 0
      %4150 = vmatpush2.bf16.msra.mxu0 0
      %4151 = vmatprep.subr.bf16.mxu0 0
      %4152 = vmatpush2.bf16.msra.mxu0 0
      %4153 = vmatprep.subr.bf16.mxu0 0
      %4154 = vmatpush2.bf16.msra.mxu0 0
      %4155 = vmatprep.subr.bf16.mxu0 0
      %4156 = vmatpush2.bf16.msra.mxu0 0
      %4157 = vmatprep.mubr.bf16.mxu0 0
      %4158 = vmatmul.mubr.bf16.gmra.mxu0 %v4123
      %v4159 = vpop.f32.mrf.mxu0
      %v4160 = vadd.f32 0.0, %v4159
      %v4161 = vpop.f32.mrf.mxu0
      %v4162 = vpop.f32.mrf.mxu0
      %v4163 = vadd.f32 0.0, %v4162
      %v4164 = vpop.f32.mrf.mxu0
      %4165 = vdwg.mxu0
      %4166 = vrot.lane.b32.xlu0 %v493, 48
      %v4167 = vpop.permute.xlu0 %4166
      %v4170 = vsel %vm500, %v3598, 0
      %4172 = vmatprep.subr.bf16.mxu0 0
      %4173 = vmatpush1.bf16.msra.mxu0 0
      %4174 = vmatprep.subr.bf16.mxu0 0
      %4175 = vmatpush1.bf16.msra.mxu0 0
      %4176 = vmatprep.subr.bf16.mxu0 0
      %4177 = vmatpush1.bf16.msra.mxu0 0
      %4178 = vmatprep.subr.bf16.mxu0 0
      %4179 = vmatpush1.bf16.msra.mxu0 0
      %4180 = vmatprep.subr.bf16.mxu0 0
      %4181 = vmatpush1.bf16.msra.mxu0 0
      %4182 = vmatprep.subr.bf16.mxu0 0
      %4183 = vmatpush1.bf16.msra.mxu0 0
      %4184 = vmatprep.subr.bf16.mxu0 0
      %4185 = vmatpush1.bf16.msra.mxu0 0
      %4186 = vmatprep.subr.bf16.mxu0 0
      %4187 = vmatpush1.bf16.msra.mxu0 %v4167
      %4188 = vmatprep.subr.bf16.mxu0 0
      %4189 = vmatpush2.bf16.msra.mxu0 0
      %4190 = vmatprep.subr.bf16.mxu0 0
      %4191 = vmatpush2.bf16.msra.mxu0 0
      %4192 = vmatprep.subr.bf16.mxu0 0
      %4193 = vmatpush2.bf16.msra.mxu0 0
      %4194 = vmatprep.subr.bf16.mxu0 0
      %4195 = vmatpush2.bf16.msra.mxu0 0
      %4196 = vmatprep.subr.bf16.mxu0 0
      %4197 = vmatpush2.bf16.msra.mxu0 0
      %4198 = vmatprep.subr.bf16.mxu0 0
      %4199 = vmatpush2.bf16.msra.mxu0 0
      %4200 = vmatprep.subr.bf16.mxu0 0
      %4201 = vmatpush2.bf16.msra.mxu0 0
      %4202 = vmatprep.subr.bf16.mxu0 0
      %4203 = vmatpush2.bf16.msra.mxu0 0
      %4204 = vmatprep.mubr.bf16.mxu0 0
      %4205 = vmatmul.mubr.bf16.gmra.mxu0 %v4170
      %v4206 = vpop.f32.mrf.mxu0
      %v4207 = vadd.f32 0.0, %v4206
      %v4208 = vpop.f32.mrf.mxu0
      %v4209 = vpop.f32.mrf.mxu0
      %v4210 = vadd.f32 0.0, %v4209
      %v4211 = vpop.f32.mrf.mxu0
      %4212 = vdwg.mxu0
      %4213 = vrot.lane.b32.xlu0 %v494, 48
      %v4214 = vpop.permute.xlu0 %4213
      %v4217 = vsel %vm500, %v3599, 0
      %4219 = vmatprep.subr.bf16.mxu0 0
      %4220 = vmatpush1.bf16.msra.mxu0 0
      %4221 = vmatprep.subr.bf16.mxu0 0
      %4222 = vmatpush1.bf16.msra.mxu0 0
      %4223 = vmatprep.subr.bf16.mxu0 0
      %4224 = vmatpush1.bf16.msra.mxu0 0
      %4225 = vmatprep.subr.bf16.mxu0 0
      %4226 = vmatpush1.bf16.msra.mxu0 0
      %4227 = vmatprep.subr.bf16.mxu0 0
      %4228 = vmatpush1.bf16.msra.mxu0 0
      %4229 = vmatprep.subr.bf16.mxu0 0
      %4230 = vmatpush1.bf16.msra.mxu0 0
      %4231 = vmatprep.subr.bf16.mxu0 0
      %4232 = vmatpush1.bf16.msra.mxu0 0
      %4233 = vmatprep.subr.bf16.mxu0 0
      %4234 = vmatpush1.bf16.msra.mxu0 %v4214
      %4235 = vmatprep.subr.bf16.mxu0 0
      %4236 = vmatpush2.bf16.msra.mxu0 0
      %4237 = vmatprep.subr.bf16.mxu0 0
      %4238 = vmatpush2.bf16.msra.mxu0 0
      %4239 = vmatprep.subr.bf16.mxu0 0
      %4240 = vmatpush2.bf16.msra.mxu0 0
      %4241 = vmatprep.subr.bf16.mxu0 0
      %4242 = vmatpush2.bf16.msra.mxu0 0
      %4243 = vmatprep.subr.bf16.mxu0 0
      %4244 = vmatpush2.bf16.msra.mxu0 0
      %4245 = vmatprep.subr.bf16.mxu0 0
      %4246 = vmatpush2.bf16.msra.mxu0 0
      %4247 = vmatprep.subr.bf16.mxu0 0
      %4248 = vmatpush2.bf16.msra.mxu0 0
      %4249 = vmatprep.subr.bf16.mxu0 0
      %4250 = vmatpush2.bf16.msra.mxu0 0
      %4251 = vmatprep.mubr.bf16.mxu0 0
      %4252 = vmatmul.mubr.bf16.gmra.mxu0 %v4217
      %v4253 = vpop.f32.mrf.mxu0
      %v4254 = vadd.f32 0.0, %v4253
      %v4255 = vpop.f32.mrf.mxu0
      %v4256 = vpop.f32.mrf.mxu0
      %v4257 = vadd.f32 0.0, %v4256
      %v4258 = vpop.f32.mrf.mxu0
      %4259 = vdwg.mxu0
      %4260 = vrot.lane.b32.xlu0 %v495, 48
      %v4261 = vpop.permute.xlu0 %4260
      %v4264 = vsel %vm500, %v3600, 0
      %4266 = vmatprep.subr.bf16.mxu0 0
      %4267 = vmatpush1.bf16.msra.mxu0 0
      %4268 = vmatprep.subr.bf16.mxu0 0
      %4269 = vmatpush1.bf16.msra.mxu0 0
      %4270 = vmatprep.subr.bf16.mxu0 0
      %4271 = vmatpush1.bf16.msra.mxu0 0
      %4272 = vmatprep.subr.bf16.mxu0 0
      %4273 = vmatpush1.bf16.msra.mxu0 0
      %4274 = vmatprep.subr.bf16.mxu0 0
      %4275 = vmatpush1.bf16.msra.mxu0 0
      %4276 = vmatprep.subr.bf16.mxu0 0
      %4277 = vmatpush1.bf16.msra.mxu0 0
      %4278 = vmatprep.subr.bf16.mxu0 0
      %4279 = vmatpush1.bf16.msra.mxu0 0
      %4280 = vmatprep.subr.bf16.mxu0 0
      %4281 = vmatpush1.bf16.msra.mxu0 %v4261
      %4282 = vmatprep.subr.bf16.mxu0 0
      %4283 = vmatpush2.bf16.msra.mxu0 0
      %4284 = vmatprep.subr.bf16.mxu0 0
      %4285 = vmatpush2.bf16.msra.mxu0 0
      %4286 = vmatprep.subr.bf16.mxu0 0
      %4287 = vmatpush2.bf16.msra.mxu0 0
      %4288 = vmatprep.subr.bf16.mxu0 0
      %4289 = vmatpush2.bf16.msra.mxu0 0
      %4290 = vmatprep.subr.bf16.mxu0 0
      %4291 = vmatpush2.bf16.msra.mxu0 0
      %4292 = vmatprep.subr.bf16.mxu0 0
      %4293 = vmatpush2.bf16.msra.mxu0 0
      %4294 = vmatprep.subr.bf16.mxu0 0
      %4295 = vmatpush2.bf16.msra.mxu0 0
      %4296 = vmatprep.subr.bf16.mxu0 0
      %4297 = vmatpush2.bf16.msra.mxu0 0
      %4298 = vmatprep.mubr.bf16.mxu0 0
      %4299 = vmatmul.mubr.bf16.gmra.mxu0 %v4264
      %v4300 = vpop.f32.mrf.mxu0
      %v4301 = vadd.f32 0.0, %v4300
      %v4302 = vpop.f32.mrf.mxu0
      %v4303 = vpop.f32.mrf.mxu0
      %v4304 = vadd.f32 0.0, %v4303
      %v4305 = vpop.f32.mrf.mxu0
      %4306 = vdwg.mxu0
      %4307 = vrot.lane.b32.xlu0 %v496, 48
      %v4308 = vpop.permute.xlu0 %4307
      %v4311 = vsel %vm500, %v3601, 0
      %4313 = vmatprep.subr.bf16.mxu0 0
      %4314 = vmatpush1.bf16.msra.mxu0 0
      %4315 = vmatprep.subr.bf16.mxu0 0
      %4316 = vmatpush1.bf16.msra.mxu0 0
      %4317 = vmatprep.subr.bf16.mxu0 0
      %4318 = vmatpush1.bf16.msra.mxu0 0
      %4319 = vmatprep.subr.bf16.mxu0 0
      %4320 = vmatpush1.bf16.msra.mxu0 0
      %4321 = vmatprep.subr.bf16.mxu0 0
      %4322 = vmatpush1.bf16.msra.mxu0 0
      %4323 = vmatprep.subr.bf16.mxu0 0
      %4324 = vmatpush1.bf16.msra.mxu0 0
      %4325 = vmatprep.subr.bf16.mxu0 0
      %4326 = vmatpush1.bf16.msra.mxu0 0
      %4327 = vmatprep.subr.bf16.mxu0 0
      %4328 = vmatpush1.bf16.msra.mxu0 %v4308
      %4329 = vmatprep.subr.bf16.mxu0 0
      %4330 = vmatpush2.bf16.msra.mxu0 0
      %4331 = vmatprep.subr.bf16.mxu0 0
      %4332 = vmatpush2.bf16.msra.mxu0 0
      %4333 = vmatprep.subr.bf16.mxu0 0
      %4334 = vmatpush2.bf16.msra.mxu0 0
      %4335 = vmatprep.subr.bf16.mxu0 0
      %4336 = vmatpush2.bf16.msra.mxu0 0
      %4337 = vmatprep.subr.bf16.mxu0 0
      %4338 = vmatpush2.bf16.msra.mxu0 0
      %4339 = vmatprep.subr.bf16.mxu0 0
      %4340 = vmatpush2.bf16.msra.mxu0 0
      %4341 = vmatprep.subr.bf16.mxu0 0
      %4342 = vmatpush2.bf16.msra.mxu0 0
      %4343 = vmatprep.subr.bf16.mxu0 0
      %4344 = vmatpush2.bf16.msra.mxu0 0
      %4345 = vmatprep.mubr.bf16.mxu0 0
      %4346 = vmatmul.mubr.bf16.gmra.mxu0 %v4311
      %v4347 = vpop.f32.mrf.mxu0
      %v4348 = vadd.f32 0.0, %v4347
      %v4349 = vpop.f32.mrf.mxu0
      %v4350 = vpop.f32.mrf.mxu0
      %v4351 = vadd.f32 0.0, %v4350
      %v4352 = vpop.f32.mrf.mxu0
      %4353 = vdwg.mxu0
      %4386 = vrot.lane.b32.xlu0 %v3643, 16
      %v4387 = vpop.permute.xlu0 %4386
      %4388 = vrot.lane.b32.xlu0 %v3646, 16
      %v4389 = vpop.permute.xlu0 %4388
      %4390 = vrot.lane.b32.xlu0 %v3690, 16
      %v4391 = vpop.permute.xlu0 %4390
      %4392 = vrot.lane.b32.xlu0 %v3693, 16
      %v4393 = vpop.permute.xlu0 %4392
      %4394 = vrot.lane.b32.xlu0 %v3737, 16
      %v4395 = vpop.permute.xlu0 %4394
      %4396 = vrot.lane.b32.xlu0 %v3740, 16
      %v4397 = vpop.permute.xlu0 %4396
      %4398 = vrot.lane.b32.xlu0 %v3784, 16
      %v4399 = vpop.permute.xlu0 %4398
      %4400 = vrot.lane.b32.xlu0 %v3787, 16
      %v4401 = vpop.permute.xlu0 %4400
      %4402 = vrot.lane.b32.xlu0 %v3831, 16
      %v4403 = vpop.permute.xlu0 %4402
      %4404 = vrot.lane.b32.xlu0 %v3834, 16
      %v4405 = vpop.permute.xlu0 %4404
      %4406 = vrot.lane.b32.xlu0 %v3878, 16
      %v4407 = vpop.permute.xlu0 %4406
      %4408 = vrot.lane.b32.xlu0 %v3881, 16
      %v4409 = vpop.permute.xlu0 %4408
      %4410 = vrot.lane.b32.xlu0 %v3925, 16
      %v4411 = vpop.permute.xlu0 %4410
      %4412 = vrot.lane.b32.xlu0 %v3928, 16
      %v4413 = vpop.permute.xlu0 %4412
      %4414 = vrot.lane.b32.xlu0 %v3972, 16
      %v4415 = vpop.permute.xlu0 %4414
      %4416 = vrot.lane.b32.xlu0 %v3975, 16
      %v4417 = vpop.permute.xlu0 %4416
      %4418 = vrot.lane.b32.xlu0 %v4019, 16
      %v4419 = vpop.permute.xlu0 %4418
      %4420 = vrot.lane.b32.xlu0 %v4022, 16
      %v4421 = vpop.permute.xlu0 %4420
      %4422 = vrot.lane.b32.xlu0 %v4066, 16
      %v4423 = vpop.permute.xlu0 %4422
      %4424 = vrot.lane.b32.xlu0 %v4069, 16
      %v4425 = vpop.permute.xlu0 %4424
      %4426 = vrot.lane.b32.xlu0 %v4113, 16
      %v4427 = vpop.permute.xlu0 %4426
      %4428 = vrot.lane.b32.xlu0 %v4116, 16
      %v4429 = vpop.permute.xlu0 %4428
      %4430 = vrot.lane.b32.xlu0 %v4160, 16
      %v4431 = vpop.permute.xlu0 %4430
      %4432 = vrot.lane.b32.xlu0 %v4163, 16
      %v4433 = vpop.permute.xlu0 %4432
      %4434 = vrot.lane.b32.xlu0 %v4207, 16
      %v4435 = vpop.permute.xlu0 %4434
      %4436 = vrot.lane.b32.xlu0 %v4210, 16
      %v4437 = vpop.permute.xlu0 %4436
      %4438 = vrot.lane.b32.xlu0 %v4254, 16
      %v4439 = vpop.permute.xlu0 %4438
      %4440 = vrot.lane.b32.xlu0 %v4257, 16
      %v4441 = vpop.permute.xlu0 %4440
      %4442 = vrot.lane.b32.xlu0 %v4301, 16
      %v4443 = vpop.permute.xlu0 %4442
      %4444 = vrot.lane.b32.xlu0 %v4304, 16
      %v4445 = vpop.permute.xlu0 %4444
      %4446 = vrot.lane.b32.xlu0 %v4348, 16
      %v4447 = vpop.permute.xlu0 %4446
      %4448 = vrot.lane.b32.xlu0 %v4351, 16
      %v4449 = vpop.permute.xlu0 %4448
      %v4482 = vsel %vm500, %v1707, %v4387
      %v4483 = vsel %vm500, %v1710, %v4389
      %v4484 = vsel %vm500, %v1754, %v4391
      %v4485 = vsel %vm500, %v1757, %v4393
      %v4486 = vsel %vm500, %v1801, %v4395
      %v4487 = vsel %vm500, %v1804, %v4397
      %v4488 = vsel %vm500, %v1848, %v4399
      %v4489 = vsel %vm500, %v1851, %v4401
      %v4490 = vsel %vm500, %v1895, %v4403
      %v4491 = vsel %vm500, %v1898, %v4405
      %v4492 = vsel %vm500, %v1942, %v4407
      %v4493 = vsel %vm500, %v1945, %v4409
      %v4494 = vsel %vm500, %v1989, %v4411
      %v4495 = vsel %vm500, %v1992, %v4413
      %v4496 = vsel %vm500, %v2036, %v4415
      %v4497 = vsel %vm500, %v2039, %v4417
      %v4498 = vsel %vm500, %v2083, %v4419
      %v4499 = vsel %vm500, %v2086, %v4421
      %v4500 = vsel %vm500, %v2130, %v4423
      %v4501 = vsel %vm500, %v2133, %v4425
      %v4502 = vsel %vm500, %v2177, %v4427
      %v4503 = vsel %vm500, %v2180, %v4429
      %v4504 = vsel %vm500, %v2224, %v4431
      %v4505 = vsel %vm500, %v2227, %v4433
      %v4506 = vsel %vm500, %v2271, %v4435
      %v4507 = vsel %vm500, %v2274, %v4437
      %v4508 = vsel %vm500, %v2318, %v4439
      %v4509 = vsel %vm500, %v2321, %v4441
      %v4510 = vsel %vm500, %v2365, %v4443
      %v4511 = vsel %vm500, %v2368, %v4445
      %v4512 = vsel %vm500, %v2412, %v4447
      %v4513 = vsel %vm500, %v2415, %v4449
      %v4514 = vpack.c.bf16 %v4483, %v4482
      %v4515 = vpack.c.bf16 %v4485, %v4484
      %v4516 = vpack.c.bf16 %v4487, %v4486
      %v4517 = vpack.c.bf16 %v4489, %v4488
      %v4518 = vpack.c.bf16 %v4491, %v4490
      %v4519 = vpack.c.bf16 %v4493, %v4492
      %v4520 = vpack.c.bf16 %v4495, %v4494
      %v4521 = vpack.c.bf16 %v4497, %v4496
      %v4522 = vpack.c.bf16 %v4499, %v4498
      %v4523 = vpack.c.bf16 %v4501, %v4500
      %v4524 = vpack.c.bf16 %v4503, %v4502
      %v4525 = vpack.c.bf16 %v4505, %v4504
      %v4526 = vpack.c.bf16 %v4507, %v4506
      %v4527 = vpack.c.bf16 %v4509, %v4508
      %v4528 = vpack.c.bf16 %v4511, %v4510
      %v4529 = vpack.c.bf16 %v4513, %v4512
      %v4530 = vld [vmem:[%s2] sm:$0xf]
      %v4531 = vld [vmem:[%s2 + $0x4] sm:$0xf]
      %v4532 = vld [vmem:[%s2 + $0x8] sm:$0xf]
      %v4533 = vld [vmem:[%s2 + $0xc] sm:$0xf]
      %v4534 = vld [vmem:[%s3] sm:$0x1]
      %v4536 = vlaneseq
      %v4537 = vshrl.u32 %v4536, 7
      %v4538 = vsub.s32 0, %v4537
      %v4539 = vrot.slane %v4534, %v4538
      %v4545 = vunpack.c.l.b16 %v4530
      %v4546 = vunpack.c.l.b16 %v4531
      %v4547 = vunpack.c.l.b16 %v4532
      %v4548 = vunpack.c.l.b16 %v4533
      %v4549 = vpack.c.b16 %v4546, %v4545
      %v4550 = vpack.c.b16 %v4548, %v4547
      %v4554 = vsel %vm271, %v4514, 0
      %v4557 = vsel %vm271, %v4515, 0
      %v4560 = vsel %vm271, %v4516, 0
      %v4563 = vsel %vm271, %v4517, 0
      %v4566 = vsel %vm271, %v4518, 0
      %v4569 = vsel %vm271, %v4519, 0
      %v4572 = vsel %vm271, %v4520, 0
      %v4575 = vsel %vm271, %v4521, 0
      %v4578 = vsel %vm271, %v4522, 0
      %v4581 = vsel %vm271, %v4523, 0
      %v4584 = vsel %vm271, %v4524, 0
      %v4587 = vsel %vm271, %v4525, 0
      %v4590 = vsel %vm271, %v4526, 0
      %v4593 = vsel %vm271, %v4527, 0
      %v4596 = vsel %vm271, %v4528, 0
      %v4599 = vsel %vm271, %v4529, 0
      %4601 = vmatprep.subr.bf16.mxu0 0
      %4602 = vmatpush1.bf16.msra.mxu0 0
      %4603 = vmatprep.subr.bf16.mxu0 0
      %4604 = vmatpush1.bf16.msra.mxu0 0
      %4605 = vmatprep.subr.bf16.mxu0 0
      %4606 = vmatpush1.bf16.msra.mxu0 0
      %4607 = vmatprep.subr.bf16.mxu0 0
      %4608 = vmatpush1.bf16.msra.mxu0 0
      %4609 = vmatprep.subr.bf16.mxu0 0
      %4610 = vmatpush1.bf16.msra.mxu0 0
      %4611 = vmatprep.subr.bf16.mxu0 0
      %4612 = vmatpush1.bf16.msra.mxu0 0
      %4613 = vmatprep.subr.bf16.mxu0 0
      %4614 = vmatpush1.bf16.msra.mxu0 %v4550
      %4615 = vmatprep.subr.bf16.mxu0 0
      %4616 = vmatpush1.bf16.msra.mxu0 %v4549
      %4617 = vmatprep.subr.bf16.mxu0 0
      %4618 = vmatpush2.bf16.msra.mxu0 0
      %4619 = vmatprep.subr.bf16.mxu0 0
      %4620 = vmatpush2.bf16.msra.mxu0 0
      %4621 = vmatprep.subr.bf16.mxu0 0
      %4622 = vmatpush2.bf16.msra.mxu0 0
      %4623 = vmatprep.subr.bf16.mxu0 0
      %4624 = vmatpush2.bf16.msra.mxu0 0
      %4625 = vmatprep.subr.bf16.mxu0 0
      %4626 = vmatpush2.bf16.msra.mxu0 0
      %4627 = vmatprep.subr.bf16.mxu0 0
      %4628 = vmatpush2.bf16.msra.mxu0 0
      %4629 = vmatprep.subr.bf16.mxu0 0
      %4630 = vmatpush2.bf16.msra.mxu0 0
      %4631 = vmatprep.subr.bf16.mxu0 0
      %4632 = vmatpush2.bf16.msra.mxu0 0
      %4633 = vmatprep.mubr.bf16.mxu0 0
      %4634 = vmatmul.mubr.bf16.gmra.mxu0 %v4554
      %v4635 = vpop.f32.mrf.mxu0
      %v4636 = vadd.f32 %v4539, %v4635
      %v4637 = vpop.f32.mrf.mxu0
      %v4638 = vpop.f32.mrf.mxu0
      %v4639 = vadd.f32 %v4539, %v4638
      %v4640 = vpop.f32.mrf.mxu0
      %4641 = vmatprep.mubr.bf16.mxu0 0
      %4642 = vmatmul.mubr.bf16.gmra.mxu0 %v4557
      %v4643 = vpop.f32.mrf.mxu0
      %v4644 = vadd.f32 %v4539, %v4643
      %v4645 = vpop.f32.mrf.mxu0
      %v4646 = vpop.f32.mrf.mxu0
      %v4647 = vadd.f32 %v4539, %v4646
      %v4648 = vpop.f32.mrf.mxu0
      %4649 = vmatprep.mubr.bf16.mxu0 0
      %4650 = vmatmul.mubr.bf16.gmra.mxu0 %v4560
      %v4651 = vpop.f32.mrf.mxu0
      %v4652 = vadd.f32 %v4539, %v4651
      %v4653 = vpop.f32.mrf.mxu0
      %v4654 = vpop.f32.mrf.mxu0
      %v4655 = vadd.f32 %v4539, %v4654
      %v4656 = vpop.f32.mrf.mxu0
      %4657 = vmatprep.mubr.bf16.mxu0 0
      %4658 = vmatmul.mubr.bf16.gmra.mxu0 %v4563
      %v4659 = vpop.f32.mrf.mxu0
      %v4660 = vadd.f32 %v4539, %v4659
      %v4661 = vpop.f32.mrf.mxu0
      %v4662 = vpop.f32.mrf.mxu0
      %v4663 = vadd.f32 %v4539, %v4662
      %v4664 = vpop.f32.mrf.mxu0
      %4665 = vmatprep.mubr.bf16.mxu0 0
      %4666 = vmatmul.mubr.bf16.gmra.mxu0 %v4566
      %v4667 = vpop.f32.mrf.mxu0
      %v4668 = vadd.f32 %v4539, %v4667
      %v4669 = vpop.f32.mrf.mxu0
      %v4670 = vpop.f32.mrf.mxu0
      %v4671 = vadd.f32 %v4539, %v4670
      %v4672 = vpop.f32.mrf.mxu0
      %4673 = vmatprep.mubr.bf16.mxu0 0
      %4674 = vmatmul.mubr.bf16.gmra.mxu0 %v4569
      %v4675 = vpop.f32.mrf.mxu0
      %v4676 = vadd.f32 %v4539, %v4675
      %v4677 = vpop.f32.mrf.mxu0
      %v4678 = vpop.f32.mrf.mxu0
      %v4679 = vadd.f32 %v4539, %v4678
      %v4680 = vpop.f32.mrf.mxu0
      %4681 = vmatprep.mubr.bf16.mxu0 0
      %4682 = vmatmul.mubr.bf16.gmra.mxu0 %v4572
      %v4683 = vpop.f32.mrf.mxu0
      %v4684 = vadd.f32 %v4539, %v4683
      %v4685 = vpop.f32.mrf.mxu0
      %v4686 = vpop.f32.mrf.mxu0
      %v4687 = vadd.f32 %v4539, %v4686
      %v4688 = vpop.f32.mrf.mxu0
      %4689 = vmatprep.mubr.bf16.mxu0 0
      %4690 = vmatmul.mubr.bf16.gmra.mxu0 %v4575
      %v4691 = vpop.f32.mrf.mxu0
      %v4692 = vadd.f32 %v4539, %v4691
      %v4693 = vpop.f32.mrf.mxu0
      %v4694 = vpop.f32.mrf.mxu0
      %v4695 = vadd.f32 %v4539, %v4694
      %v4696 = vpop.f32.mrf.mxu0
      %4697 = vmatprep.mubr.bf16.mxu0 0
      %4698 = vmatmul.mubr.bf16.gmra.mxu0 %v4578
      %v4699 = vpop.f32.mrf.mxu0
      %v4700 = vadd.f32 %v4539, %v4699
      %v4701 = vpop.f32.mrf.mxu0
      %v4702 = vpop.f32.mrf.mxu0
      %v4703 = vadd.f32 %v4539, %v4702
      %v4704 = vpop.f32.mrf.mxu0
      %4705 = vmatprep.mubr.bf16.mxu0 0
      %4706 = vmatmul.mubr.bf16.gmra.mxu0 %v4581
      %v4707 = vpop.f32.mrf.mxu0
      %v4708 = vadd.f32 %v4539, %v4707
      %v4709 = vpop.f32.mrf.mxu0
      %v4710 = vpop.f32.mrf.mxu0
      %v4711 = vadd.f32 %v4539, %v4710
      %v4712 = vpop.f32.mrf.mxu0
      %4713 = vmatprep.mubr.bf16.mxu0 0
      %4714 = vmatmul.mubr.bf16.gmra.mxu0 %v4584
      %v4715 = vpop.f32.mrf.mxu0
      %v4716 = vadd.f32 %v4539, %v4715
      %v4717 = vpop.f32.mrf.mxu0
      %v4718 = vpop.f32.mrf.mxu0
      %v4719 = vadd.f32 %v4539, %v4718
      %v4720 = vpop.f32.mrf.mxu0
      %4721 = vmatprep.mubr.bf16.mxu0 0
      %4722 = vmatmul.mubr.bf16.gmra.mxu0 %v4587
      %v4723 = vpop.f32.mrf.mxu0
      %v4724 = vadd.f32 %v4539, %v4723
      %v4725 = vpop.f32.mrf.mxu0
      %v4726 = vpop.f32.mrf.mxu0
      %v4727 = vadd.f32 %v4539, %v4726
      %v4728 = vpop.f32.mrf.mxu0
      %4729 = vmatprep.mubr.bf16.mxu0 0
      %4730 = vmatmul.mubr.bf16.gmra.mxu0 %v4590
      %v4731 = vpop.f32.mrf.mxu0
      %v4732 = vadd.f32 %v4539, %v4731
      %v4733 = vpop.f32.mrf.mxu0
      %v4734 = vpop.f32.mrf.mxu0
      %v4735 = vadd.f32 %v4539, %v4734
      %v4736 = vpop.f32.mrf.mxu0
      %4737 = vmatprep.mubr.bf16.mxu0 0
      %4738 = vmatmul.mubr.bf16.gmra.mxu0 %v4593
      %v4739 = vpop.f32.mrf.mxu0
      %v4740 = vadd.f32 %v4539, %v4739
      %v4741 = vpop.f32.mrf.mxu0
      %v4742 = vpop.f32.mrf.mxu0
      %v4743 = vadd.f32 %v4539, %v4742
      %v4744 = vpop.f32.mrf.mxu0
      %4745 = vmatprep.mubr.bf16.mxu0 0
      %4746 = vmatmul.mubr.bf16.gmra.mxu0 %v4596
      %v4747 = vpop.f32.mrf.mxu0
      %v4748 = vadd.f32 %v4539, %v4747
      %v4749 = vpop.f32.mrf.mxu0
      %v4750 = vpop.f32.mrf.mxu0
      %v4751 = vadd.f32 %v4539, %v4750
      %v4752 = vpop.f32.mrf.mxu0
      %4753 = vmatprep.mubr.bf16.mxu0 0
      %4754 = vmatmul.mubr.bf16.gmra.mxu0 %v4599
      %v4755 = vpop.f32.mrf.mxu0
      %v4756 = vadd.f32 %v4539, %v4755
      %v4757 = vpop.f32.mrf.mxu0
      %v4758 = vpop.f32.mrf.mxu0
      %v4759 = vadd.f32 %v4539, %v4758
      %v4760 = vpop.f32.mrf.mxu0
      %4761 = vdwg.mxu0
      %4762 = vst.msk [vmem:[%s204] sm:$0xff] %vm271, %v4636
      %4763 = vst.msk [vmem:[%s204 + $0x8] sm:$0xff] %vm271, %v4639
      %4764 = vst.msk [vmem:[%s204 + $0x10] sm:$0xff] %vm271, %v4644
      %4765 = vst.msk [vmem:[%s204 + $0x18] sm:$0xff] %vm271, %v4647
      %4766 = vst.msk [vmem:[%s204 + $0x20] sm:$0xff] %vm271, %v4652
      %4767 = vst.msk [vmem:[%s204 + $0x28] sm:$0xff] %vm271, %v4655
      %4768 = vst.msk [vmem:[%s204 + $0x30] sm:$0xff] %vm271, %v4660
      %4769 = vst.msk [vmem:[%s204 + $0x38] sm:$0xff] %vm271, %v4663
      %4770 = vst.msk [vmem:[%s204 + $0x40] sm:$0xff] %vm271, %v4668
      %4771 = vst.msk [vmem:[%s204 + $0x48] sm:$0xff] %vm271, %v4671
      %4772 = vst.msk [vmem:[%s204 + $0x50] sm:$0xff] %vm271, %v4676
      %4773 = vst.msk [vmem:[%s204 + $0x58] sm:$0xff] %vm271, %v4679
      %4774 = vst.msk [vmem:[%s204 + $0x60] sm:$0xff] %vm271, %v4684
      %4775 = vst.msk [vmem:[%s204 + $0x68] sm:$0xff] %vm271, %v4687
      %4776 = vst.msk [vmem:[%s204 + $0x70] sm:$0xff] %vm271, %v4692
      %4777 = vst.msk [vmem:[%s204 + $0x78] sm:$0xff] %vm271, %v4695
      %4778 = vst.msk [vmem:[%s204 + $0x80] sm:$0xff] %vm271, %v4700
      %4779 = vst.msk [vmem:[%s204 + $0x88] sm:$0xff] %vm271, %v4703
      %4780 = vst.msk [vmem:[%s204 + $0x90] sm:$0xff] %vm271, %v4708
      %4781 = vst.msk [vmem:[%s204 + $0x98] sm:$0xff] %vm271, %v4711
      %4782 = vst.msk [vmem:[%s204 + $0xa0] sm:$0xff] %vm271, %v4716
      %4783 = vst.msk [vmem:[%s204 + $0xa8] sm:$0xff] %vm271, %v4719
      %4784 = vst.msk [vmem:[%s204 + $0xb0] sm:$0xff] %vm271, %v4724
      %4785 = vst.msk [vmem:[%s204 + $0xb8] sm:$0xff] %vm271, %v4727
      %4786 = vst.msk [vmem:[%s204 + $0xc0] sm:$0xff] %vm271, %v4732
      %4787 = vst.msk [vmem:[%s204 + $0xc8] sm:$0xff] %vm271, %v4735
      %4788 = vst.msk [vmem:[%s204 + $0xd0] sm:$0xff] %vm271, %v4740
      %4789 = vst.msk [vmem:[%s204 + $0xd8] sm:$0xff] %vm271, %v4743
      %4790 = vst.msk [vmem:[%s204 + $0xe0] sm:$0xff] %vm271, %v4748
      %4791 = vst.msk [vmem:[%s204 + $0xe8] sm:$0xff] %vm271, %v4751
      %4792 = vst.msk [vmem:[%s204 + $0xf0] sm:$0xff] %vm271, %v4756
      %4793 = vst.msk [vmem:[%s204 + $0xf8] sm:$0xff] %vm271, %v4759
      %s4794 = smul.u32 16, %s15
      %p4795 = scmp.lt.s32.totalorder %s4794, 31
      %s4796 = scalar_select %p4795, %s4794, 31
      %s4797 = smul.addr %s4796, 2
      %s4798 = smul.addr %s4797, 8
      %s4799 = scalar_lea.vmem %s4, %s4798
      // Predicated region
      $region37: #{axial_up_forward.4} parent=35 // pred_check
        %p4800 = pneg %p122
      $region38: #{axial_up_forward.4} parent=35 // pred_check_branch
        %4802 = sbr.rel (%p4800) target = $region40
      $region39: #{axial_up_forward.4} parent=35 // pred_region
        %s4803 = smul.u32 16, %s15
      $region40: #{axial_up_forward.4} parent=35 // pred_fallthru
        _
    $region36: #{axial_up_forward.4} parent=5 // pred_fallthru
      _
    %p4804 = scmp.le.s32.totalorder 2, %s10
    // Predicated region
    $region41: #{axial_up_forward.4} parent=5 // pred_check
      %p4805 = pneg %p4804
    $region42: #{axial_up_forward.4} parent=5 // pred_check_branch
      %4807 = sbr.rel (%p4805) target = $region44
    $region43: #{axial_up_forward.4} parent=5 // pred_region
      %s4808 = ssub.s32 %s10, 2
      // Predicated region
      $region45: #{axial_up_forward.4} parent=43 // pred_check
        %p4809 = pneg %p128
      $region46: #{axial_up_forward.4} parent=43 // pred_check_branch
        %4811 = sbr.rel (%p4809) target = $region48
      $region47: #{axial_up_forward.4} parent=43 // pred_region
        %s4812 = smul.u32 16, %s16
        %p4813 = scmp.lt.s32.totalorder %s4812, 31
        %s4814 = scalar_select %p4813, %s4812, 31
        %s4815 = smul.addr %s4814, 2
        %s4816 = smul.addr %s4815, 8
        %s4817 = scalar_lea.vmem %s4, %s4816
      $region48: #{axial_up_forward.4} parent=43 // pred_fallthru
        _
    $region44: #{axial_up_forward.4} parent=5 // pred_fallthru
      _
  $region6: #{axial_up_forward.4} parent=0 // loop_footer
    %s14 = sadd.s32 1, %s10
  $region7: #{axial_up_forward.4} parent=0 // loop_footer_branch
    %9 = sbr.rel target = $region3
  $region8: #{axial_up_forward.4} parent=0 // loop_exit
    _

</llo_original>
